<compile_context>
chip_gen: v7x
topology: tpu7x:2x2x1
jax: 0.10.0
libtpu: 0.0.40
codegen_flags: <defaults>
</compile_context>

<pallas_src>
import functools

import jax
import jax.numpy as jnp
from jax import lax
from jax.experimental import pallas as pl
from jax.experimental.pallas import tpu as pltpu


def _inner_attention_kernel(x_ref, wqkv_ref, bqkv_ref, pew_ref, peb_ref,
                            wproj_ref, bproj_ref, o_ref, *,
                            num_heads, head_dim, epeg_k, scale):
    f32 = jnp.float32
    H, Dh, K = num_heads, head_dim, epeg_k
    pad = K // 2

    x = x_ref[0]                                   # (N, C)
    N = x.shape[0]

    # Fused QKV projection on the MXU, f32 accumulation.
    qkv = jnp.dot(x, wqkv_ref[...], preferred_element_type=f32)
    qkv = qkv + bqkv_ref[...].astype(f32)          # (N, 3*H*Dh)

    # Head-independent band structure for the EPEG conv (built once).
    row = lax.broadcasted_iota(jnp.int32, (N, N), 0)
    col = lax.broadcasted_iota(jnp.int32, (N, N), 1)
    diff = col - row                               # (m - i)

    head_outs = []
    for h in range(H):
        # QKV layout along the last dim is [3, H, Dh] (matches torch reshape).
        q = qkv[:, h * Dh:(h + 1) * Dh] * scale               # (N, Dh)
        k = qkv[:, (H + h) * Dh:(H + h + 1) * Dh]             # (N, Dh)
        v = qkv[:, (2 * H + h) * Dh:(2 * H + h + 1) * Dh]     # (N, Dh)

        # scores[i, j] = scale * <q_i, k_j>   -> (N, N)
        s = lax.dot_general(q, k, (((1,), (1,)), ((), ())),
                            preferred_element_type=f32)

        # EPEG: depthwise (K, 1) cross-correlation along the query axis with
        # zero padding, as a banded matrix T[i, m] = w[h, m - i + pad].
        t_mat = jnp.zeros((N, N), f32)
        for t in range(K):
            t_mat = t_mat + jnp.where(diff == (t - pad), pew_ref[h, t], 0.0)
        pe = jnp.dot(t_mat, s, preferred_element_type=f32) + peb_ref[h]
        logits = s + pe

        # softmax over keys
        m = jnp.max(logits, axis=-1, keepdims=True)
        p = jnp.exp(logits - m)
        attn = p / jnp.sum(p, axis=-1, keepdims=True)

        head_outs.append(jnp.dot(attn, v, preferred_element_type=f32))

    ctx = jnp.concatenate(head_outs, axis=1)        # (N, H*Dh), head-major
    out = jnp.dot(ctx.astype(wproj_ref.dtype), wproj_ref[...],
                  preferred_element_type=f32)
    out = out + bproj_ref[...].astype(f32)
    o_ref[0] = out.astype(o_ref.dtype)


@functools.partial(jax.jit,
                   static_argnames=("num_heads", "head_dim", "epeg_k", "scale"))
def inner_attention_pallas(x, wqkv, bqkv, pew, peb, wproj, bproj, *,
                           num_heads, head_dim, epeg_k=15, scale=None):
    """x: [B_, N, C]; wqkv: [C, 3*H*Dh]; bqkv: [3*H*Dh];
       pew: [H, K] (Conv2d weight squeezed); peb: [H];
       wproj: [H*Dh, C]; bproj: [C]."""
    B, N, C = x.shape
    H, Dh, K = num_heads, head_dim, epeg_k
    scale = float(Dh) ** (-0.5) if scale is None else float(scale)
    qkv_dim = 3 * H * Dh
    proj_in = H * Dh

    assert wqkv.shape == (C, qkv_dim)
    assert wproj.shape == (proj_in, C)
    assert pew.shape == (H, K) and peb.shape == (H,)

    bqkv2 = bqkv.reshape(1, qkv_dim)
    bproj2 = bproj.reshape(1, C)

    kernel = functools.partial(_inner_attention_kernel,
                               num_heads=H, head_dim=Dh, epeg_k=K, scale=scale)

    itemsize = jnp.dtype(x.dtype).itemsize
    flops = 2 * B * N * C * qkv_dim              # qkv projection
    flops += 2 * B * H * N * N * Dh * 2          # q @ k^T and attn @ v
    flops += 2 * B * H * N * N * N               # EPEG conv as banded matmul
    flops += 2 * B * N * proj_in * C             # output projection
    transcendentals = B * H * N * N              # exp in softmax
    bytes_accessed = (2 * B * N * C) * itemsize \
        + (wqkv.size + bqkv.size + wproj.size + bproj.size) * itemsize \
        + (pew.size + peb.size) * 4

    return pl.pallas_call(
        kernel,
        out_shape=jax.ShapeDtypeStruct((B, N, C), x.dtype),
        grid_spec=pltpu.PrefetchScalarGridSpec(
            num_scalar_prefetch=0,
            grid=(B,),
            in_specs=[
                pl.BlockSpec((1, N, C), lambda b: (b, 0, 0)),        # x slab
                pl.BlockSpec((C, qkv_dim), lambda b: (0, 0)),        # W_qkv
                pl.BlockSpec((1, qkv_dim), lambda b: (0, 0)),        # b_qkv
                pl.BlockSpec(memory_space=pltpu.MemorySpace.SMEM),   # EPEG taps
                pl.BlockSpec(memory_space=pltpu.MemorySpace.SMEM),   # EPEG bias
                pl.BlockSpec((proj_in, C), lambda b: (0, 0)),        # W_proj
                pl.BlockSpec((1, C), lambda b: (0, 0)),              # b_proj
            ],
            out_specs=pl.BlockSpec((1, N, C), lambda b: (b, 0, 0)),
        ),
        compiler_params=pltpu.CompilerParams(
            dimension_semantics=("parallel",),
            vmem_limit_bytes=32 * 1024 * 1024),
        cost_estimate=pl.CostEstimate(
            flops=flops, transcendentals=transcendentals,
            bytes_accessed=bytes_accessed),
    )(x, wqkv, bqkv2, pew, peb, wproj, bproj2)


def _reference_inner_attention(x, wqkv, bqkv, pew, peb, wproj, bproj, *,
                               num_heads, head_dim, epeg_k, scale=None):
    """Pure-JAX mirror of the PyTorch forward (default config)."""
    hi = lax.Precision.HIGHEST
    B, N, C = x.shape
    H, Dh, K = num_heads, head_dim, epeg_k
    pad = K // 2
    scale = float(Dh) ** (-0.5) if scale is None else float(scale)

    qkv = jnp.einsum("bnc,cd->bnd", x, wqkv, precision=hi) + bqkv
    qkv = qkv.reshape(B, N, 3, H, Dh).transpose(2, 0, 3, 1, 4)
    q, k, v = qkv[0] * scale, qkv[1], qkv[2]              # (B, H, N, Dh)

    attn = jnp.einsum("bhnd,bhmd->bhnm", q, k, precision=hi)
    attn_pad = jnp.pad(attn, ((0, 0), (0, 0), (pad, pad), (0, 0)))
    pe = jnp.zeros_like(attn)
    for t in range(K):
        pe = pe + pew[:, t][None, :, None, None] * attn_pad[:, :, t:t + N, :]
    pe = pe + peb[None, :, None, None]
    attn = jax.nn.softmax(attn + pe, axis=-1)

    ctx = jnp.einsum("bhnm,bhmd->bhnd", attn, v, precision=hi)
    ctx = ctx.transpose(0, 2, 1, 3).reshape(B, N, H * Dh)
    return jnp.einsum("bnd,dc->bnc", ctx, wproj, precision=hi) + bproj


if __name__ == "__main__":
    # Small shapes consistent with the module: x: (num_regions*B, N, C)
    B, N, DIM, HEADS, EPEG_K = 2, 16, 64, 8, 15
    HEAD_DIM = DIM // HEADS

    key = jax.random.PRNGKey(0)
    kx, k1, k2, k3, k4, k5, k6 = jax.random.split(key, 7)

    x = jax.random.normal(kx, (B, N, DIM), dtype=jnp.float32)
    # Parameters stored in kernel-friendly [in, out] layout (Linear weight^T);
    # pew/peb correspond to Conv2d(H, H, (K, 1), groups=H) weight/bias.
    wqkv = jax.random.normal(k1, (DIM, 3 * HEADS * HEAD_DIM), jnp.float32) * 0.05
    bqkv = jax.random.normal(k2, (3 * HEADS * HEAD_DIM,), jnp.float32) * 0.01
    pew = jax.random.normal(k3, (HEADS, EPEG_K), jnp.float32) * 0.1
    peb = jax.random.normal(k4, (HEADS,), jnp.float32) * 0.01
    wproj = jax.random.normal(k5, (HEADS * HEAD_DIM, DIM), jnp.float32) * 0.05
    bproj = jax.random.normal(k6, (DIM,), jnp.float32) * 0.01

    out = inner_attention_pallas(x, wqkv, bqkv, pew, peb, wproj, bproj,
                                 num_heads=HEADS, head_dim=HEAD_DIM,
                                 epeg_k=EPEG_K)
    out = jax.block_until_ready(out)

    ref = _reference_inner_attention(x, wqkv, bqkv, pew, peb, wproj, bproj,
                                     num_heads=HEADS, head_dim=HEAD_DIM,
                                     epeg_k=EPEG_K)
    assert out.shape == (B, N, DIM)
    err = float(jnp.max(jnp.abs(out - ref)))
    assert jnp.allclose(out, ref, atol=1e-3, rtol=1e-3), f"max abs err {err}"
    print("KERNEL_OK")
</pallas_src>

<mosaic_0001>
module attributes {stable_mosaic.version = 11 : i64} {
  func.func @_inner_attention_kernel(%arg0: i32, %arg1: memref<1x16x64xf32, #tpu.memory_space<vmem>>, %arg2: memref<64x192xf32, #tpu.memory_space<vmem>>, %arg3: memref<1x192xf32, #tpu.memory_space<vmem>>, %arg4: memref<8x15xf32, #tpu.memory_space<smem>>, %arg5: memref<8xf32, #tpu.memory_space<smem>>, %arg6: memref<64x64xf32, #tpu.memory_space<vmem>>, %arg7: memref<1x64xf32, #tpu.memory_space<vmem>>, %arg8: memref<1x16x64xf32, #tpu.memory_space<vmem>>) attributes {dimension_semantics = [#tpu.dimension_semantics<parallel>], iteration_bounds = array<i64: 2>, scalar_prefetch = 0 : i64, scratch_operands = 0 : i64, tpu.core_type = #tpu.core_type<tc>, window_params = [{transform_indices = @transform_0, window_bounds = array<i64: 1, 16, 64>}, {pipeline_mode = #tpu.pipeline_mode<synchronous>, transform_indices = @transform_1, window_bounds = array<i64: 64, 192>}, {pipeline_mode = #tpu.pipeline_mode<synchronous>, transform_indices = @transform_2, window_bounds = array<i64: 1, 192>}, {transform_indices = @transform_3, window_bounds = array<i64: 8, 15>}, {transform_indices = @transform_4, window_bounds = array<i64: 8>}, {pipeline_mode = #tpu.pipeline_mode<synchronous>, transform_indices = @transform_5, window_bounds = array<i64: 64, 64>}, {pipeline_mode = #tpu.pipeline_mode<synchronous>, transform_indices = @transform_6, window_bounds = array<i64: 1, 64>}, {transform_indices = @transform_7, window_bounds = array<i64: 1, 16, 64>}]} {
    %c0 = arith.constant 0 : index
    %c0_0 = arith.constant 0 : index
    %c0_1 = arith.constant 0 : index
    %0 = vector.load %arg1[%c0, %c0_0, %c0_1] : memref<1x16x64xf32, #tpu.memory_space<vmem>>, vector<1x16x64xf32>
    %1 = vector.shape_cast %0 : vector<1x16x64xf32> to vector<16x64xf32>
    %c0_2 = arith.constant 0 : index
    %c0_3 = arith.constant 0 : index
    %2 = vector.load %arg2[%c0_2, %c0_3] : memref<64x192xf32, #tpu.memory_space<vmem>>, vector<64x192xf32>
    %cst = arith.constant dense<0.000000e+00> : vector<16x192xf32>
    %3 = tpu.matmul %1, %2, %cst {dimension_numbers = #tpu.dot_dimension_numbers<[1], [0], [0], [1], [0, 0, 1, 1], [], []>} : vector<16x64xf32>, vector<64x192xf32>, vector<16x192xf32> -> vector<16x192xf32>
    %c0_4 = arith.constant 0 : index
    %c0_5 = arith.constant 0 : index
    %4 = vector.load %arg3[%c0_4, %c0_5] : memref<1x192xf32, #tpu.memory_space<vmem>>, vector<1x192xf32>
    %5 = vector.broadcast %4 : vector<1x192xf32> to vector<16x192xf32>
    %6 = arith.addf %3, %5 : vector<16x192xf32>
    %7 = tpu.iota {dimensions = array<i32: 0>} : vector<16x16xi32>
    %8 = tpu.iota {dimensions = array<i32: 1>} : vector<16x16xi32>
    %9 = arith.subi %8, %7 : vector<16x16xi32>
    %10 = vector.extract_strided_slice %6 {offsets = [0, 0], sizes = [16, 8], strides = [1, 1]} : vector<16x192xf32> to vector<16x8xf32>
    %cst_6 = arith.constant 0.353553385 : f32
    %11 = vector.broadcast %cst_6 : f32 to vector<16x8xf32>
    %12 = arith.mulf %10, %11 : vector<16x8xf32>
    %13 = vector.extract_strided_slice %6 {offsets = [0, 64], sizes = [16, 8], strides = [1, 1]} : vector<16x192xf32> to vector<16x8xf32>
    %14 = vector.extract_strided_slice %6 {offsets = [0, 128], sizes = [16, 8], strides = [1, 1]} : vector<16x192xf32> to vector<16x8xf32>
    %cst_7 = arith.constant dense<0.000000e+00> : vector<16x16xf32>
    %15 = tpu.matmul %12, %13, %cst_7 {dimension_numbers = #tpu.dot_dimension_numbers<[1], [1], [0], [0], [0, 0, 1, 0], [], []>} : vector<16x8xf32>, vector<16x8xf32>, vector<16x16xf32> -> vector<16x16xf32>
    %cst_8 = arith.constant 0.000000e+00 : f32
    %16 = vector.broadcast %cst_8 : f32 to vector<16x16xf32>
    %c-7_i32 = arith.constant -7 : i32
    %17 = vector.broadcast %c-7_i32 : i32 to vector<16x16xi32>
    %18 = arith.cmpi eq, %9, %17 : vector<16x16xi32>
    %c0_9 = arith.constant 0 : index
    %c0_10 = arith.constant 0 : index
    %19 = memref.load %arg4[%c0_9, %c0_10] : memref<8x15xf32, #tpu.memory_space<smem>>
    %cst_11 = arith.constant 0.000000e+00 : f32
    %20 = vector.broadcast %19 : f32 to vector<16x16xf32>
    %21 = vector.broadcast %cst_11 : f32 to vector<16x16xf32>
    %22 = arith.select %18, %20, %21 : vector<16x16xi1>, vector<16x16xf32>
    %23 = arith.addf %16, %22 : vector<16x16xf32>
    %c-6_i32 = arith.constant -6 : i32
    %24 = vector.broadcast %c-6_i32 : i32 to vector<16x16xi32>
    %25 = arith.cmpi eq, %9, %24 : vector<16x16xi32>
    %c0_12 = arith.constant 0 : index
    %c1 = arith.constant 1 : index
    %26 = memref.load %arg4[%c0_12, %c1] : memref<8x15xf32, #tpu.memory_space<smem>>
    %cst_13 = arith.constant 0.000000e+00 : f32
    %27 = vector.broadcast %26 : f32 to vector<16x16xf32>
    %28 = vector.broadcast %cst_13 : f32 to vector<16x16xf32>
    %29 = arith.select %25, %27, %28 : vector<16x16xi1>, vector<16x16xf32>
    %30 = arith.addf %23, %29 : vector<16x16xf32>
    %c-5_i32 = arith.constant -5 : i32
    %31 = vector.broadcast %c-5_i32 : i32 to vector<16x16xi32>
    %32 = arith.cmpi eq, %9, %31 : vector<16x16xi32>
    %c0_14 = arith.constant 0 : index
    %c2 = arith.constant 2 : index
    %33 = memref.load %arg4[%c0_14, %c2] : memref<8x15xf32, #tpu.memory_space<smem>>
    %cst_15 = arith.constant 0.000000e+00 : f32
    %34 = vector.broadcast %33 : f32 to vector<16x16xf32>
    %35 = vector.broadcast %cst_15 : f32 to vector<16x16xf32>
    %36 = arith.select %32, %34, %35 : vector<16x16xi1>, vector<16x16xf32>
    %37 = arith.addf %30, %36 : vector<16x16xf32>
    %c-4_i32 = arith.constant -4 : i32
    %38 = vector.broadcast %c-4_i32 : i32 to vector<16x16xi32>
    %39 = arith.cmpi eq, %9, %38 : vector<16x16xi32>
    %c0_16 = arith.constant 0 : index
    %c3 = arith.constant 3 : index
    %40 = memref.load %arg4[%c0_16, %c3] : memref<8x15xf32, #tpu.memory_space<smem>>
    %cst_17 = arith.constant 0.000000e+00 : f32
    %41 = vector.broadcast %40 : f32 to vector<16x16xf32>
    %42 = vector.broadcast %cst_17 : f32 to vector<16x16xf32>
    %43 = arith.select %39, %41, %42 : vector<16x16xi1>, vector<16x16xf32>
    %44 = arith.addf %37, %43 : vector<16x16xf32>
    %c-3_i32 = arith.constant -3 : i32
    %45 = vector.broadcast %c-3_i32 : i32 to vector<16x16xi32>
    %46 = arith.cmpi eq, %9, %45 : vector<16x16xi32>
    %c0_18 = arith.constant 0 : index
    %c4 = arith.constant 4 : index
    %47 = memref.load %arg4[%c0_18, %c4] : memref<8x15xf32, #tpu.memory_space<smem>>
    %cst_19 = arith.constant 0.000000e+00 : f32
    %48 = vector.broadcast %47 : f32 to vector<16x16xf32>
    %49 = vector.broadcast %cst_19 : f32 to vector<16x16xf32>
    %50 = arith.select %46, %48, %49 : vector<16x16xi1>, vector<16x16xf32>
    %51 = arith.addf %44, %50 : vector<16x16xf32>
    %c-2_i32 = arith.constant -2 : i32
    %52 = vector.broadcast %c-2_i32 : i32 to vector<16x16xi32>
    %53 = arith.cmpi eq, %9, %52 : vector<16x16xi32>
    %c0_20 = arith.constant 0 : index
    %c5 = arith.constant 5 : index
    %54 = memref.load %arg4[%c0_20, %c5] : memref<8x15xf32, #tpu.memory_space<smem>>
    %cst_21 = arith.constant 0.000000e+00 : f32
    %55 = vector.broadcast %54 : f32 to vector<16x16xf32>
    %56 = vector.broadcast %cst_21 : f32 to vector<16x16xf32>
    %57 = arith.select %53, %55, %56 : vector<16x16xi1>, vector<16x16xf32>
    %58 = arith.addf %51, %57 : vector<16x16xf32>
    %c-1_i32 = arith.constant -1 : i32
    %59 = vector.broadcast %c-1_i32 : i32 to vector<16x16xi32>
    %60 = arith.cmpi eq, %9, %59 : vector<16x16xi32>
    %c0_22 = arith.constant 0 : index
    %c6 = arith.constant 6 : index
    %61 = memref.load %arg4[%c0_22, %c6] : memref<8x15xf32, #tpu.memory_space<smem>>
    %cst_23 = arith.constant 0.000000e+00 : f32
    %62 = vector.broadcast %61 : f32 to vector<16x16xf32>
    %63 = vector.broadcast %cst_23 : f32 to vector<16x16xf32>
    %64 = arith.select %60, %62, %63 : vector<16x16xi1>, vector<16x16xf32>
    %65 = arith.addf %58, %64 : vector<16x16xf32>
    %c0_i32 = arith.constant 0 : i32
    %66 = vector.broadcast %c0_i32 : i32 to vector<16x16xi32>
    %67 = arith.cmpi eq, %9, %66 : vector<16x16xi32>
    %c0_24 = arith.constant 0 : index
    %c7 = arith.constant 7 : index
    %68 = memref.load %arg4[%c0_24, %c7] : memref<8x15xf32, #tpu.memory_space<smem>>
    %cst_25 = arith.constant 0.000000e+00 : f32
    %69 = vector.broadcast %68 : f32 to vector<16x16xf32>
    %70 = vector.broadcast %cst_25 : f32 to vector<16x16xf32>
    %71 = arith.select %67, %69, %70 : vector<16x16xi1>, vector<16x16xf32>
    %72 = arith.addf %65, %71 : vector<16x16xf32>
    %c1_i32 = arith.constant 1 : i32
    %73 = vector.broadcast %c1_i32 : i32 to vector<16x16xi32>
    %74 = arith.cmpi eq, %9, %73 : vector<16x16xi32>
    %c0_26 = arith.constant 0 : index
    %c8 = arith.constant 8 : index
    %75 = memref.load %arg4[%c0_26, %c8] : memref<8x15xf32, #tpu.memory_space<smem>>
    %cst_27 = arith.constant 0.000000e+00 : f32
    %76 = vector.broadcast %75 : f32 to vector<16x16xf32>
    %77 = vector.broadcast %cst_27 : f32 to vector<16x16xf32>
    %78 = arith.select %74, %76, %77 : vector<16x16xi1>, vector<16x16xf32>
    %79 = arith.addf %72, %78 : vector<16x16xf32>
    %c2_i32 = arith.constant 2 : i32
    %80 = vector.broadcast %c2_i32 : i32 to vector<16x16xi32>
    %81 = arith.cmpi eq, %9, %80 : vector<16x16xi32>
    %c0_28 = arith.constant 0 : index
    %c9 = arith.constant 9 : index
    %82 = memref.load %arg4[%c0_28, %c9] : memref<8x15xf32, #tpu.memory_space<smem>>
    %cst_29 = arith.constant 0.000000e+00 : f32
    %83 = vector.broadcast %82 : f32 to vector<16x16xf32>
    %84 = vector.broadcast %cst_29 : f32 to vector<16x16xf32>
    %85 = arith.select %81, %83, %84 : vector<16x16xi1>, vector<16x16xf32>
    %86 = arith.addf %79, %85 : vector<16x16xf32>
    %c3_i32 = arith.constant 3 : i32
    %87 = vector.broadcast %c3_i32 : i32 to vector<16x16xi32>
    %88 = arith.cmpi eq, %9, %87 : vector<16x16xi32>
    %c0_30 = arith.constant 0 : index
    %c10 = arith.constant 10 : index
    %89 = memref.load %arg4[%c0_30, %c10] : memref<8x15xf32, #tpu.memory_space<smem>>
    %cst_31 = arith.constant 0.000000e+00 : f32
    %90 = vector.broadcast %89 : f32 to vector<16x16xf32>
    %91 = vector.broadcast %cst_31 : f32 to vector<16x16xf32>
    %92 = arith.select %88, %90, %91 : vector<16x16xi1>, vector<16x16xf32>
    %93 = arith.addf %86, %92 : vector<16x16xf32>
    %c4_i32 = arith.constant 4 : i32
    %94 = vector.broadcast %c4_i32 : i32 to vector<16x16xi32>
    %95 = arith.cmpi eq, %9, %94 : vector<16x16xi32>
    %c0_32 = arith.constant 0 : index
    %c11 = arith.constant 11 : index
    %96 = memref.load %arg4[%c0_32, %c11] : memref<8x15xf32, #tpu.memory_space<smem>>
    %cst_33 = arith.constant 0.000000e+00 : f32
    %97 = vector.broadcast %96 : f32 to vector<16x16xf32>
    %98 = vector.broadcast %cst_33 : f32 to vector<16x16xf32>
    %99 = arith.select %95, %97, %98 : vector<16x16xi1>, vector<16x16xf32>
    %100 = arith.addf %93, %99 : vector<16x16xf32>
    %c5_i32 = arith.constant 5 : i32
    %101 = vector.broadcast %c5_i32 : i32 to vector<16x16xi32>
    %102 = arith.cmpi eq, %9, %101 : vector<16x16xi32>
    %c0_34 = arith.constant 0 : index
    %c12 = arith.constant 12 : index
    %103 = memref.load %arg4[%c0_34, %c12] : memref<8x15xf32, #tpu.memory_space<smem>>
    %cst_35 = arith.constant 0.000000e+00 : f32
    %104 = vector.broadcast %103 : f32 to vector<16x16xf32>
    %105 = vector.broadcast %cst_35 : f32 to vector<16x16xf32>
    %106 = arith.select %102, %104, %105 : vector<16x16xi1>, vector<16x16xf32>
    %107 = arith.addf %100, %106 : vector<16x16xf32>
    %c6_i32 = arith.constant 6 : i32
    %108 = vector.broadcast %c6_i32 : i32 to vector<16x16xi32>
    %109 = arith.cmpi eq, %9, %108 : vector<16x16xi32>
    %c0_36 = arith.constant 0 : index
    %c13 = arith.constant 13 : index
    %110 = memref.load %arg4[%c0_36, %c13] : memref<8x15xf32, #tpu.memory_space<smem>>
    %cst_37 = arith.constant 0.000000e+00 : f32
    %111 = vector.broadcast %110 : f32 to vector<16x16xf32>
    %112 = vector.broadcast %cst_37 : f32 to vector<16x16xf32>
    %113 = arith.select %109, %111, %112 : vector<16x16xi1>, vector<16x16xf32>
    %114 = arith.addf %107, %113 : vector<16x16xf32>
    %c7_i32 = arith.constant 7 : i32
    %115 = vector.broadcast %c7_i32 : i32 to vector<16x16xi32>
    %116 = arith.cmpi eq, %9, %115 : vector<16x16xi32>
    %c0_38 = arith.constant 0 : index
    %c14 = arith.constant 14 : index
    %117 = memref.load %arg4[%c0_38, %c14] : memref<8x15xf32, #tpu.memory_space<smem>>
    %cst_39 = arith.constant 0.000000e+00 : f32
    %118 = vector.broadcast %117 : f32 to vector<16x16xf32>
    %119 = vector.broadcast %cst_39 : f32 to vector<16x16xf32>
    %120 = arith.select %116, %118, %119 : vector<16x16xi1>, vector<16x16xf32>
    %121 = arith.addf %114, %120 : vector<16x16xf32>
    %cst_40 = arith.constant dense<0.000000e+00> : vector<16x16xf32>
    %122 = tpu.matmul %121, %15, %cst_40 {dimension_numbers = #tpu.dot_dimension_numbers<[1], [0], [0], [1], [0, 0, 1, 1], [], []>} : vector<16x16xf32>, vector<16x16xf32>, vector<16x16xf32> -> vector<16x16xf32>
    %c0_41 = arith.constant 0 : index
    %123 = memref.load %arg5[%c0_41] : memref<8xf32, #tpu.memory_space<smem>>
    %124 = vector.broadcast %123 : f32 to vector<16x16xf32>
    %125 = arith.addf %122, %124 : vector<16x16xf32>
    %126 = arith.addf %15, %125 : vector<16x16xf32>
    %cst_42 = arith.constant dense<0xFF800000> : vector<16xf32>
    %127 = vector.multi_reduction <maximumf>, %126, %cst_42 [1] : vector<16x16xf32> to vector<16xf32>
    %128 = vector.shape_cast %127 : vector<16xf32> to vector<16x1xf32>
    %129 = vector.broadcast %128 : vector<16x1xf32> to vector<16x16xf32>
    %130 = arith.subf %126, %129 : vector<16x16xf32>
    %131 = math.exp %130 : vector<16x16xf32>
    %cst_43 = arith.constant dense<0.000000e+00> : vector<16xf32>
    %132 = vector.multi_reduction <add>, %131, %cst_43 [1] : vector<16x16xf32> to vector<16xf32>
    %133 = vector.shape_cast %132 : vector<16xf32> to vector<16x1xf32>
    %134 = vector.broadcast %133 : vector<16x1xf32> to vector<16x16xf32>
    %135 = arith.divf %131, %134 : vector<16x16xf32>
    %cst_44 = arith.constant dense<0.000000e+00> : vector<16x8xf32>
    %136 = tpu.matmul %135, %14, %cst_44 {dimension_numbers = #tpu.dot_dimension_numbers<[1], [0], [0], [1], [0, 0, 1, 1], [], []>} : vector<16x16xf32>, vector<16x8xf32>, vector<16x8xf32> -> vector<16x8xf32>
    %137 = vector.extract_strided_slice %6 {offsets = [0, 8], sizes = [16, 8], strides = [1, 1]} : vector<16x192xf32> to vector<16x8xf32>
    %cst_45 = arith.constant 0.353553385 : f32
    %138 = vector.broadcast %cst_45 : f32 to vector<16x8xf32>
    %139 = arith.mulf %137, %138 : vector<16x8xf32>
    %140 = vector.extract_strided_slice %6 {offsets = [0, 72], sizes = [16, 8], strides = [1, 1]} : vector<16x192xf32> to vector<16x8xf32>
    %141 = vector.extract_strided_slice %6 {offsets = [0, 136], sizes = [16, 8], strides = [1, 1]} : vector<16x192xf32> to vector<16x8xf32>
    %cst_46 = arith.constant dense<0.000000e+00> : vector<16x16xf32>
    %142 = tpu.matmul %139, %140, %cst_46 {dimension_numbers = #tpu.dot_dimension_numbers<[1], [1], [0], [0], [0, 0, 1, 0], [], []>} : vector<16x8xf32>, vector<16x8xf32>, vector<16x16xf32> -> vector<16x16xf32>
    %cst_47 = arith.constant 0.000000e+00 : f32
    %143 = vector.broadcast %cst_47 : f32 to vector<16x16xf32>
    %c-7_i32_48 = arith.constant -7 : i32
    %144 = vector.broadcast %c-7_i32_48 : i32 to vector<16x16xi32>
    %145 = arith.cmpi eq, %9, %144 : vector<16x16xi32>
    %c1_49 = arith.constant 1 : index
    %c0_50 = arith.constant 0 : index
    %146 = memref.load %arg4[%c1_49, %c0_50] : memref<8x15xf32, #tpu.memory_space<smem>>
    %cst_51 = arith.constant 0.000000e+00 : f32
    %147 = vector.broadcast %146 : f32 to vector<16x16xf32>
    %148 = vector.broadcast %cst_51 : f32 to vector<16x16xf32>
    %149 = arith.select %145, %147, %148 : vector<16x16xi1>, vector<16x16xf32>
    %150 = arith.addf %143, %149 : vector<16x16xf32>
    %c-6_i32_52 = arith.constant -6 : i32
    %151 = vector.broadcast %c-6_i32_52 : i32 to vector<16x16xi32>
    %152 = arith.cmpi eq, %9, %151 : vector<16x16xi32>
    %c1_53 = arith.constant 1 : index
    %c1_54 = arith.constant 1 : index
    %153 = memref.load %arg4[%c1_53, %c1_54] : memref<8x15xf32, #tpu.memory_space<smem>>
    %cst_55 = arith.constant 0.000000e+00 : f32
    %154 = vector.broadcast %153 : f32 to vector<16x16xf32>
    %155 = vector.broadcast %cst_55 : f32 to vector<16x16xf32>
    %156 = arith.select %152, %154, %155 : vector<16x16xi1>, vector<16x16xf32>
    %157 = arith.addf %150, %156 : vector<16x16xf32>
    %c-5_i32_56 = arith.constant -5 : i32
    %158 = vector.broadcast %c-5_i32_56 : i32 to vector<16x16xi32>
    %159 = arith.cmpi eq, %9, %158 : vector<16x16xi32>
    %c1_57 = arith.constant 1 : index
    %c2_58 = arith.constant 2 : index
    %160 = memref.load %arg4[%c1_57, %c2_58] : memref<8x15xf32, #tpu.memory_space<smem>>
    %cst_59 = arith.constant 0.000000e+00 : f32
    %161 = vector.broadcast %160 : f32 to vector<16x16xf32>
    %162 = vector.broadcast %cst_59 : f32 to vector<16x16xf32>
    %163 = arith.select %159, %161, %162 : vector<16x16xi1>, vector<16x16xf32>
    %164 = arith.addf %157, %163 : vector<16x16xf32>
    %c-4_i32_60 = arith.constant -4 : i32
    %165 = vector.broadcast %c-4_i32_60 : i32 to vector<16x16xi32>
    %166 = arith.cmpi eq, %9, %165 : vector<16x16xi32>
    %c1_61 = arith.constant 1 : index
    %c3_62 = arith.constant 3 : index
    %167 = memref.load %arg4[%c1_61, %c3_62] : memref<8x15xf32, #tpu.memory_space<smem>>
    %cst_63 = arith.constant 0.000000e+00 : f32
    %168 = vector.broadcast %167 : f32 to vector<16x16xf32>
    %169 = vector.broadcast %cst_63 : f32 to vector<16x16xf32>
    %170 = arith.select %166, %168, %169 : vector<16x16xi1>, vector<16x16xf32>
    %171 = arith.addf %164, %170 : vector<16x16xf32>
    %c-3_i32_64 = arith.constant -3 : i32
    %172 = vector.broadcast %c-3_i32_64 : i32 to vector<16x16xi32>
    %173 = arith.cmpi eq, %9, %172 : vector<16x16xi32>
    %c1_65 = arith.constant 1 : index
    %c4_66 = arith.constant 4 : index
    %174 = memref.load %arg4[%c1_65, %c4_66] : memref<8x15xf32, #tpu.memory_space<smem>>
    %cst_67 = arith.constant 0.000000e+00 : f32
    %175 = vector.broadcast %174 : f32 to vector<16x16xf32>
    %176 = vector.broadcast %cst_67 : f32 to vector<16x16xf32>
    %177 = arith.select %173, %175, %176 : vector<16x16xi1>, vector<16x16xf32>
    %178 = arith.addf %171, %177 : vector<16x16xf32>
    %c-2_i32_68 = arith.constant -2 : i32
    %179 = vector.broadcast %c-2_i32_68 : i32 to vector<16x16xi32>
    %180 = arith.cmpi eq, %9, %179 : vector<16x16xi32>
    %c1_69 = arith.constant 1 : index
    %c5_70 = arith.constant 5 : index
    %181 = memref.load %arg4[%c1_69, %c5_70] : memref<8x15xf32, #tpu.memory_space<smem>>
    %cst_71 = arith.constant 0.000000e+00 : f32
    %182 = vector.broadcast %181 : f32 to vector<16x16xf32>
    %183 = vector.broadcast %cst_71 : f32 to vector<16x16xf32>
    %184 = arith.select %180, %182, %183 : vector<16x16xi1>, vector<16x16xf32>
    %185 = arith.addf %178, %184 : vector<16x16xf32>
    %c-1_i32_72 = arith.constant -1 : i32
    %186 = vector.broadcast %c-1_i32_72 : i32 to vector<16x16xi32>
    %187 = arith.cmpi eq, %9, %186 : vector<16x16xi32>
    %c1_73 = arith.constant 1 : index
    %c6_74 = arith.constant 6 : index
    %188 = memref.load %arg4[%c1_73, %c6_74] : memref<8x15xf32, #tpu.memory_space<smem>>
    %cst_75 = arith.constant 0.000000e+00 : f32
    %189 = vector.broadcast %188 : f32 to vector<16x16xf32>
    %190 = vector.broadcast %cst_75 : f32 to vector<16x16xf32>
    %191 = arith.select %187, %189, %190 : vector<16x16xi1>, vector<16x16xf32>
    %192 = arith.addf %185, %191 : vector<16x16xf32>
    %c0_i32_76 = arith.constant 0 : i32
    %193 = vector.broadcast %c0_i32_76 : i32 to vector<16x16xi32>
    %194 = arith.cmpi eq, %9, %193 : vector<16x16xi32>
    %c1_77 = arith.constant 1 : index
    %c7_78 = arith.constant 7 : index
    %195 = memref.load %arg4[%c1_77, %c7_78] : memref<8x15xf32, #tpu.memory_space<smem>>
    %cst_79 = arith.constant 0.000000e+00 : f32
    %196 = vector.broadcast %195 : f32 to vector<16x16xf32>
    %197 = vector.broadcast %cst_79 : f32 to vector<16x16xf32>
    %198 = arith.select %194, %196, %197 : vector<16x16xi1>, vector<16x16xf32>
    %199 = arith.addf %192, %198 : vector<16x16xf32>
    %c1_i32_80 = arith.constant 1 : i32
    %200 = vector.broadcast %c1_i32_80 : i32 to vector<16x16xi32>
    %201 = arith.cmpi eq, %9, %200 : vector<16x16xi32>
    %c1_81 = arith.constant 1 : index
    %c8_82 = arith.constant 8 : index
    %202 = memref.load %arg4[%c1_81, %c8_82] : memref<8x15xf32, #tpu.memory_space<smem>>
    %cst_83 = arith.constant 0.000000e+00 : f32
    %203 = vector.broadcast %202 : f32 to vector<16x16xf32>
    %204 = vector.broadcast %cst_83 : f32 to vector<16x16xf32>
    %205 = arith.select %201, %203, %204 : vector<16x16xi1>, vector<16x16xf32>
    %206 = arith.addf %199, %205 : vector<16x16xf32>
    %c2_i32_84 = arith.constant 2 : i32
    %207 = vector.broadcast %c2_i32_84 : i32 to vector<16x16xi32>
    %208 = arith.cmpi eq, %9, %207 : vector<16x16xi32>
    %c1_85 = arith.constant 1 : index
    %c9_86 = arith.constant 9 : index
    %209 = memref.load %arg4[%c1_85, %c9_86] : memref<8x15xf32, #tpu.memory_space<smem>>
    %cst_87 = arith.constant 0.000000e+00 : f32
    %210 = vector.broadcast %209 : f32 to vector<16x16xf32>
    %211 = vector.broadcast %cst_87 : f32 to vector<16x16xf32>
    %212 = arith.select %208, %210, %211 : vector<16x16xi1>, vector<16x16xf32>
    %213 = arith.addf %206, %212 : vector<16x16xf32>
    %c3_i32_88 = arith.constant 3 : i32
    %214 = vector.broadcast %c3_i32_88 : i32 to vector<16x16xi32>
    %215 = arith.cmpi eq, %9, %214 : vector<16x16xi32>
    %c1_89 = arith.constant 1 : index
    %c10_90 = arith.constant 10 : index
    %216 = memref.load %arg4[%c1_89, %c10_90] : memref<8x15xf32, #tpu.memory_space<smem>>
    %cst_91 = arith.constant 0.000000e+00 : f32
    %217 = vector.broadcast %216 : f32 to vector<16x16xf32>
    %218 = vector.broadcast %cst_91 : f32 to vector<16x16xf32>
    %219 = arith.select %215, %217, %218 : vector<16x16xi1>, vector<16x16xf32>
    %220 = arith.addf %213, %219 : vector<16x16xf32>
    %c4_i32_92 = arith.constant 4 : i32
    %221 = vector.broadcast %c4_i32_92 : i32 to vector<16x16xi32>
    %222 = arith.cmpi eq, %9, %221 : vector<16x16xi32>
    %c1_93 = arith.constant 1 : index
    %c11_94 = arith.constant 11 : index
    %223 = memref.load %arg4[%c1_93, %c11_94] : memref<8x15xf32, #tpu.memory_space<smem>>
    %cst_95 = arith.constant 0.000000e+00 : f32
    %224 = vector.broadcast %223 : f32 to vector<16x16xf32>
    %225 = vector.broadcast %cst_95 : f32 to vector<16x16xf32>
    %226 = arith.select %222, %224, %225 : vector<16x16xi1>, vector<16x16xf32>
    %227 = arith.addf %220, %226 : vector<16x16xf32>
    %c5_i32_96 = arith.constant 5 : i32
    %228 = vector.broadcast %c5_i32_96 : i32 to vector<16x16xi32>
    %229 = arith.cmpi eq, %9, %228 : vector<16x16xi32>
    %c1_97 = arith.constant 1 : index
    %c12_98 = arith.constant 12 : index
    %230 = memref.load %arg4[%c1_97, %c12_98] : memref<8x15xf32, #tpu.memory_space<smem>>
    %cst_99 = arith.constant 0.000000e+00 : f32
    %231 = vector.broadcast %230 : f32 to vector<16x16xf32>
    %232 = vector.broadcast %cst_99 : f32 to vector<16x16xf32>
    %233 = arith.select %229, %231, %232 : vector<16x16xi1>, vector<16x16xf32>
    %234 = arith.addf %227, %233 : vector<16x16xf32>
    %c6_i32_100 = arith.constant 6 : i32
    %235 = vector.broadcast %c6_i32_100 : i32 to vector<16x16xi32>
    %236 = arith.cmpi eq, %9, %235 : vector<16x16xi32>
    %c1_101 = arith.constant 1 : index
    %c13_102 = arith.constant 13 : index
    %237 = memref.load %arg4[%c1_101, %c13_102] : memref<8x15xf32, #tpu.memory_space<smem>>
    %cst_103 = arith.constant 0.000000e+00 : f32
    %238 = vector.broadcast %237 : f32 to vector<16x16xf32>
    %239 = vector.broadcast %cst_103 : f32 to vector<16x16xf32>
    %240 = arith.select %236, %238, %239 : vector<16x16xi1>, vector<16x16xf32>
    %241 = arith.addf %234, %240 : vector<16x16xf32>
    %c7_i32_104 = arith.constant 7 : i32
    %242 = vector.broadcast %c7_i32_104 : i32 to vector<16x16xi32>
    %243 = arith.cmpi eq, %9, %242 : vector<16x16xi32>
    %c1_105 = arith.constant 1 : index
    %c14_106 = arith.constant 14 : index
    %244 = memref.load %arg4[%c1_105, %c14_106] : memref<8x15xf32, #tpu.memory_space<smem>>
    %cst_107 = arith.constant 0.000000e+00 : f32
    %245 = vector.broadcast %244 : f32 to vector<16x16xf32>
    %246 = vector.broadcast %cst_107 : f32 to vector<16x16xf32>
    %247 = arith.select %243, %245, %246 : vector<16x16xi1>, vector<16x16xf32>
    %248 = arith.addf %241, %247 : vector<16x16xf32>
    %cst_108 = arith.constant dense<0.000000e+00> : vector<16x16xf32>
    %249 = tpu.matmul %248, %142, %cst_108 {dimension_numbers = #tpu.dot_dimension_numbers<[1], [0], [0], [1], [0, 0, 1, 1], [], []>} : vector<16x16xf32>, vector<16x16xf32>, vector<16x16xf32> -> vector<16x16xf32>
    %c1_109 = arith.constant 1 : index
    %250 = memref.load %arg5[%c1_109] : memref<8xf32, #tpu.memory_space<smem>>
    %251 = vector.broadcast %250 : f32 to vector<16x16xf32>
    %252 = arith.addf %249, %251 : vector<16x16xf32>
    %253 = arith.addf %142, %252 : vector<16x16xf32>
    %cst_110 = arith.constant dense<0xFF800000> : vector<16xf32>
    %254 = vector.multi_reduction <maximumf>, %253, %cst_110 [1] : vector<16x16xf32> to vector<16xf32>
    %255 = vector.shape_cast %254 : vector<16xf32> to vector<16x1xf32>
    %256 = vector.broadcast %255 : vector<16x1xf32> to vector<16x16xf32>
    %257 = arith.subf %253, %256 : vector<16x16xf32>
    %258 = math.exp %257 : vector<16x16xf32>
    %cst_111 = arith.constant dense<0.000000e+00> : vector<16xf32>
    %259 = vector.multi_reduction <add>, %258, %cst_111 [1] : vector<16x16xf32> to vector<16xf32>
    %260 = vector.shape_cast %259 : vector<16xf32> to vector<16x1xf32>
    %261 = vector.broadcast %260 : vector<16x1xf32> to vector<16x16xf32>
    %262 = arith.divf %258, %261 : vector<16x16xf32>
    %cst_112 = arith.constant dense<0.000000e+00> : vector<16x8xf32>
    %263 = tpu.matmul %262, %141, %cst_112 {dimension_numbers = #tpu.dot_dimension_numbers<[1], [0], [0], [1], [0, 0, 1, 1], [], []>} : vector<16x16xf32>, vector<16x8xf32>, vector<16x8xf32> -> vector<16x8xf32>
    %264 = vector.extract_strided_slice %6 {offsets = [0, 16], sizes = [16, 8], strides = [1, 1]} : vector<16x192xf32> to vector<16x8xf32>
    %cst_113 = arith.constant 0.353553385 : f32
    %265 = vector.broadcast %cst_113 : f32 to vector<16x8xf32>
    %266 = arith.mulf %264, %265 : vector<16x8xf32>
    %267 = vector.extract_strided_slice %6 {offsets = [0, 80], sizes = [16, 8], strides = [1, 1]} : vector<16x192xf32> to vector<16x8xf32>
    %268 = vector.extract_strided_slice %6 {offsets = [0, 144], sizes = [16, 8], strides = [1, 1]} : vector<16x192xf32> to vector<16x8xf32>
    %cst_114 = arith.constant dense<0.000000e+00> : vector<16x16xf32>
    %269 = tpu.matmul %266, %267, %cst_114 {dimension_numbers = #tpu.dot_dimension_numbers<[1], [1], [0], [0], [0, 0, 1, 0], [], []>} : vector<16x8xf32>, vector<16x8xf32>, vector<16x16xf32> -> vector<16x16xf32>
    %cst_115 = arith.constant 0.000000e+00 : f32
    %270 = vector.broadcast %cst_115 : f32 to vector<16x16xf32>
    %c-7_i32_116 = arith.constant -7 : i32
    %271 = vector.broadcast %c-7_i32_116 : i32 to vector<16x16xi32>
    %272 = arith.cmpi eq, %9, %271 : vector<16x16xi32>
    %c2_117 = arith.constant 2 : index
    %c0_118 = arith.constant 0 : index
    %273 = memref.load %arg4[%c2_117, %c0_118] : memref<8x15xf32, #tpu.memory_space<smem>>
    %cst_119 = arith.constant 0.000000e+00 : f32
    %274 = vector.broadcast %273 : f32 to vector<16x16xf32>
    %275 = vector.broadcast %cst_119 : f32 to vector<16x16xf32>
    %276 = arith.select %272, %274, %275 : vector<16x16xi1>, vector<16x16xf32>
    %277 = arith.addf %270, %276 : vector<16x16xf32>
    %c-6_i32_120 = arith.constant -6 : i32
    %278 = vector.broadcast %c-6_i32_120 : i32 to vector<16x16xi32>
    %279 = arith.cmpi eq, %9, %278 : vector<16x16xi32>
    %c2_121 = arith.constant 2 : index
    %c1_122 = arith.constant 1 : index
    %280 = memref.load %arg4[%c2_121, %c1_122] : memref<8x15xf32, #tpu.memory_space<smem>>
    %cst_123 = arith.constant 0.000000e+00 : f32
    %281 = vector.broadcast %280 : f32 to vector<16x16xf32>
    %282 = vector.broadcast %cst_123 : f32 to vector<16x16xf32>
    %283 = arith.select %279, %281, %282 : vector<16x16xi1>, vector<16x16xf32>
    %284 = arith.addf %277, %283 : vector<16x16xf32>
    %c-5_i32_124 = arith.constant -5 : i32
    %285 = vector.broadcast %c-5_i32_124 : i32 to vector<16x16xi32>
    %286 = arith.cmpi eq, %9, %285 : vector<16x16xi32>
    %c2_125 = arith.constant 2 : index
    %c2_126 = arith.constant 2 : index
    %287 = memref.load %arg4[%c2_125, %c2_126] : memref<8x15xf32, #tpu.memory_space<smem>>
    %cst_127 = arith.constant 0.000000e+00 : f32
    %288 = vector.broadcast %287 : f32 to vector<16x16xf32>
    %289 = vector.broadcast %cst_127 : f32 to vector<16x16xf32>
    %290 = arith.select %286, %288, %289 : vector<16x16xi1>, vector<16x16xf32>
    %291 = arith.addf %284, %290 : vector<16x16xf32>
    %c-4_i32_128 = arith.constant -4 : i32
    %292 = vector.broadcast %c-4_i32_128 : i32 to vector<16x16xi32>
    %293 = arith.cmpi eq, %9, %292 : vector<16x16xi32>
    %c2_129 = arith.constant 2 : index
    %c3_130 = arith.constant 3 : index
    %294 = memref.load %arg4[%c2_129, %c3_130] : memref<8x15xf32, #tpu.memory_space<smem>>
    %cst_131 = arith.constant 0.000000e+00 : f32
    %295 = vector.broadcast %294 : f32 to vector<16x16xf32>
    %296 = vector.broadcast %cst_131 : f32 to vector<16x16xf32>
    %297 = arith.select %293, %295, %296 : vector<16x16xi1>, vector<16x16xf32>
    %298 = arith.addf %291, %297 : vector<16x16xf32>
    %c-3_i32_132 = arith.constant -3 : i32
    %299 = vector.broadcast %c-3_i32_132 : i32 to vector<16x16xi32>
    %300 = arith.cmpi eq, %9, %299 : vector<16x16xi32>
    %c2_133 = arith.constant 2 : index
    %c4_134 = arith.constant 4 : index
    %301 = memref.load %arg4[%c2_133, %c4_134] : memref<8x15xf32, #tpu.memory_space<smem>>
    %cst_135 = arith.constant 0.000000e+00 : f32
    %302 = vector.broadcast %301 : f32 to vector<16x16xf32>
    %303 = vector.broadcast %cst_135 : f32 to vector<16x16xf32>
    %304 = arith.select %300, %302, %303 : vector<16x16xi1>, vector<16x16xf32>
    %305 = arith.addf %298, %304 : vector<16x16xf32>
    %c-2_i32_136 = arith.constant -2 : i32
    %306 = vector.broadcast %c-2_i32_136 : i32 to vector<16x16xi32>
    %307 = arith.cmpi eq, %9, %306 : vector<16x16xi32>
    %c2_137 = arith.constant 2 : index
    %c5_138 = arith.constant 5 : index
    %308 = memref.load %arg4[%c2_137, %c5_138] : memref<8x15xf32, #tpu.memory_space<smem>>
    %cst_139 = arith.constant 0.000000e+00 : f32
    %309 = vector.broadcast %308 : f32 to vector<16x16xf32>
    %310 = vector.broadcast %cst_139 : f32 to vector<16x16xf32>
    %311 = arith.select %307, %309, %310 : vector<16x16xi1>, vector<16x16xf32>
    %312 = arith.addf %305, %311 : vector<16x16xf32>
    %c-1_i32_140 = arith.constant -1 : i32
    %313 = vector.broadcast %c-1_i32_140 : i32 to vector<16x16xi32>
    %314 = arith.cmpi eq, %9, %313 : vector<16x16xi32>
    %c2_141 = arith.constant 2 : index
    %c6_142 = arith.constant 6 : index
    %315 = memref.load %arg4[%c2_141, %c6_142] : memref<8x15xf32, #tpu.memory_space<smem>>
    %cst_143 = arith.constant 0.000000e+00 : f32
    %316 = vector.broadcast %315 : f32 to vector<16x16xf32>
    %317 = vector.broadcast %cst_143 : f32 to vector<16x16xf32>
    %318 = arith.select %314, %316, %317 : vector<16x16xi1>, vector<16x16xf32>
    %319 = arith.addf %312, %318 : vector<16x16xf32>
    %c0_i32_144 = arith.constant 0 : i32
    %320 = vector.broadcast %c0_i32_144 : i32 to vector<16x16xi32>
    %321 = arith.cmpi eq, %9, %320 : vector<16x16xi32>
    %c2_145 = arith.constant 2 : index
    %c7_146 = arith.constant 7 : index
    %322 = memref.load %arg4[%c2_145, %c7_146] : memref<8x15xf32, #tpu.memory_space<smem>>
    %cst_147 = arith.constant 0.000000e+00 : f32
    %323 = vector.broadcast %322 : f32 to vector<16x16xf32>
    %324 = vector.broadcast %cst_147 : f32 to vector<16x16xf32>
    %325 = arith.select %321, %323, %324 : vector<16x16xi1>, vector<16x16xf32>
    %326 = arith.addf %319, %325 : vector<16x16xf32>
    %c1_i32_148 = arith.constant 1 : i32
    %327 = vector.broadcast %c1_i32_148 : i32 to vector<16x16xi32>
    %328 = arith.cmpi eq, %9, %327 : vector<16x16xi32>
    %c2_149 = arith.constant 2 : index
    %c8_150 = arith.constant 8 : index
    %329 = memref.load %arg4[%c2_149, %c8_150] : memref<8x15xf32, #tpu.memory_space<smem>>
    %cst_151 = arith.constant 0.000000e+00 : f32
    %330 = vector.broadcast %329 : f32 to vector<16x16xf32>
    %331 = vector.broadcast %cst_151 : f32 to vector<16x16xf32>
    %332 = arith.select %328, %330, %331 : vector<16x16xi1>, vector<16x16xf32>
    %333 = arith.addf %326, %332 : vector<16x16xf32>
    %c2_i32_152 = arith.constant 2 : i32
    %334 = vector.broadcast %c2_i32_152 : i32 to vector<16x16xi32>
    %335 = arith.cmpi eq, %9, %334 : vector<16x16xi32>
    %c2_153 = arith.constant 2 : index
    %c9_154 = arith.constant 9 : index
    %336 = memref.load %arg4[%c2_153, %c9_154] : memref<8x15xf32, #tpu.memory_space<smem>>
    %cst_155 = arith.constant 0.000000e+00 : f32
    %337 = vector.broadcast %336 : f32 to vector<16x16xf32>
    %338 = vector.broadcast %cst_155 : f32 to vector<16x16xf32>
    %339 = arith.select %335, %337, %338 : vector<16x16xi1>, vector<16x16xf32>
    %340 = arith.addf %333, %339 : vector<16x16xf32>
    %c3_i32_156 = arith.constant 3 : i32
    %341 = vector.broadcast %c3_i32_156 : i32 to vector<16x16xi32>
    %342 = arith.cmpi eq, %9, %341 : vector<16x16xi32>
    %c2_157 = arith.constant 2 : index
    %c10_158 = arith.constant 10 : index
    %343 = memref.load %arg4[%c2_157, %c10_158] : memref<8x15xf32, #tpu.memory_space<smem>>
    %cst_159 = arith.constant 0.000000e+00 : f32
    %344 = vector.broadcast %343 : f32 to vector<16x16xf32>
    %345 = vector.broadcast %cst_159 : f32 to vector<16x16xf32>
    %346 = arith.select %342, %344, %345 : vector<16x16xi1>, vector<16x16xf32>
    %347 = arith.addf %340, %346 : vector<16x16xf32>
    %c4_i32_160 = arith.constant 4 : i32
    %348 = vector.broadcast %c4_i32_160 : i32 to vector<16x16xi32>
    %349 = arith.cmpi eq, %9, %348 : vector<16x16xi32>
    %c2_161 = arith.constant 2 : index
    %c11_162 = arith.constant 11 : index
    %350 = memref.load %arg4[%c2_161, %c11_162] : memref<8x15xf32, #tpu.memory_space<smem>>
    %cst_163 = arith.constant 0.000000e+00 : f32
    %351 = vector.broadcast %350 : f32 to vector<16x16xf32>
    %352 = vector.broadcast %cst_163 : f32 to vector<16x16xf32>
    %353 = arith.select %349, %351, %352 : vector<16x16xi1>, vector<16x16xf32>
    %354 = arith.addf %347, %353 : vector<16x16xf32>
    %c5_i32_164 = arith.constant 5 : i32
    %355 = vector.broadcast %c5_i32_164 : i32 to vector<16x16xi32>
    %356 = arith.cmpi eq, %9, %355 : vector<16x16xi32>
    %c2_165 = arith.constant 2 : index
    %c12_166 = arith.constant 12 : index
    %357 = memref.load %arg4[%c2_165, %c12_166] : memref<8x15xf32, #tpu.memory_space<smem>>
    %cst_167 = arith.constant 0.000000e+00 : f32
    %358 = vector.broadcast %357 : f32 to vector<16x16xf32>
    %359 = vector.broadcast %cst_167 : f32 to vector<16x16xf32>
    %360 = arith.select %356, %358, %359 : vector<16x16xi1>, vector<16x16xf32>
    %361 = arith.addf %354, %360 : vector<16x16xf32>
    %c6_i32_168 = arith.constant 6 : i32
    %362 = vector.broadcast %c6_i32_168 : i32 to vector<16x16xi32>
    %363 = arith.cmpi eq, %9, %362 : vector<16x16xi32>
    %c2_169 = arith.constant 2 : index
    %c13_170 = arith.constant 13 : index
    %364 = memref.load %arg4[%c2_169, %c13_170] : memref<8x15xf32, #tpu.memory_space<smem>>
    %cst_171 = arith.constant 0.000000e+00 : f32
    %365 = vector.broadcast %364 : f32 to vector<16x16xf32>
    %366 = vector.broadcast %cst_171 : f32 to vector<16x16xf32>
    %367 = arith.select %363, %365, %366 : vector<16x16xi1>, vector<16x16xf32>
    %368 = arith.addf %361, %367 : vector<16x16xf32>
    %c7_i32_172 = arith.constant 7 : i32
    %369 = vector.broadcast %c7_i32_172 : i32 to vector<16x16xi32>
    %370 = arith.cmpi eq, %9, %369 : vector<16x16xi32>
    %c2_173 = arith.constant 2 : index
    %c14_174 = arith.constant 14 : index
    %371 = memref.load %arg4[%c2_173, %c14_174] : memref<8x15xf32, #tpu.memory_space<smem>>
    %cst_175 = arith.constant 0.000000e+00 : f32
    %372 = vector.broadcast %371 : f32 to vector<16x16xf32>
    %373 = vector.broadcast %cst_175 : f32 to vector<16x16xf32>
    %374 = arith.select %370, %372, %373 : vector<16x16xi1>, vector<16x16xf32>
    %375 = arith.addf %368, %374 : vector<16x16xf32>
    %cst_176 = arith.constant dense<0.000000e+00> : vector<16x16xf32>
    %376 = tpu.matmul %375, %269, %cst_176 {dimension_numbers = #tpu.dot_dimension_numbers<[1], [0], [0], [1], [0, 0, 1, 1], [], []>} : vector<16x16xf32>, vector<16x16xf32>, vector<16x16xf32> -> vector<16x16xf32>
    %c2_177 = arith.constant 2 : index
    %377 = memref.load %arg5[%c2_177] : memref<8xf32, #tpu.memory_space<smem>>
    %378 = vector.broadcast %377 : f32 to vector<16x16xf32>
    %379 = arith.addf %376, %378 : vector<16x16xf32>
    %380 = arith.addf %269, %379 : vector<16x16xf32>
    %cst_178 = arith.constant dense<0xFF800000> : vector<16xf32>
    %381 = vector.multi_reduction <maximumf>, %380, %cst_178 [1] : vector<16x16xf32> to vector<16xf32>
    %382 = vector.shape_cast %381 : vector<16xf32> to vector<16x1xf32>
    %383 = vector.broadcast %382 : vector<16x1xf32> to vector<16x16xf32>
    %384 = arith.subf %380, %383 : vector<16x16xf32>
    %385 = math.exp %384 : vector<16x16xf32>
    %cst_179 = arith.constant dense<0.000000e+00> : vector<16xf32>
    %386 = vector.multi_reduction <add>, %385, %cst_179 [1] : vector<16x16xf32> to vector<16xf32>
    %387 = vector.shape_cast %386 : vector<16xf32> to vector<16x1xf32>
    %388 = vector.broadcast %387 : vector<16x1xf32> to vector<16x16xf32>
    %389 = arith.divf %385, %388 : vector<16x16xf32>
    %cst_180 = arith.constant dense<0.000000e+00> : vector<16x8xf32>
    %390 = tpu.matmul %389, %268, %cst_180 {dimension_numbers = #tpu.dot_dimension_numbers<[1], [0], [0], [1], [0, 0, 1, 1], [], []>} : vector<16x16xf32>, vector<16x8xf32>, vector<16x8xf32> -> vector<16x8xf32>
    %391 = vector.extract_strided_slice %6 {offsets = [0, 24], sizes = [16, 8], strides = [1, 1]} : vector<16x192xf32> to vector<16x8xf32>
    %cst_181 = arith.constant 0.353553385 : f32
    %392 = vector.broadcast %cst_181 : f32 to vector<16x8xf32>
    %393 = arith.mulf %391, %392 : vector<16x8xf32>
    %394 = vector.extract_strided_slice %6 {offsets = [0, 88], sizes = [16, 8], strides = [1, 1]} : vector<16x192xf32> to vector<16x8xf32>
    %395 = vector.extract_strided_slice %6 {offsets = [0, 152], sizes = [16, 8], strides = [1, 1]} : vector<16x192xf32> to vector<16x8xf32>
    %cst_182 = arith.constant dense<0.000000e+00> : vector<16x16xf32>
    %396 = tpu.matmul %393, %394, %cst_182 {dimension_numbers = #tpu.dot_dimension_numbers<[1], [1], [0], [0], [0, 0, 1, 0], [], []>} : vector<16x8xf32>, vector<16x8xf32>, vector<16x16xf32> -> vector<16x16xf32>
    %cst_183 = arith.constant 0.000000e+00 : f32
    %397 = vector.broadcast %cst_183 : f32 to vector<16x16xf32>
    %c-7_i32_184 = arith.constant -7 : i32
    %398 = vector.broadcast %c-7_i32_184 : i32 to vector<16x16xi32>
    %399 = arith.cmpi eq, %9, %398 : vector<16x16xi32>
    %c3_185 = arith.constant 3 : index
    %c0_186 = arith.constant 0 : index
    %400 = memref.load %arg4[%c3_185, %c0_186] : memref<8x15xf32, #tpu.memory_space<smem>>
    %cst_187 = arith.constant 0.000000e+00 : f32
    %401 = vector.broadcast %400 : f32 to vector<16x16xf32>
    %402 = vector.broadcast %cst_187 : f32 to vector<16x16xf32>
    %403 = arith.select %399, %401, %402 : vector<16x16xi1>, vector<16x16xf32>
    %404 = arith.addf %397, %403 : vector<16x16xf32>
    %c-6_i32_188 = arith.constant -6 : i32
    %405 = vector.broadcast %c-6_i32_188 : i32 to vector<16x16xi32>
    %406 = arith.cmpi eq, %9, %405 : vector<16x16xi32>
    %c3_189 = arith.constant 3 : index
    %c1_190 = arith.constant 1 : index
    %407 = memref.load %arg4[%c3_189, %c1_190] : memref<8x15xf32, #tpu.memory_space<smem>>
    %cst_191 = arith.constant 0.000000e+00 : f32
    %408 = vector.broadcast %407 : f32 to vector<16x16xf32>
    %409 = vector.broadcast %cst_191 : f32 to vector<16x16xf32>
    %410 = arith.select %406, %408, %409 : vector<16x16xi1>, vector<16x16xf32>
    %411 = arith.addf %404, %410 : vector<16x16xf32>
    %c-5_i32_192 = arith.constant -5 : i32
    %412 = vector.broadcast %c-5_i32_192 : i32 to vector<16x16xi32>
    %413 = arith.cmpi eq, %9, %412 : vector<16x16xi32>
    %c3_193 = arith.constant 3 : index
    %c2_194 = arith.constant 2 : index
    %414 = memref.load %arg4[%c3_193, %c2_194] : memref<8x15xf32, #tpu.memory_space<smem>>
    %cst_195 = arith.constant 0.000000e+00 : f32
    %415 = vector.broadcast %414 : f32 to vector<16x16xf32>
    %416 = vector.broadcast %cst_195 : f32 to vector<16x16xf32>
    %417 = arith.select %413, %415, %416 : vector<16x16xi1>, vector<16x16xf32>
    %418 = arith.addf %411, %417 : vector<16x16xf32>
    %c-4_i32_196 = arith.constant -4 : i32
    %419 = vector.broadcast %c-4_i32_196 : i32 to vector<16x16xi32>
    %420 = arith.cmpi eq, %9, %419 : vector<16x16xi32>
    %c3_197 = arith.constant 3 : index
    %c3_198 = arith.constant 3 : index
    %421 = memref.load %arg4[%c3_197, %c3_198] : memref<8x15xf32, #tpu.memory_space<smem>>
    %cst_199 = arith.constant 0.000000e+00 : f32
    %422 = vector.broadcast %421 : f32 to vector<16x16xf32>
    %423 = vector.broadcast %cst_199 : f32 to vector<16x16xf32>
    %424 = arith.select %420, %422, %423 : vector<16x16xi1>, vector<16x16xf32>
    %425 = arith.addf %418, %424 : vector<16x16xf32>
    %c-3_i32_200 = arith.constant -3 : i32
    %426 = vector.broadcast %c-3_i32_200 : i32 to vector<16x16xi32>
    %427 = arith.cmpi eq, %9, %426 : vector<16x16xi32>
    %c3_201 = arith.constant 3 : index
    %c4_202 = arith.constant 4 : index
    %428 = memref.load %arg4[%c3_201, %c4_202] : memref<8x15xf32, #tpu.memory_space<smem>>
    %cst_203 = arith.constant 0.000000e+00 : f32
    %429 = vector.broadcast %428 : f32 to vector<16x16xf32>
    %430 = vector.broadcast %cst_203 : f32 to vector<16x16xf32>
    %431 = arith.select %427, %429, %430 : vector<16x16xi1>, vector<16x16xf32>
    %432 = arith.addf %425, %431 : vector<16x16xf32>
    %c-2_i32_204 = arith.constant -2 : i32
    %433 = vector.broadcast %c-2_i32_204 : i32 to vector<16x16xi32>
    %434 = arith.cmpi eq, %9, %433 : vector<16x16xi32>
    %c3_205 = arith.constant 3 : index
    %c5_206 = arith.constant 5 : index
    %435 = memref.load %arg4[%c3_205, %c5_206] : memref<8x15xf32, #tpu.memory_space<smem>>
    %cst_207 = arith.constant 0.000000e+00 : f32
    %436 = vector.broadcast %435 : f32 to vector<16x16xf32>
    %437 = vector.broadcast %cst_207 : f32 to vector<16x16xf32>
    %438 = arith.select %434, %436, %437 : vector<16x16xi1>, vector<16x16xf32>
    %439 = arith.addf %432, %438 : vector<16x16xf32>
    %c-1_i32_208 = arith.constant -1 : i32
    %440 = vector.broadcast %c-1_i32_208 : i32 to vector<16x16xi32>
    %441 = arith.cmpi eq, %9, %440 : vector<16x16xi32>
    %c3_209 = arith.constant 3 : index
    %c6_210 = arith.constant 6 : index
    %442 = memref.load %arg4[%c3_209, %c6_210] : memref<8x15xf32, #tpu.memory_space<smem>>
    %cst_211 = arith.constant 0.000000e+00 : f32
    %443 = vector.broadcast %442 : f32 to vector<16x16xf32>
    %444 = vector.broadcast %cst_211 : f32 to vector<16x16xf32>
    %445 = arith.select %441, %443, %444 : vector<16x16xi1>, vector<16x16xf32>
    %446 = arith.addf %439, %445 : vector<16x16xf32>
    %c0_i32_212 = arith.constant 0 : i32
    %447 = vector.broadcast %c0_i32_212 : i32 to vector<16x16xi32>
    %448 = arith.cmpi eq, %9, %447 : vector<16x16xi32>
    %c3_213 = arith.constant 3 : index
    %c7_214 = arith.constant 7 : index
    %449 = memref.load %arg4[%c3_213, %c7_214] : memref<8x15xf32, #tpu.memory_space<smem>>
    %cst_215 = arith.constant 0.000000e+00 : f32
    %450 = vector.broadcast %449 : f32 to vector<16x16xf32>
    %451 = vector.broadcast %cst_215 : f32 to vector<16x16xf32>
    %452 = arith.select %448, %450, %451 : vector<16x16xi1>, vector<16x16xf32>
    %453 = arith.addf %446, %452 : vector<16x16xf32>
    %c1_i32_216 = arith.constant 1 : i32
    %454 = vector.broadcast %c1_i32_216 : i32 to vector<16x16xi32>
    %455 = arith.cmpi eq, %9, %454 : vector<16x16xi32>
    %c3_217 = arith.constant 3 : index
    %c8_218 = arith.constant 8 : index
    %456 = memref.load %arg4[%c3_217, %c8_218] : memref<8x15xf32, #tpu.memory_space<smem>>
    %cst_219 = arith.constant 0.000000e+00 : f32
    %457 = vector.broadcast %456 : f32 to vector<16x16xf32>
    %458 = vector.broadcast %cst_219 : f32 to vector<16x16xf32>
    %459 = arith.select %455, %457, %458 : vector<16x16xi1>, vector<16x16xf32>
    %460 = arith.addf %453, %459 : vector<16x16xf32>
    %c2_i32_220 = arith.constant 2 : i32
    %461 = vector.broadcast %c2_i32_220 : i32 to vector<16x16xi32>
    %462 = arith.cmpi eq, %9, %461 : vector<16x16xi32>
    %c3_221 = arith.constant 3 : index
    %c9_222 = arith.constant 9 : index
    %463 = memref.load %arg4[%c3_221, %c9_222] : memref<8x15xf32, #tpu.memory_space<smem>>
    %cst_223 = arith.constant 0.000000e+00 : f32
    %464 = vector.broadcast %463 : f32 to vector<16x16xf32>
    %465 = vector.broadcast %cst_223 : f32 to vector<16x16xf32>
    %466 = arith.select %462, %464, %465 : vector<16x16xi1>, vector<16x16xf32>
    %467 = arith.addf %460, %466 : vector<16x16xf32>
    %c3_i32_224 = arith.constant 3 : i32
    %468 = vector.broadcast %c3_i32_224 : i32 to vector<16x16xi32>
    %469 = arith.cmpi eq, %9, %468 : vector<16x16xi32>
    %c3_225 = arith.constant 3 : index
    %c10_226 = arith.constant 10 : index
    %470 = memref.load %arg4[%c3_225, %c10_226] : memref<8x15xf32, #tpu.memory_space<smem>>
    %cst_227 = arith.constant 0.000000e+00 : f32
    %471 = vector.broadcast %470 : f32 to vector<16x16xf32>
    %472 = vector.broadcast %cst_227 : f32 to vector<16x16xf32>
    %473 = arith.select %469, %471, %472 : vector<16x16xi1>, vector<16x16xf32>
    %474 = arith.addf %467, %473 : vector<16x16xf32>
    %c4_i32_228 = arith.constant 4 : i32
    %475 = vector.broadcast %c4_i32_228 : i32 to vector<16x16xi32>
    %476 = arith.cmpi eq, %9, %475 : vector<16x16xi32>
    %c3_229 = arith.constant 3 : index
    %c11_230 = arith.constant 11 : index
    %477 = memref.load %arg4[%c3_229, %c11_230] : memref<8x15xf32, #tpu.memory_space<smem>>
    %cst_231 = arith.constant 0.000000e+00 : f32
    %478 = vector.broadcast %477 : f32 to vector<16x16xf32>
    %479 = vector.broadcast %cst_231 : f32 to vector<16x16xf32>
    %480 = arith.select %476, %478, %479 : vector<16x16xi1>, vector<16x16xf32>
    %481 = arith.addf %474, %480 : vector<16x16xf32>
    %c5_i32_232 = arith.constant 5 : i32
    %482 = vector.broadcast %c5_i32_232 : i32 to vector<16x16xi32>
    %483 = arith.cmpi eq, %9, %482 : vector<16x16xi32>
    %c3_233 = arith.constant 3 : index
    %c12_234 = arith.constant 12 : index
    %484 = memref.load %arg4[%c3_233, %c12_234] : memref<8x15xf32, #tpu.memory_space<smem>>
    %cst_235 = arith.constant 0.000000e+00 : f32
    %485 = vector.broadcast %484 : f32 to vector<16x16xf32>
    %486 = vector.broadcast %cst_235 : f32 to vector<16x16xf32>
    %487 = arith.select %483, %485, %486 : vector<16x16xi1>, vector<16x16xf32>
    %488 = arith.addf %481, %487 : vector<16x16xf32>
    %c6_i32_236 = arith.constant 6 : i32
    %489 = vector.broadcast %c6_i32_236 : i32 to vector<16x16xi32>
    %490 = arith.cmpi eq, %9, %489 : vector<16x16xi32>
    %c3_237 = arith.constant 3 : index
    %c13_238 = arith.constant 13 : index
    %491 = memref.load %arg4[%c3_237, %c13_238] : memref<8x15xf32, #tpu.memory_space<smem>>
    %cst_239 = arith.constant 0.000000e+00 : f32
    %492 = vector.broadcast %491 : f32 to vector<16x16xf32>
    %493 = vector.broadcast %cst_239 : f32 to vector<16x16xf32>
    %494 = arith.select %490, %492, %493 : vector<16x16xi1>, vector<16x16xf32>
    %495 = arith.addf %488, %494 : vector<16x16xf32>
    %c7_i32_240 = arith.constant 7 : i32
    %496 = vector.broadcast %c7_i32_240 : i32 to vector<16x16xi32>
    %497 = arith.cmpi eq, %9, %496 : vector<16x16xi32>
    %c3_241 = arith.constant 3 : index
    %c14_242 = arith.constant 14 : index
    %498 = memref.load %arg4[%c3_241, %c14_242] : memref<8x15xf32, #tpu.memory_space<smem>>
    %cst_243 = arith.constant 0.000000e+00 : f32
    %499 = vector.broadcast %498 : f32 to vector<16x16xf32>
    %500 = vector.broadcast %cst_243 : f32 to vector<16x16xf32>
    %501 = arith.select %497, %499, %500 : vector<16x16xi1>, vector<16x16xf32>
    %502 = arith.addf %495, %501 : vector<16x16xf32>
    %cst_244 = arith.constant dense<0.000000e+00> : vector<16x16xf32>
    %503 = tpu.matmul %502, %396, %cst_244 {dimension_numbers = #tpu.dot_dimension_numbers<[1], [0], [0], [1], [0, 0, 1, 1], [], []>} : vector<16x16xf32>, vector<16x16xf32>, vector<16x16xf32> -> vector<16x16xf32>
    %c3_245 = arith.constant 3 : index
    %504 = memref.load %arg5[%c3_245] : memref<8xf32, #tpu.memory_space<smem>>
    %505 = vector.broadcast %504 : f32 to vector<16x16xf32>
    %506 = arith.addf %503, %505 : vector<16x16xf32>
    %507 = arith.addf %396, %506 : vector<16x16xf32>
    %cst_246 = arith.constant dense<0xFF800000> : vector<16xf32>
    %508 = vector.multi_reduction <maximumf>, %507, %cst_246 [1] : vector<16x16xf32> to vector<16xf32>
    %509 = vector.shape_cast %508 : vector<16xf32> to vector<16x1xf32>
    %510 = vector.broadcast %509 : vector<16x1xf32> to vector<16x16xf32>
    %511 = arith.subf %507, %510 : vector<16x16xf32>
    %512 = math.exp %511 : vector<16x16xf32>
    %cst_247 = arith.constant dense<0.000000e+00> : vector<16xf32>
    %513 = vector.multi_reduction <add>, %512, %cst_247 [1] : vector<16x16xf32> to vector<16xf32>
    %514 = vector.shape_cast %513 : vector<16xf32> to vector<16x1xf32>
    %515 = vector.broadcast %514 : vector<16x1xf32> to vector<16x16xf32>
    %516 = arith.divf %512, %515 : vector<16x16xf32>
    %cst_248 = arith.constant dense<0.000000e+00> : vector<16x8xf32>
    %517 = tpu.matmul %516, %395, %cst_248 {dimension_numbers = #tpu.dot_dimension_numbers<[1], [0], [0], [1], [0, 0, 1, 1], [], []>} : vector<16x16xf32>, vector<16x8xf32>, vector<16x8xf32> -> vector<16x8xf32>
    %518 = vector.extract_strided_slice %6 {offsets = [0, 32], sizes = [16, 8], strides = [1, 1]} : vector<16x192xf32> to vector<16x8xf32>
    %cst_249 = arith.constant 0.353553385 : f32
    %519 = vector.broadcast %cst_249 : f32 to vector<16x8xf32>
    %520 = arith.mulf %518, %519 : vector<16x8xf32>
    %521 = vector.extract_strided_slice %6 {offsets = [0, 96], sizes = [16, 8], strides = [1, 1]} : vector<16x192xf32> to vector<16x8xf32>
    %522 = vector.extract_strided_slice %6 {offsets = [0, 160], sizes = [16, 8], strides = [1, 1]} : vector<16x192xf32> to vector<16x8xf32>
    %cst_250 = arith.constant dense<0.000000e+00> : vector<16x16xf32>
    %523 = tpu.matmul %520, %521, %cst_250 {dimension_numbers = #tpu.dot_dimension_numbers<[1], [1], [0], [0], [0, 0, 1, 0], [], []>} : vector<16x8xf32>, vector<16x8xf32>, vector<16x16xf32> -> vector<16x16xf32>
    %cst_251 = arith.constant 0.000000e+00 : f32
    %524 = vector.broadcast %cst_251 : f32 to vector<16x16xf32>
    %c-7_i32_252 = arith.constant -7 : i32
    %525 = vector.broadcast %c-7_i32_252 : i32 to vector<16x16xi32>
    %526 = arith.cmpi eq, %9, %525 : vector<16x16xi32>
    %c4_253 = arith.constant 4 : index
    %c0_254 = arith.constant 0 : index
    %527 = memref.load %arg4[%c4_253, %c0_254] : memref<8x15xf32, #tpu.memory_space<smem>>
    %cst_255 = arith.constant 0.000000e+00 : f32
    %528 = vector.broadcast %527 : f32 to vector<16x16xf32>
    %529 = vector.broadcast %cst_255 : f32 to vector<16x16xf32>
    %530 = arith.select %526, %528, %529 : vector<16x16xi1>, vector<16x16xf32>
    %531 = arith.addf %524, %530 : vector<16x16xf32>
    %c-6_i32_256 = arith.constant -6 : i32
    %532 = vector.broadcast %c-6_i32_256 : i32 to vector<16x16xi32>
    %533 = arith.cmpi eq, %9, %532 : vector<16x16xi32>
    %c4_257 = arith.constant 4 : index
    %c1_258 = arith.constant 1 : index
    %534 = memref.load %arg4[%c4_257, %c1_258] : memref<8x15xf32, #tpu.memory_space<smem>>
    %cst_259 = arith.constant 0.000000e+00 : f32
    %535 = vector.broadcast %534 : f32 to vector<16x16xf32>
    %536 = vector.broadcast %cst_259 : f32 to vector<16x16xf32>
    %537 = arith.select %533, %535, %536 : vector<16x16xi1>, vector<16x16xf32>
    %538 = arith.addf %531, %537 : vector<16x16xf32>
    %c-5_i32_260 = arith.constant -5 : i32
    %539 = vector.broadcast %c-5_i32_260 : i32 to vector<16x16xi32>
    %540 = arith.cmpi eq, %9, %539 : vector<16x16xi32>
    %c4_261 = arith.constant 4 : index
    %c2_262 = arith.constant 2 : index
    %541 = memref.load %arg4[%c4_261, %c2_262] : memref<8x15xf32, #tpu.memory_space<smem>>
    %cst_263 = arith.constant 0.000000e+00 : f32
    %542 = vector.broadcast %541 : f32 to vector<16x16xf32>
    %543 = vector.broadcast %cst_263 : f32 to vector<16x16xf32>
    %544 = arith.select %540, %542, %543 : vector<16x16xi1>, vector<16x16xf32>
    %545 = arith.addf %538, %544 : vector<16x16xf32>
    %c-4_i32_264 = arith.constant -4 : i32
    %546 = vector.broadcast %c-4_i32_264 : i32 to vector<16x16xi32>
    %547 = arith.cmpi eq, %9, %546 : vector<16x16xi32>
    %c4_265 = arith.constant 4 : index
    %c3_266 = arith.constant 3 : index
    %548 = memref.load %arg4[%c4_265, %c3_266] : memref<8x15xf32, #tpu.memory_space<smem>>
    %cst_267 = arith.constant 0.000000e+00 : f32
    %549 = vector.broadcast %548 : f32 to vector<16x16xf32>
    %550 = vector.broadcast %cst_267 : f32 to vector<16x16xf32>
    %551 = arith.select %547, %549, %550 : vector<16x16xi1>, vector<16x16xf32>
    %552 = arith.addf %545, %551 : vector<16x16xf32>
    %c-3_i32_268 = arith.constant -3 : i32
    %553 = vector.broadcast %c-3_i32_268 : i32 to vector<16x16xi32>
    %554 = arith.cmpi eq, %9, %553 : vector<16x16xi32>
    %c4_269 = arith.constant 4 : index
    %c4_270 = arith.constant 4 : index
    %555 = memref.load %arg4[%c4_269, %c4_270] : memref<8x15xf32, #tpu.memory_space<smem>>
    %cst_271 = arith.constant 0.000000e+00 : f32
    %556 = vector.broadcast %555 : f32 to vector<16x16xf32>
    %557 = vector.broadcast %cst_271 : f32 to vector<16x16xf32>
    %558 = arith.select %554, %556, %557 : vector<16x16xi1>, vector<16x16xf32>
    %559 = arith.addf %552, %558 : vector<16x16xf32>
    %c-2_i32_272 = arith.constant -2 : i32
    %560 = vector.broadcast %c-2_i32_272 : i32 to vector<16x16xi32>
    %561 = arith.cmpi eq, %9, %560 : vector<16x16xi32>
    %c4_273 = arith.constant 4 : index
    %c5_274 = arith.constant 5 : index
    %562 = memref.load %arg4[%c4_273, %c5_274] : memref<8x15xf32, #tpu.memory_space<smem>>
    %cst_275 = arith.constant 0.000000e+00 : f32
    %563 = vector.broadcast %562 : f32 to vector<16x16xf32>
    %564 = vector.broadcast %cst_275 : f32 to vector<16x16xf32>
    %565 = arith.select %561, %563, %564 : vector<16x16xi1>, vector<16x16xf32>
    %566 = arith.addf %559, %565 : vector<16x16xf32>
    %c-1_i32_276 = arith.constant -1 : i32
    %567 = vector.broadcast %c-1_i32_276 : i32 to vector<16x16xi32>
    %568 = arith.cmpi eq, %9, %567 : vector<16x16xi32>
    %c4_277 = arith.constant 4 : index
    %c6_278 = arith.constant 6 : index
    %569 = memref.load %arg4[%c4_277, %c6_278] : memref<8x15xf32, #tpu.memory_space<smem>>
    %cst_279 = arith.constant 0.000000e+00 : f32
    %570 = vector.broadcast %569 : f32 to vector<16x16xf32>
    %571 = vector.broadcast %cst_279 : f32 to vector<16x16xf32>
    %572 = arith.select %568, %570, %571 : vector<16x16xi1>, vector<16x16xf32>
    %573 = arith.addf %566, %572 : vector<16x16xf32>
    %c0_i32_280 = arith.constant 0 : i32
    %574 = vector.broadcast %c0_i32_280 : i32 to vector<16x16xi32>
    %575 = arith.cmpi eq, %9, %574 : vector<16x16xi32>
    %c4_281 = arith.constant 4 : index
    %c7_282 = arith.constant 7 : index
    %576 = memref.load %arg4[%c4_281, %c7_282] : memref<8x15xf32, #tpu.memory_space<smem>>
    %cst_283 = arith.constant 0.000000e+00 : f32
    %577 = vector.broadcast %576 : f32 to vector<16x16xf32>
    %578 = vector.broadcast %cst_283 : f32 to vector<16x16xf32>
    %579 = arith.select %575, %577, %578 : vector<16x16xi1>, vector<16x16xf32>
    %580 = arith.addf %573, %579 : vector<16x16xf32>
    %c1_i32_284 = arith.constant 1 : i32
    %581 = vector.broadcast %c1_i32_284 : i32 to vector<16x16xi32>
    %582 = arith.cmpi eq, %9, %581 : vector<16x16xi32>
    %c4_285 = arith.constant 4 : index
    %c8_286 = arith.constant 8 : index
    %583 = memref.load %arg4[%c4_285, %c8_286] : memref<8x15xf32, #tpu.memory_space<smem>>
    %cst_287 = arith.constant 0.000000e+00 : f32
    %584 = vector.broadcast %583 : f32 to vector<16x16xf32>
    %585 = vector.broadcast %cst_287 : f32 to vector<16x16xf32>
    %586 = arith.select %582, %584, %585 : vector<16x16xi1>, vector<16x16xf32>
    %587 = arith.addf %580, %586 : vector<16x16xf32>
    %c2_i32_288 = arith.constant 2 : i32
    %588 = vector.broadcast %c2_i32_288 : i32 to vector<16x16xi32>
    %589 = arith.cmpi eq, %9, %588 : vector<16x16xi32>
    %c4_289 = arith.constant 4 : index
    %c9_290 = arith.constant 9 : index
    %590 = memref.load %arg4[%c4_289, %c9_290] : memref<8x15xf32, #tpu.memory_space<smem>>
    %cst_291 = arith.constant 0.000000e+00 : f32
    %591 = vector.broadcast %590 : f32 to vector<16x16xf32>
    %592 = vector.broadcast %cst_291 : f32 to vector<16x16xf32>
    %593 = arith.select %589, %591, %592 : vector<16x16xi1>, vector<16x16xf32>
    %594 = arith.addf %587, %593 : vector<16x16xf32>
    %c3_i32_292 = arith.constant 3 : i32
    %595 = vector.broadcast %c3_i32_292 : i32 to vector<16x16xi32>
    %596 = arith.cmpi eq, %9, %595 : vector<16x16xi32>
    %c4_293 = arith.constant 4 : index
    %c10_294 = arith.constant 10 : index
    %597 = memref.load %arg4[%c4_293, %c10_294] : memref<8x15xf32, #tpu.memory_space<smem>>
    %cst_295 = arith.constant 0.000000e+00 : f32
    %598 = vector.broadcast %597 : f32 to vector<16x16xf32>
    %599 = vector.broadcast %cst_295 : f32 to vector<16x16xf32>
    %600 = arith.select %596, %598, %599 : vector<16x16xi1>, vector<16x16xf32>
    %601 = arith.addf %594, %600 : vector<16x16xf32>
    %c4_i32_296 = arith.constant 4 : i32
    %602 = vector.broadcast %c4_i32_296 : i32 to vector<16x16xi32>
    %603 = arith.cmpi eq, %9, %602 : vector<16x16xi32>
    %c4_297 = arith.constant 4 : index
    %c11_298 = arith.constant 11 : index
    %604 = memref.load %arg4[%c4_297, %c11_298] : memref<8x15xf32, #tpu.memory_space<smem>>
    %cst_299 = arith.constant 0.000000e+00 : f32
    %605 = vector.broadcast %604 : f32 to vector<16x16xf32>
    %606 = vector.broadcast %cst_299 : f32 to vector<16x16xf32>
    %607 = arith.select %603, %605, %606 : vector<16x16xi1>, vector<16x16xf32>
    %608 = arith.addf %601, %607 : vector<16x16xf32>
    %c5_i32_300 = arith.constant 5 : i32
    %609 = vector.broadcast %c5_i32_300 : i32 to vector<16x16xi32>
    %610 = arith.cmpi eq, %9, %609 : vector<16x16xi32>
    %c4_301 = arith.constant 4 : index
    %c12_302 = arith.constant 12 : index
    %611 = memref.load %arg4[%c4_301, %c12_302] : memref<8x15xf32, #tpu.memory_space<smem>>
    %cst_303 = arith.constant 0.000000e+00 : f32
    %612 = vector.broadcast %611 : f32 to vector<16x16xf32>
    %613 = vector.broadcast %cst_303 : f32 to vector<16x16xf32>
    %614 = arith.select %610, %612, %613 : vector<16x16xi1>, vector<16x16xf32>
    %615 = arith.addf %608, %614 : vector<16x16xf32>
    %c6_i32_304 = arith.constant 6 : i32
    %616 = vector.broadcast %c6_i32_304 : i32 to vector<16x16xi32>
    %617 = arith.cmpi eq, %9, %616 : vector<16x16xi32>
    %c4_305 = arith.constant 4 : index
    %c13_306 = arith.constant 13 : index
    %618 = memref.load %arg4[%c4_305, %c13_306] : memref<8x15xf32, #tpu.memory_space<smem>>
    %cst_307 = arith.constant 0.000000e+00 : f32
    %619 = vector.broadcast %618 : f32 to vector<16x16xf32>
    %620 = vector.broadcast %cst_307 : f32 to vector<16x16xf32>
    %621 = arith.select %617, %619, %620 : vector<16x16xi1>, vector<16x16xf32>
    %622 = arith.addf %615, %621 : vector<16x16xf32>
    %c7_i32_308 = arith.constant 7 : i32
    %623 = vector.broadcast %c7_i32_308 : i32 to vector<16x16xi32>
    %624 = arith.cmpi eq, %9, %623 : vector<16x16xi32>
    %c4_309 = arith.constant 4 : index
    %c14_310 = arith.constant 14 : index
    %625 = memref.load %arg4[%c4_309, %c14_310] : memref<8x15xf32, #tpu.memory_space<smem>>
    %cst_311 = arith.constant 0.000000e+00 : f32
    %626 = vector.broadcast %625 : f32 to vector<16x16xf32>
    %627 = vector.broadcast %cst_311 : f32 to vector<16x16xf32>
    %628 = arith.select %624, %626, %627 : vector<16x16xi1>, vector<16x16xf32>
    %629 = arith.addf %622, %628 : vector<16x16xf32>
    %cst_312 = arith.constant dense<0.000000e+00> : vector<16x16xf32>
    %630 = tpu.matmul %629, %523, %cst_312 {dimension_numbers = #tpu.dot_dimension_numbers<[1], [0], [0], [1], [0, 0, 1, 1], [], []>} : vector<16x16xf32>, vector<16x16xf32>, vector<16x16xf32> -> vector<16x16xf32>
    %c4_313 = arith.constant 4 : index
    %631 = memref.load %arg5[%c4_313] : memref<8xf32, #tpu.memory_space<smem>>
    %632 = vector.broadcast %631 : f32 to vector<16x16xf32>
    %633 = arith.addf %630, %632 : vector<16x16xf32>
    %634 = arith.addf %523, %633 : vector<16x16xf32>
    %cst_314 = arith.constant dense<0xFF800000> : vector<16xf32>
    %635 = vector.multi_reduction <maximumf>, %634, %cst_314 [1] : vector<16x16xf32> to vector<16xf32>
    %636 = vector.shape_cast %635 : vector<16xf32> to vector<16x1xf32>
    %637 = vector.broadcast %636 : vector<16x1xf32> to vector<16x16xf32>
    %638 = arith.subf %634, %637 : vector<16x16xf32>
    %639 = math.exp %638 : vector<16x16xf32>
    %cst_315 = arith.constant dense<0.000000e+00> : vector<16xf32>
    %640 = vector.multi_reduction <add>, %639, %cst_315 [1] : vector<16x16xf32> to vector<16xf32>
    %641 = vector.shape_cast %640 : vector<16xf32> to vector<16x1xf32>
    %642 = vector.broadcast %641 : vector<16x1xf32> to vector<16x16xf32>
    %643 = arith.divf %639, %642 : vector<16x16xf32>
    %cst_316 = arith.constant dense<0.000000e+00> : vector<16x8xf32>
    %644 = tpu.matmul %643, %522, %cst_316 {dimension_numbers = #tpu.dot_dimension_numbers<[1], [0], [0], [1], [0, 0, 1, 1], [], []>} : vector<16x16xf32>, vector<16x8xf32>, vector<16x8xf32> -> vector<16x8xf32>
    %645 = vector.extract_strided_slice %6 {offsets = [0, 40], sizes = [16, 8], strides = [1, 1]} : vector<16x192xf32> to vector<16x8xf32>
    %cst_317 = arith.constant 0.353553385 : f32
    %646 = vector.broadcast %cst_317 : f32 to vector<16x8xf32>
    %647 = arith.mulf %645, %646 : vector<16x8xf32>
    %648 = vector.extract_strided_slice %6 {offsets = [0, 104], sizes = [16, 8], strides = [1, 1]} : vector<16x192xf32> to vector<16x8xf32>
    %649 = vector.extract_strided_slice %6 {offsets = [0, 168], sizes = [16, 8], strides = [1, 1]} : vector<16x192xf32> to vector<16x8xf32>
    %cst_318 = arith.constant dense<0.000000e+00> : vector<16x16xf32>
    %650 = tpu.matmul %647, %648, %cst_318 {dimension_numbers = #tpu.dot_dimension_numbers<[1], [1], [0], [0], [0, 0, 1, 0], [], []>} : vector<16x8xf32>, vector<16x8xf32>, vector<16x16xf32> -> vector<16x16xf32>
    %cst_319 = arith.constant 0.000000e+00 : f32
    %651 = vector.broadcast %cst_319 : f32 to vector<16x16xf32>
    %c-7_i32_320 = arith.constant -7 : i32
    %652 = vector.broadcast %c-7_i32_320 : i32 to vector<16x16xi32>
    %653 = arith.cmpi eq, %9, %652 : vector<16x16xi32>
    %c5_321 = arith.constant 5 : index
    %c0_322 = arith.constant 0 : index
    %654 = memref.load %arg4[%c5_321, %c0_322] : memref<8x15xf32, #tpu.memory_space<smem>>
    %cst_323 = arith.constant 0.000000e+00 : f32
    %655 = vector.broadcast %654 : f32 to vector<16x16xf32>
    %656 = vector.broadcast %cst_323 : f32 to vector<16x16xf32>
    %657 = arith.select %653, %655, %656 : vector<16x16xi1>, vector<16x16xf32>
    %658 = arith.addf %651, %657 : vector<16x16xf32>
    %c-6_i32_324 = arith.constant -6 : i32
    %659 = vector.broadcast %c-6_i32_324 : i32 to vector<16x16xi32>
    %660 = arith.cmpi eq, %9, %659 : vector<16x16xi32>
    %c5_325 = arith.constant 5 : index
    %c1_326 = arith.constant 1 : index
    %661 = memref.load %arg4[%c5_325, %c1_326] : memref<8x15xf32, #tpu.memory_space<smem>>
    %cst_327 = arith.constant 0.000000e+00 : f32
    %662 = vector.broadcast %661 : f32 to vector<16x16xf32>
    %663 = vector.broadcast %cst_327 : f32 to vector<16x16xf32>
    %664 = arith.select %660, %662, %663 : vector<16x16xi1>, vector<16x16xf32>
    %665 = arith.addf %658, %664 : vector<16x16xf32>
    %c-5_i32_328 = arith.constant -5 : i32
    %666 = vector.broadcast %c-5_i32_328 : i32 to vector<16x16xi32>
    %667 = arith.cmpi eq, %9, %666 : vector<16x16xi32>
    %c5_329 = arith.constant 5 : index
    %c2_330 = arith.constant 2 : index
    %668 = memref.load %arg4[%c5_329, %c2_330] : memref<8x15xf32, #tpu.memory_space<smem>>
    %cst_331 = arith.constant 0.000000e+00 : f32
    %669 = vector.broadcast %668 : f32 to vector<16x16xf32>
    %670 = vector.broadcast %cst_331 : f32 to vector<16x16xf32>
    %671 = arith.select %667, %669, %670 : vector<16x16xi1>, vector<16x16xf32>
    %672 = arith.addf %665, %671 : vector<16x16xf32>
    %c-4_i32_332 = arith.constant -4 : i32
    %673 = vector.broadcast %c-4_i32_332 : i32 to vector<16x16xi32>
    %674 = arith.cmpi eq, %9, %673 : vector<16x16xi32>
    %c5_333 = arith.constant 5 : index
    %c3_334 = arith.constant 3 : index
    %675 = memref.load %arg4[%c5_333, %c3_334] : memref<8x15xf32, #tpu.memory_space<smem>>
    %cst_335 = arith.constant 0.000000e+00 : f32
    %676 = vector.broadcast %675 : f32 to vector<16x16xf32>
    %677 = vector.broadcast %cst_335 : f32 to vector<16x16xf32>
    %678 = arith.select %674, %676, %677 : vector<16x16xi1>, vector<16x16xf32>
    %679 = arith.addf %672, %678 : vector<16x16xf32>
    %c-3_i32_336 = arith.constant -3 : i32
    %680 = vector.broadcast %c-3_i32_336 : i32 to vector<16x16xi32>
    %681 = arith.cmpi eq, %9, %680 : vector<16x16xi32>
    %c5_337 = arith.constant 5 : index
    %c4_338 = arith.constant 4 : index
    %682 = memref.load %arg4[%c5_337, %c4_338] : memref<8x15xf32, #tpu.memory_space<smem>>
    %cst_339 = arith.constant 0.000000e+00 : f32
    %683 = vector.broadcast %682 : f32 to vector<16x16xf32>
    %684 = vector.broadcast %cst_339 : f32 to vector<16x16xf32>
    %685 = arith.select %681, %683, %684 : vector<16x16xi1>, vector<16x16xf32>
    %686 = arith.addf %679, %685 : vector<16x16xf32>
    %c-2_i32_340 = arith.constant -2 : i32
    %687 = vector.broadcast %c-2_i32_340 : i32 to vector<16x16xi32>
    %688 = arith.cmpi eq, %9, %687 : vector<16x16xi32>
    %c5_341 = arith.constant 5 : index
    %c5_342 = arith.constant 5 : index
    %689 = memref.load %arg4[%c5_341, %c5_342] : memref<8x15xf32, #tpu.memory_space<smem>>
    %cst_343 = arith.constant 0.000000e+00 : f32
    %690 = vector.broadcast %689 : f32 to vector<16x16xf32>
    %691 = vector.broadcast %cst_343 : f32 to vector<16x16xf32>
    %692 = arith.select %688, %690, %691 : vector<16x16xi1>, vector<16x16xf32>
    %693 = arith.addf %686, %692 : vector<16x16xf32>
    %c-1_i32_344 = arith.constant -1 : i32
    %694 = vector.broadcast %c-1_i32_344 : i32 to vector<16x16xi32>
    %695 = arith.cmpi eq, %9, %694 : vector<16x16xi32>
    %c5_345 = arith.constant 5 : index
    %c6_346 = arith.constant 6 : index
    %696 = memref.load %arg4[%c5_345, %c6_346] : memref<8x15xf32, #tpu.memory_space<smem>>
    %cst_347 = arith.constant 0.000000e+00 : f32
    %697 = vector.broadcast %696 : f32 to vector<16x16xf32>
    %698 = vector.broadcast %cst_347 : f32 to vector<16x16xf32>
    %699 = arith.select %695, %697, %698 : vector<16x16xi1>, vector<16x16xf32>
    %700 = arith.addf %693, %699 : vector<16x16xf32>
    %c0_i32_348 = arith.constant 0 : i32
    %701 = vector.broadcast %c0_i32_348 : i32 to vector<16x16xi32>
    %702 = arith.cmpi eq, %9, %701 : vector<16x16xi32>
    %c5_349 = arith.constant 5 : index
    %c7_350 = arith.constant 7 : index
    %703 = memref.load %arg4[%c5_349, %c7_350] : memref<8x15xf32, #tpu.memory_space<smem>>
    %cst_351 = arith.constant 0.000000e+00 : f32
    %704 = vector.broadcast %703 : f32 to vector<16x16xf32>
    %705 = vector.broadcast %cst_351 : f32 to vector<16x16xf32>
    %706 = arith.select %702, %704, %705 : vector<16x16xi1>, vector<16x16xf32>
    %707 = arith.addf %700, %706 : vector<16x16xf32>
    %c1_i32_352 = arith.constant 1 : i32
    %708 = vector.broadcast %c1_i32_352 : i32 to vector<16x16xi32>
    %709 = arith.cmpi eq, %9, %708 : vector<16x16xi32>
    %c5_353 = arith.constant 5 : index
    %c8_354 = arith.constant 8 : index
    %710 = memref.load %arg4[%c5_353, %c8_354] : memref<8x15xf32, #tpu.memory_space<smem>>
    %cst_355 = arith.constant 0.000000e+00 : f32
    %711 = vector.broadcast %710 : f32 to vector<16x16xf32>
    %712 = vector.broadcast %cst_355 : f32 to vector<16x16xf32>
    %713 = arith.select %709, %711, %712 : vector<16x16xi1>, vector<16x16xf32>
    %714 = arith.addf %707, %713 : vector<16x16xf32>
    %c2_i32_356 = arith.constant 2 : i32
    %715 = vector.broadcast %c2_i32_356 : i32 to vector<16x16xi32>
    %716 = arith.cmpi eq, %9, %715 : vector<16x16xi32>
    %c5_357 = arith.constant 5 : index
    %c9_358 = arith.constant 9 : index
    %717 = memref.load %arg4[%c5_357, %c9_358] : memref<8x15xf32, #tpu.memory_space<smem>>
    %cst_359 = arith.constant 0.000000e+00 : f32
    %718 = vector.broadcast %717 : f32 to vector<16x16xf32>
    %719 = vector.broadcast %cst_359 : f32 to vector<16x16xf32>
    %720 = arith.select %716, %718, %719 : vector<16x16xi1>, vector<16x16xf32>
    %721 = arith.addf %714, %720 : vector<16x16xf32>
    %c3_i32_360 = arith.constant 3 : i32
    %722 = vector.broadcast %c3_i32_360 : i32 to vector<16x16xi32>
    %723 = arith.cmpi eq, %9, %722 : vector<16x16xi32>
    %c5_361 = arith.constant 5 : index
    %c10_362 = arith.constant 10 : index
    %724 = memref.load %arg4[%c5_361, %c10_362] : memref<8x15xf32, #tpu.memory_space<smem>>
    %cst_363 = arith.constant 0.000000e+00 : f32
    %725 = vector.broadcast %724 : f32 to vector<16x16xf32>
    %726 = vector.broadcast %cst_363 : f32 to vector<16x16xf32>
    %727 = arith.select %723, %725, %726 : vector<16x16xi1>, vector<16x16xf32>
    %728 = arith.addf %721, %727 : vector<16x16xf32>
    %c4_i32_364 = arith.constant 4 : i32
    %729 = vector.broadcast %c4_i32_364 : i32 to vector<16x16xi32>
    %730 = arith.cmpi eq, %9, %729 : vector<16x16xi32>
    %c5_365 = arith.constant 5 : index
    %c11_366 = arith.constant 11 : index
    %731 = memref.load %arg4[%c5_365, %c11_366] : memref<8x15xf32, #tpu.memory_space<smem>>
    %cst_367 = arith.constant 0.000000e+00 : f32
    %732 = vector.broadcast %731 : f32 to vector<16x16xf32>
    %733 = vector.broadcast %cst_367 : f32 to vector<16x16xf32>
    %734 = arith.select %730, %732, %733 : vector<16x16xi1>, vector<16x16xf32>
    %735 = arith.addf %728, %734 : vector<16x16xf32>
    %c5_i32_368 = arith.constant 5 : i32
    %736 = vector.broadcast %c5_i32_368 : i32 to vector<16x16xi32>
    %737 = arith.cmpi eq, %9, %736 : vector<16x16xi32>
    %c5_369 = arith.constant 5 : index
    %c12_370 = arith.constant 12 : index
    %738 = memref.load %arg4[%c5_369, %c12_370] : memref<8x15xf32, #tpu.memory_space<smem>>
    %cst_371 = arith.constant 0.000000e+00 : f32
    %739 = vector.broadcast %738 : f32 to vector<16x16xf32>
    %740 = vector.broadcast %cst_371 : f32 to vector<16x16xf32>
    %741 = arith.select %737, %739, %740 : vector<16x16xi1>, vector<16x16xf32>
    %742 = arith.addf %735, %741 : vector<16x16xf32>
    %c6_i32_372 = arith.constant 6 : i32
    %743 = vector.broadcast %c6_i32_372 : i32 to vector<16x16xi32>
    %744 = arith.cmpi eq, %9, %743 : vector<16x16xi32>
    %c5_373 = arith.constant 5 : index
    %c13_374 = arith.constant 13 : index
    %745 = memref.load %arg4[%c5_373, %c13_374] : memref<8x15xf32, #tpu.memory_space<smem>>
    %cst_375 = arith.constant 0.000000e+00 : f32
    %746 = vector.broadcast %745 : f32 to vector<16x16xf32>
    %747 = vector.broadcast %cst_375 : f32 to vector<16x16xf32>
    %748 = arith.select %744, %746, %747 : vector<16x16xi1>, vector<16x16xf32>
    %749 = arith.addf %742, %748 : vector<16x16xf32>
    %c7_i32_376 = arith.constant 7 : i32
    %750 = vector.broadcast %c7_i32_376 : i32 to vector<16x16xi32>
    %751 = arith.cmpi eq, %9, %750 : vector<16x16xi32>
    %c5_377 = arith.constant 5 : index
    %c14_378 = arith.constant 14 : index
    %752 = memref.load %arg4[%c5_377, %c14_378] : memref<8x15xf32, #tpu.memory_space<smem>>
    %cst_379 = arith.constant 0.000000e+00 : f32
    %753 = vector.broadcast %752 : f32 to vector<16x16xf32>
    %754 = vector.broadcast %cst_379 : f32 to vector<16x16xf32>
    %755 = arith.select %751, %753, %754 : vector<16x16xi1>, vector<16x16xf32>
    %756 = arith.addf %749, %755 : vector<16x16xf32>
    %cst_380 = arith.constant dense<0.000000e+00> : vector<16x16xf32>
    %757 = tpu.matmul %756, %650, %cst_380 {dimension_numbers = #tpu.dot_dimension_numbers<[1], [0], [0], [1], [0, 0, 1, 1], [], []>} : vector<16x16xf32>, vector<16x16xf32>, vector<16x16xf32> -> vector<16x16xf32>
    %c5_381 = arith.constant 5 : index
    %758 = memref.load %arg5[%c5_381] : memref<8xf32, #tpu.memory_space<smem>>
    %759 = vector.broadcast %758 : f32 to vector<16x16xf32>
    %760 = arith.addf %757, %759 : vector<16x16xf32>
    %761 = arith.addf %650, %760 : vector<16x16xf32>
    %cst_382 = arith.constant dense<0xFF800000> : vector<16xf32>
    %762 = vector.multi_reduction <maximumf>, %761, %cst_382 [1] : vector<16x16xf32> to vector<16xf32>
    %763 = vector.shape_cast %762 : vector<16xf32> to vector<16x1xf32>
    %764 = vector.broadcast %763 : vector<16x1xf32> to vector<16x16xf32>
    %765 = arith.subf %761, %764 : vector<16x16xf32>
    %766 = math.exp %765 : vector<16x16xf32>
    %cst_383 = arith.constant dense<0.000000e+00> : vector<16xf32>
    %767 = vector.multi_reduction <add>, %766, %cst_383 [1] : vector<16x16xf32> to vector<16xf32>
    %768 = vector.shape_cast %767 : vector<16xf32> to vector<16x1xf32>
    %769 = vector.broadcast %768 : vector<16x1xf32> to vector<16x16xf32>
    %770 = arith.divf %766, %769 : vector<16x16xf32>
    %cst_384 = arith.constant dense<0.000000e+00> : vector<16x8xf32>
    %771 = tpu.matmul %770, %649, %cst_384 {dimension_numbers = #tpu.dot_dimension_numbers<[1], [0], [0], [1], [0, 0, 1, 1], [], []>} : vector<16x16xf32>, vector<16x8xf32>, vector<16x8xf32> -> vector<16x8xf32>
    %772 = vector.extract_strided_slice %6 {offsets = [0, 48], sizes = [16, 8], strides = [1, 1]} : vector<16x192xf32> to vector<16x8xf32>
    %cst_385 = arith.constant 0.353553385 : f32
    %773 = vector.broadcast %cst_385 : f32 to vector<16x8xf32>
    %774 = arith.mulf %772, %773 : vector<16x8xf32>
    %775 = vector.extract_strided_slice %6 {offsets = [0, 112], sizes = [16, 8], strides = [1, 1]} : vector<16x192xf32> to vector<16x8xf32>
    %776 = vector.extract_strided_slice %6 {offsets = [0, 176], sizes = [16, 8], strides = [1, 1]} : vector<16x192xf32> to vector<16x8xf32>
    %cst_386 = arith.constant dense<0.000000e+00> : vector<16x16xf32>
    %777 = tpu.matmul %774, %775, %cst_386 {dimension_numbers = #tpu.dot_dimension_numbers<[1], [1], [0], [0], [0, 0, 1, 0], [], []>} : vector<16x8xf32>, vector<16x8xf32>, vector<16x16xf32> -> vector<16x16xf32>
    %cst_387 = arith.constant 0.000000e+00 : f32
    %778 = vector.broadcast %cst_387 : f32 to vector<16x16xf32>
    %c-7_i32_388 = arith.constant -7 : i32
    %779 = vector.broadcast %c-7_i32_388 : i32 to vector<16x16xi32>
    %780 = arith.cmpi eq, %9, %779 : vector<16x16xi32>
    %c6_389 = arith.constant 6 : index
    %c0_390 = arith.constant 0 : index
    %781 = memref.load %arg4[%c6_389, %c0_390] : memref<8x15xf32, #tpu.memory_space<smem>>
    %cst_391 = arith.constant 0.000000e+00 : f32
    %782 = vector.broadcast %781 : f32 to vector<16x16xf32>
    %783 = vector.broadcast %cst_391 : f32 to vector<16x16xf32>
    %784 = arith.select %780, %782, %783 : vector<16x16xi1>, vector<16x16xf32>
    %785 = arith.addf %778, %784 : vector<16x16xf32>
    %c-6_i32_392 = arith.constant -6 : i32
    %786 = vector.broadcast %c-6_i32_392 : i32 to vector<16x16xi32>
    %787 = arith.cmpi eq, %9, %786 : vector<16x16xi32>
    %c6_393 = arith.constant 6 : index
    %c1_394 = arith.constant 1 : index
    %788 = memref.load %arg4[%c6_393, %c1_394] : memref<8x15xf32, #tpu.memory_space<smem>>
    %cst_395 = arith.constant 0.000000e+00 : f32
    %789 = vector.broadcast %788 : f32 to vector<16x16xf32>
    %790 = vector.broadcast %cst_395 : f32 to vector<16x16xf32>
    %791 = arith.select %787, %789, %790 : vector<16x16xi1>, vector<16x16xf32>
    %792 = arith.addf %785, %791 : vector<16x16xf32>
    %c-5_i32_396 = arith.constant -5 : i32
    %793 = vector.broadcast %c-5_i32_396 : i32 to vector<16x16xi32>
    %794 = arith.cmpi eq, %9, %793 : vector<16x16xi32>
    %c6_397 = arith.constant 6 : index
    %c2_398 = arith.constant 2 : index
    %795 = memref.load %arg4[%c6_397, %c2_398] : memref<8x15xf32, #tpu.memory_space<smem>>
    %cst_399 = arith.constant 0.000000e+00 : f32
    %796 = vector.broadcast %795 : f32 to vector<16x16xf32>
    %797 = vector.broadcast %cst_399 : f32 to vector<16x16xf32>
    %798 = arith.select %794, %796, %797 : vector<16x16xi1>, vector<16x16xf32>
    %799 = arith.addf %792, %798 : vector<16x16xf32>
    %c-4_i32_400 = arith.constant -4 : i32
    %800 = vector.broadcast %c-4_i32_400 : i32 to vector<16x16xi32>
    %801 = arith.cmpi eq, %9, %800 : vector<16x16xi32>
    %c6_401 = arith.constant 6 : index
    %c3_402 = arith.constant 3 : index
    %802 = memref.load %arg4[%c6_401, %c3_402] : memref<8x15xf32, #tpu.memory_space<smem>>
    %cst_403 = arith.constant 0.000000e+00 : f32
    %803 = vector.broadcast %802 : f32 to vector<16x16xf32>
    %804 = vector.broadcast %cst_403 : f32 to vector<16x16xf32>
    %805 = arith.select %801, %803, %804 : vector<16x16xi1>, vector<16x16xf32>
    %806 = arith.addf %799, %805 : vector<16x16xf32>
    %c-3_i32_404 = arith.constant -3 : i32
    %807 = vector.broadcast %c-3_i32_404 : i32 to vector<16x16xi32>
    %808 = arith.cmpi eq, %9, %807 : vector<16x16xi32>
    %c6_405 = arith.constant 6 : index
    %c4_406 = arith.constant 4 : index
    %809 = memref.load %arg4[%c6_405, %c4_406] : memref<8x15xf32, #tpu.memory_space<smem>>
    %cst_407 = arith.constant 0.000000e+00 : f32
    %810 = vector.broadcast %809 : f32 to vector<16x16xf32>
    %811 = vector.broadcast %cst_407 : f32 to vector<16x16xf32>
    %812 = arith.select %808, %810, %811 : vector<16x16xi1>, vector<16x16xf32>
    %813 = arith.addf %806, %812 : vector<16x16xf32>
    %c-2_i32_408 = arith.constant -2 : i32
    %814 = vector.broadcast %c-2_i32_408 : i32 to vector<16x16xi32>
    %815 = arith.cmpi eq, %9, %814 : vector<16x16xi32>
    %c6_409 = arith.constant 6 : index
    %c5_410 = arith.constant 5 : index
    %816 = memref.load %arg4[%c6_409, %c5_410] : memref<8x15xf32, #tpu.memory_space<smem>>
    %cst_411 = arith.constant 0.000000e+00 : f32
    %817 = vector.broadcast %816 : f32 to vector<16x16xf32>
    %818 = vector.broadcast %cst_411 : f32 to vector<16x16xf32>
    %819 = arith.select %815, %817, %818 : vector<16x16xi1>, vector<16x16xf32>
    %820 = arith.addf %813, %819 : vector<16x16xf32>
    %c-1_i32_412 = arith.constant -1 : i32
    %821 = vector.broadcast %c-1_i32_412 : i32 to vector<16x16xi32>
    %822 = arith.cmpi eq, %9, %821 : vector<16x16xi32>
    %c6_413 = arith.constant 6 : index
    %c6_414 = arith.constant 6 : index
    %823 = memref.load %arg4[%c6_413, %c6_414] : memref<8x15xf32, #tpu.memory_space<smem>>
    %cst_415 = arith.constant 0.000000e+00 : f32
    %824 = vector.broadcast %823 : f32 to vector<16x16xf32>
    %825 = vector.broadcast %cst_415 : f32 to vector<16x16xf32>
    %826 = arith.select %822, %824, %825 : vector<16x16xi1>, vector<16x16xf32>
    %827 = arith.addf %820, %826 : vector<16x16xf32>
    %c0_i32_416 = arith.constant 0 : i32
    %828 = vector.broadcast %c0_i32_416 : i32 to vector<16x16xi32>
    %829 = arith.cmpi eq, %9, %828 : vector<16x16xi32>
    %c6_417 = arith.constant 6 : index
    %c7_418 = arith.constant 7 : index
    %830 = memref.load %arg4[%c6_417, %c7_418] : memref<8x15xf32, #tpu.memory_space<smem>>
    %cst_419 = arith.constant 0.000000e+00 : f32
    %831 = vector.broadcast %830 : f32 to vector<16x16xf32>
    %832 = vector.broadcast %cst_419 : f32 to vector<16x16xf32>
    %833 = arith.select %829, %831, %832 : vector<16x16xi1>, vector<16x16xf32>
    %834 = arith.addf %827, %833 : vector<16x16xf32>
    %c1_i32_420 = arith.constant 1 : i32
    %835 = vector.broadcast %c1_i32_420 : i32 to vector<16x16xi32>
    %836 = arith.cmpi eq, %9, %835 : vector<16x16xi32>
    %c6_421 = arith.constant 6 : index
    %c8_422 = arith.constant 8 : index
    %837 = memref.load %arg4[%c6_421, %c8_422] : memref<8x15xf32, #tpu.memory_space<smem>>
    %cst_423 = arith.constant 0.000000e+00 : f32
    %838 = vector.broadcast %837 : f32 to vector<16x16xf32>
    %839 = vector.broadcast %cst_423 : f32 to vector<16x16xf32>
    %840 = arith.select %836, %838, %839 : vector<16x16xi1>, vector<16x16xf32>
    %841 = arith.addf %834, %840 : vector<16x16xf32>
    %c2_i32_424 = arith.constant 2 : i32
    %842 = vector.broadcast %c2_i32_424 : i32 to vector<16x16xi32>
    %843 = arith.cmpi eq, %9, %842 : vector<16x16xi32>
    %c6_425 = arith.constant 6 : index
    %c9_426 = arith.constant 9 : index
    %844 = memref.load %arg4[%c6_425, %c9_426] : memref<8x15xf32, #tpu.memory_space<smem>>
    %cst_427 = arith.constant 0.000000e+00 : f32
    %845 = vector.broadcast %844 : f32 to vector<16x16xf32>
    %846 = vector.broadcast %cst_427 : f32 to vector<16x16xf32>
    %847 = arith.select %843, %845, %846 : vector<16x16xi1>, vector<16x16xf32>
    %848 = arith.addf %841, %847 : vector<16x16xf32>
    %c3_i32_428 = arith.constant 3 : i32
    %849 = vector.broadcast %c3_i32_428 : i32 to vector<16x16xi32>
    %850 = arith.cmpi eq, %9, %849 : vector<16x16xi32>
    %c6_429 = arith.constant 6 : index
    %c10_430 = arith.constant 10 : index
    %851 = memref.load %arg4[%c6_429, %c10_430] : memref<8x15xf32, #tpu.memory_space<smem>>
    %cst_431 = arith.constant 0.000000e+00 : f32
    %852 = vector.broadcast %851 : f32 to vector<16x16xf32>
    %853 = vector.broadcast %cst_431 : f32 to vector<16x16xf32>
    %854 = arith.select %850, %852, %853 : vector<16x16xi1>, vector<16x16xf32>
    %855 = arith.addf %848, %854 : vector<16x16xf32>
    %c4_i32_432 = arith.constant 4 : i32
    %856 = vector.broadcast %c4_i32_432 : i32 to vector<16x16xi32>
    %857 = arith.cmpi eq, %9, %856 : vector<16x16xi32>
    %c6_433 = arith.constant 6 : index
    %c11_434 = arith.constant 11 : index
    %858 = memref.load %arg4[%c6_433, %c11_434] : memref<8x15xf32, #tpu.memory_space<smem>>
    %cst_435 = arith.constant 0.000000e+00 : f32
    %859 = vector.broadcast %858 : f32 to vector<16x16xf32>
    %860 = vector.broadcast %cst_435 : f32 to vector<16x16xf32>
    %861 = arith.select %857, %859, %860 : vector<16x16xi1>, vector<16x16xf32>
    %862 = arith.addf %855, %861 : vector<16x16xf32>
    %c5_i32_436 = arith.constant 5 : i32
    %863 = vector.broadcast %c5_i32_436 : i32 to vector<16x16xi32>
    %864 = arith.cmpi eq, %9, %863 : vector<16x16xi32>
    %c6_437 = arith.constant 6 : index
    %c12_438 = arith.constant 12 : index
    %865 = memref.load %arg4[%c6_437, %c12_438] : memref<8x15xf32, #tpu.memory_space<smem>>
    %cst_439 = arith.constant 0.000000e+00 : f32
    %866 = vector.broadcast %865 : f32 to vector<16x16xf32>
    %867 = vector.broadcast %cst_439 : f32 to vector<16x16xf32>
    %868 = arith.select %864, %866, %867 : vector<16x16xi1>, vector<16x16xf32>
    %869 = arith.addf %862, %868 : vector<16x16xf32>
    %c6_i32_440 = arith.constant 6 : i32
    %870 = vector.broadcast %c6_i32_440 : i32 to vector<16x16xi32>
    %871 = arith.cmpi eq, %9, %870 : vector<16x16xi32>
    %c6_441 = arith.constant 6 : index
    %c13_442 = arith.constant 13 : index
    %872 = memref.load %arg4[%c6_441, %c13_442] : memref<8x15xf32, #tpu.memory_space<smem>>
    %cst_443 = arith.constant 0.000000e+00 : f32
    %873 = vector.broadcast %872 : f32 to vector<16x16xf32>
    %874 = vector.broadcast %cst_443 : f32 to vector<16x16xf32>
    %875 = arith.select %871, %873, %874 : vector<16x16xi1>, vector<16x16xf32>
    %876 = arith.addf %869, %875 : vector<16x16xf32>
    %c7_i32_444 = arith.constant 7 : i32
    %877 = vector.broadcast %c7_i32_444 : i32 to vector<16x16xi32>
    %878 = arith.cmpi eq, %9, %877 : vector<16x16xi32>
    %c6_445 = arith.constant 6 : index
    %c14_446 = arith.constant 14 : index
    %879 = memref.load %arg4[%c6_445, %c14_446] : memref<8x15xf32, #tpu.memory_space<smem>>
    %cst_447 = arith.constant 0.000000e+00 : f32
    %880 = vector.broadcast %879 : f32 to vector<16x16xf32>
    %881 = vector.broadcast %cst_447 : f32 to vector<16x16xf32>
    %882 = arith.select %878, %880, %881 : vector<16x16xi1>, vector<16x16xf32>
    %883 = arith.addf %876, %882 : vector<16x16xf32>
    %cst_448 = arith.constant dense<0.000000e+00> : vector<16x16xf32>
    %884 = tpu.matmul %883, %777, %cst_448 {dimension_numbers = #tpu.dot_dimension_numbers<[1], [0], [0], [1], [0, 0, 1, 1], [], []>} : vector<16x16xf32>, vector<16x16xf32>, vector<16x16xf32> -> vector<16x16xf32>
    %c6_449 = arith.constant 6 : index
    %885 = memref.load %arg5[%c6_449] : memref<8xf32, #tpu.memory_space<smem>>
    %886 = vector.broadcast %885 : f32 to vector<16x16xf32>
    %887 = arith.addf %884, %886 : vector<16x16xf32>
    %888 = arith.addf %777, %887 : vector<16x16xf32>
    %cst_450 = arith.constant dense<0xFF800000> : vector<16xf32>
    %889 = vector.multi_reduction <maximumf>, %888, %cst_450 [1] : vector<16x16xf32> to vector<16xf32>
    %890 = vector.shape_cast %889 : vector<16xf32> to vector<16x1xf32>
    %891 = vector.broadcast %890 : vector<16x1xf32> to vector<16x16xf32>
    %892 = arith.subf %888, %891 : vector<16x16xf32>
    %893 = math.exp %892 : vector<16x16xf32>
    %cst_451 = arith.constant dense<0.000000e+00> : vector<16xf32>
    %894 = vector.multi_reduction <add>, %893, %cst_451 [1] : vector<16x16xf32> to vector<16xf32>
    %895 = vector.shape_cast %894 : vector<16xf32> to vector<16x1xf32>
    %896 = vector.broadcast %895 : vector<16x1xf32> to vector<16x16xf32>
    %897 = arith.divf %893, %896 : vector<16x16xf32>
    %cst_452 = arith.constant dense<0.000000e+00> : vector<16x8xf32>
    %898 = tpu.matmul %897, %776, %cst_452 {dimension_numbers = #tpu.dot_dimension_numbers<[1], [0], [0], [1], [0, 0, 1, 1], [], []>} : vector<16x16xf32>, vector<16x8xf32>, vector<16x8xf32> -> vector<16x8xf32>
    %899 = vector.extract_strided_slice %6 {offsets = [0, 56], sizes = [16, 8], strides = [1, 1]} : vector<16x192xf32> to vector<16x8xf32>
    %cst_453 = arith.constant 0.353553385 : f32
    %900 = vector.broadcast %cst_453 : f32 to vector<16x8xf32>
    %901 = arith.mulf %899, %900 : vector<16x8xf32>
    %902 = vector.extract_strided_slice %6 {offsets = [0, 120], sizes = [16, 8], strides = [1, 1]} : vector<16x192xf32> to vector<16x8xf32>
    %903 = vector.extract_strided_slice %6 {offsets = [0, 184], sizes = [16, 8], strides = [1, 1]} : vector<16x192xf32> to vector<16x8xf32>
    %cst_454 = arith.constant dense<0.000000e+00> : vector<16x16xf32>
    %904 = tpu.matmul %901, %902, %cst_454 {dimension_numbers = #tpu.dot_dimension_numbers<[1], [1], [0], [0], [0, 0, 1, 0], [], []>} : vector<16x8xf32>, vector<16x8xf32>, vector<16x16xf32> -> vector<16x16xf32>
    %cst_455 = arith.constant 0.000000e+00 : f32
    %905 = vector.broadcast %cst_455 : f32 to vector<16x16xf32>
    %c-7_i32_456 = arith.constant -7 : i32
    %906 = vector.broadcast %c-7_i32_456 : i32 to vector<16x16xi32>
    %907 = arith.cmpi eq, %9, %906 : vector<16x16xi32>
    %c7_457 = arith.constant 7 : index
    %c0_458 = arith.constant 0 : index
    %908 = memref.load %arg4[%c7_457, %c0_458] : memref<8x15xf32, #tpu.memory_space<smem>>
    %cst_459 = arith.constant 0.000000e+00 : f32
    %909 = vector.broadcast %908 : f32 to vector<16x16xf32>
    %910 = vector.broadcast %cst_459 : f32 to vector<16x16xf32>
    %911 = arith.select %907, %909, %910 : vector<16x16xi1>, vector<16x16xf32>
    %912 = arith.addf %905, %911 : vector<16x16xf32>
    %c-6_i32_460 = arith.constant -6 : i32
    %913 = vector.broadcast %c-6_i32_460 : i32 to vector<16x16xi32>
    %914 = arith.cmpi eq, %9, %913 : vector<16x16xi32>
    %c7_461 = arith.constant 7 : index
    %c1_462 = arith.constant 1 : index
    %915 = memref.load %arg4[%c7_461, %c1_462] : memref<8x15xf32, #tpu.memory_space<smem>>
    %cst_463 = arith.constant 0.000000e+00 : f32
    %916 = vector.broadcast %915 : f32 to vector<16x16xf32>
    %917 = vector.broadcast %cst_463 : f32 to vector<16x16xf32>
    %918 = arith.select %914, %916, %917 : vector<16x16xi1>, vector<16x16xf32>
    %919 = arith.addf %912, %918 : vector<16x16xf32>
    %c-5_i32_464 = arith.constant -5 : i32
    %920 = vector.broadcast %c-5_i32_464 : i32 to vector<16x16xi32>
    %921 = arith.cmpi eq, %9, %920 : vector<16x16xi32>
    %c7_465 = arith.constant 7 : index
    %c2_466 = arith.constant 2 : index
    %922 = memref.load %arg4[%c7_465, %c2_466] : memref<8x15xf32, #tpu.memory_space<smem>>
    %cst_467 = arith.constant 0.000000e+00 : f32
    %923 = vector.broadcast %922 : f32 to vector<16x16xf32>
    %924 = vector.broadcast %cst_467 : f32 to vector<16x16xf32>
    %925 = arith.select %921, %923, %924 : vector<16x16xi1>, vector<16x16xf32>
    %926 = arith.addf %919, %925 : vector<16x16xf32>
    %c-4_i32_468 = arith.constant -4 : i32
    %927 = vector.broadcast %c-4_i32_468 : i32 to vector<16x16xi32>
    %928 = arith.cmpi eq, %9, %927 : vector<16x16xi32>
    %c7_469 = arith.constant 7 : index
    %c3_470 = arith.constant 3 : index
    %929 = memref.load %arg4[%c7_469, %c3_470] : memref<8x15xf32, #tpu.memory_space<smem>>
    %cst_471 = arith.constant 0.000000e+00 : f32
    %930 = vector.broadcast %929 : f32 to vector<16x16xf32>
    %931 = vector.broadcast %cst_471 : f32 to vector<16x16xf32>
    %932 = arith.select %928, %930, %931 : vector<16x16xi1>, vector<16x16xf32>
    %933 = arith.addf %926, %932 : vector<16x16xf32>
    %c-3_i32_472 = arith.constant -3 : i32
    %934 = vector.broadcast %c-3_i32_472 : i32 to vector<16x16xi32>
    %935 = arith.cmpi eq, %9, %934 : vector<16x16xi32>
    %c7_473 = arith.constant 7 : index
    %c4_474 = arith.constant 4 : index
    %936 = memref.load %arg4[%c7_473, %c4_474] : memref<8x15xf32, #tpu.memory_space<smem>>
    %cst_475 = arith.constant 0.000000e+00 : f32
    %937 = vector.broadcast %936 : f32 to vector<16x16xf32>
    %938 = vector.broadcast %cst_475 : f32 to vector<16x16xf32>
    %939 = arith.select %935, %937, %938 : vector<16x16xi1>, vector<16x16xf32>
    %940 = arith.addf %933, %939 : vector<16x16xf32>
    %c-2_i32_476 = arith.constant -2 : i32
    %941 = vector.broadcast %c-2_i32_476 : i32 to vector<16x16xi32>
    %942 = arith.cmpi eq, %9, %941 : vector<16x16xi32>
    %c7_477 = arith.constant 7 : index
    %c5_478 = arith.constant 5 : index
    %943 = memref.load %arg4[%c7_477, %c5_478] : memref<8x15xf32, #tpu.memory_space<smem>>
    %cst_479 = arith.constant 0.000000e+00 : f32
    %944 = vector.broadcast %943 : f32 to vector<16x16xf32>
    %945 = vector.broadcast %cst_479 : f32 to vector<16x16xf32>
    %946 = arith.select %942, %944, %945 : vector<16x16xi1>, vector<16x16xf32>
    %947 = arith.addf %940, %946 : vector<16x16xf32>
    %c-1_i32_480 = arith.constant -1 : i32
    %948 = vector.broadcast %c-1_i32_480 : i32 to vector<16x16xi32>
    %949 = arith.cmpi eq, %9, %948 : vector<16x16xi32>
    %c7_481 = arith.constant 7 : index
    %c6_482 = arith.constant 6 : index
    %950 = memref.load %arg4[%c7_481, %c6_482] : memref<8x15xf32, #tpu.memory_space<smem>>
    %cst_483 = arith.constant 0.000000e+00 : f32
    %951 = vector.broadcast %950 : f32 to vector<16x16xf32>
    %952 = vector.broadcast %cst_483 : f32 to vector<16x16xf32>
    %953 = arith.select %949, %951, %952 : vector<16x16xi1>, vector<16x16xf32>
    %954 = arith.addf %947, %953 : vector<16x16xf32>
    %c0_i32_484 = arith.constant 0 : i32
    %955 = vector.broadcast %c0_i32_484 : i32 to vector<16x16xi32>
    %956 = arith.cmpi eq, %9, %955 : vector<16x16xi32>
    %c7_485 = arith.constant 7 : index
    %c7_486 = arith.constant 7 : index
    %957 = memref.load %arg4[%c7_485, %c7_486] : memref<8x15xf32, #tpu.memory_space<smem>>
    %cst_487 = arith.constant 0.000000e+00 : f32
    %958 = vector.broadcast %957 : f32 to vector<16x16xf32>
    %959 = vector.broadcast %cst_487 : f32 to vector<16x16xf32>
    %960 = arith.select %956, %958, %959 : vector<16x16xi1>, vector<16x16xf32>
    %961 = arith.addf %954, %960 : vector<16x16xf32>
    %c1_i32_488 = arith.constant 1 : i32
    %962 = vector.broadcast %c1_i32_488 : i32 to vector<16x16xi32>
    %963 = arith.cmpi eq, %9, %962 : vector<16x16xi32>
    %c7_489 = arith.constant 7 : index
    %c8_490 = arith.constant 8 : index
    %964 = memref.load %arg4[%c7_489, %c8_490] : memref<8x15xf32, #tpu.memory_space<smem>>
    %cst_491 = arith.constant 0.000000e+00 : f32
    %965 = vector.broadcast %964 : f32 to vector<16x16xf32>
    %966 = vector.broadcast %cst_491 : f32 to vector<16x16xf32>
    %967 = arith.select %963, %965, %966 : vector<16x16xi1>, vector<16x16xf32>
    %968 = arith.addf %961, %967 : vector<16x16xf32>
    %c2_i32_492 = arith.constant 2 : i32
    %969 = vector.broadcast %c2_i32_492 : i32 to vector<16x16xi32>
    %970 = arith.cmpi eq, %9, %969 : vector<16x16xi32>
    %c7_493 = arith.constant 7 : index
    %c9_494 = arith.constant 9 : index
    %971 = memref.load %arg4[%c7_493, %c9_494] : memref<8x15xf32, #tpu.memory_space<smem>>
    %cst_495 = arith.constant 0.000000e+00 : f32
    %972 = vector.broadcast %971 : f32 to vector<16x16xf32>
    %973 = vector.broadcast %cst_495 : f32 to vector<16x16xf32>
    %974 = arith.select %970, %972, %973 : vector<16x16xi1>, vector<16x16xf32>
    %975 = arith.addf %968, %974 : vector<16x16xf32>
    %c3_i32_496 = arith.constant 3 : i32
    %976 = vector.broadcast %c3_i32_496 : i32 to vector<16x16xi32>
    %977 = arith.cmpi eq, %9, %976 : vector<16x16xi32>
    %c7_497 = arith.constant 7 : index
    %c10_498 = arith.constant 10 : index
    %978 = memref.load %arg4[%c7_497, %c10_498] : memref<8x15xf32, #tpu.memory_space<smem>>
    %cst_499 = arith.constant 0.000000e+00 : f32
    %979 = vector.broadcast %978 : f32 to vector<16x16xf32>
    %980 = vector.broadcast %cst_499 : f32 to vector<16x16xf32>
    %981 = arith.select %977, %979, %980 : vector<16x16xi1>, vector<16x16xf32>
    %982 = arith.addf %975, %981 : vector<16x16xf32>
    %c4_i32_500 = arith.constant 4 : i32
    %983 = vector.broadcast %c4_i32_500 : i32 to vector<16x16xi32>
    %984 = arith.cmpi eq, %9, %983 : vector<16x16xi32>
    %c7_501 = arith.constant 7 : index
    %c11_502 = arith.constant 11 : index
    %985 = memref.load %arg4[%c7_501, %c11_502] : memref<8x15xf32, #tpu.memory_space<smem>>
    %cst_503 = arith.constant 0.000000e+00 : f32
    %986 = vector.broadcast %985 : f32 to vector<16x16xf32>
    %987 = vector.broadcast %cst_503 : f32 to vector<16x16xf32>
    %988 = arith.select %984, %986, %987 : vector<16x16xi1>, vector<16x16xf32>
    %989 = arith.addf %982, %988 : vector<16x16xf32>
    %c5_i32_504 = arith.constant 5 : i32
    %990 = vector.broadcast %c5_i32_504 : i32 to vector<16x16xi32>
    %991 = arith.cmpi eq, %9, %990 : vector<16x16xi32>
    %c7_505 = arith.constant 7 : index
    %c12_506 = arith.constant 12 : index
    %992 = memref.load %arg4[%c7_505, %c12_506] : memref<8x15xf32, #tpu.memory_space<smem>>
    %cst_507 = arith.constant 0.000000e+00 : f32
    %993 = vector.broadcast %992 : f32 to vector<16x16xf32>
    %994 = vector.broadcast %cst_507 : f32 to vector<16x16xf32>
    %995 = arith.select %991, %993, %994 : vector<16x16xi1>, vector<16x16xf32>
    %996 = arith.addf %989, %995 : vector<16x16xf32>
    %c6_i32_508 = arith.constant 6 : i32
    %997 = vector.broadcast %c6_i32_508 : i32 to vector<16x16xi32>
    %998 = arith.cmpi eq, %9, %997 : vector<16x16xi32>
    %c7_509 = arith.constant 7 : index
    %c13_510 = arith.constant 13 : index
    %999 = memref.load %arg4[%c7_509, %c13_510] : memref<8x15xf32, #tpu.memory_space<smem>>
    %cst_511 = arith.constant 0.000000e+00 : f32
    %1000 = vector.broadcast %999 : f32 to vector<16x16xf32>
    %1001 = vector.broadcast %cst_511 : f32 to vector<16x16xf32>
    %1002 = arith.select %998, %1000, %1001 : vector<16x16xi1>, vector<16x16xf32>
    %1003 = arith.addf %996, %1002 : vector<16x16xf32>
    %c7_i32_512 = arith.constant 7 : i32
    %1004 = vector.broadcast %c7_i32_512 : i32 to vector<16x16xi32>
    %1005 = arith.cmpi eq, %9, %1004 : vector<16x16xi32>
    %c7_513 = arith.constant 7 : index
    %c14_514 = arith.constant 14 : index
    %1006 = memref.load %arg4[%c7_513, %c14_514] : memref<8x15xf32, #tpu.memory_space<smem>>
    %cst_515 = arith.constant 0.000000e+00 : f32
    %1007 = vector.broadcast %1006 : f32 to vector<16x16xf32>
    %1008 = vector.broadcast %cst_515 : f32 to vector<16x16xf32>
    %1009 = arith.select %1005, %1007, %1008 : vector<16x16xi1>, vector<16x16xf32>
    %1010 = arith.addf %1003, %1009 : vector<16x16xf32>
    %cst_516 = arith.constant dense<0.000000e+00> : vector<16x16xf32>
    %1011 = tpu.matmul %1010, %904, %cst_516 {dimension_numbers = #tpu.dot_dimension_numbers<[1], [0], [0], [1], [0, 0, 1, 1], [], []>} : vector<16x16xf32>, vector<16x16xf32>, vector<16x16xf32> -> vector<16x16xf32>
    %c7_517 = arith.constant 7 : index
    %1012 = memref.load %arg5[%c7_517] : memref<8xf32, #tpu.memory_space<smem>>
    %1013 = vector.broadcast %1012 : f32 to vector<16x16xf32>
    %1014 = arith.addf %1011, %1013 : vector<16x16xf32>
    %1015 = arith.addf %904, %1014 : vector<16x16xf32>
    %cst_518 = arith.constant dense<0xFF800000> : vector<16xf32>
    %1016 = vector.multi_reduction <maximumf>, %1015, %cst_518 [1] : vector<16x16xf32> to vector<16xf32>
    %1017 = vector.shape_cast %1016 : vector<16xf32> to vector<16x1xf32>
    %1018 = vector.broadcast %1017 : vector<16x1xf32> to vector<16x16xf32>
    %1019 = arith.subf %1015, %1018 : vector<16x16xf32>
    %1020 = math.exp %1019 : vector<16x16xf32>
    %cst_519 = arith.constant dense<0.000000e+00> : vector<16xf32>
    %1021 = vector.multi_reduction <add>, %1020, %cst_519 [1] : vector<16x16xf32> to vector<16xf32>
    %1022 = vector.shape_cast %1021 : vector<16xf32> to vector<16x1xf32>
    %1023 = vector.broadcast %1022 : vector<16x1xf32> to vector<16x16xf32>
    %1024 = arith.divf %1020, %1023 : vector<16x16xf32>
    %cst_520 = arith.constant dense<0.000000e+00> : vector<16x8xf32>
    %1025 = tpu.matmul %1024, %903, %cst_520 {dimension_numbers = #tpu.dot_dimension_numbers<[1], [0], [0], [1], [0, 0, 1, 1], [], []>} : vector<16x16xf32>, vector<16x8xf32>, vector<16x8xf32> -> vector<16x8xf32>
    %1026 = tpu.concatenate %136, %263, %390, %517, %644, %771, %898, %1025 in 1 : vector<16x8xf32>, vector<16x8xf32>, vector<16x8xf32>, vector<16x8xf32>, vector<16x8xf32>, vector<16x8xf32>, vector<16x8xf32>, vector<16x8xf32> -> vector<16x64xf32>
    %c0_521 = arith.constant 0 : index
    %c0_522 = arith.constant 0 : index
    %1027 = vector.load %arg6[%c0_521, %c0_522] : memref<64x64xf32, #tpu.memory_space<vmem>>, vector<64x64xf32>
    %cst_523 = arith.constant dense<0.000000e+00> : vector<16x64xf32>
    %1028 = tpu.matmul %1026, %1027, %cst_523 {dimension_numbers = #tpu.dot_dimension_numbers<[1], [0], [0], [1], [0, 0, 1, 1], [], []>} : vector<16x64xf32>, vector<64x64xf32>, vector<16x64xf32> -> vector<16x64xf32>
    %c0_524 = arith.constant 0 : index
    %c0_525 = arith.constant 0 : index
    %1029 = vector.load %arg7[%c0_524, %c0_525] : memref<1x64xf32, #tpu.memory_space<vmem>>, vector<1x64xf32>
    %1030 = vector.broadcast %1029 : vector<1x64xf32> to vector<16x64xf32>
    %1031 = arith.addf %1028, %1030 : vector<16x64xf32>
    %c0_526 = arith.constant 0 : index
    %c0_527 = arith.constant 0 : index
    %c0_528 = arith.constant 0 : index
    %1032 = vector.load %arg8[%c0_526, %c0_527, %c0_528] : memref<1x16x64xf32, #tpu.memory_space<vmem>>, vector<1x16x64xf32>
    %1033 = vector.shape_cast %1032 : vector<1x16x64xf32> to vector<16x64xf32>
    %1034 = vector.shape_cast %1031 : vector<16x64xf32> to vector<1x16x64xf32>
    tpu.vector_store %arg8[%c0_526, %c0_527, %c0_528], %1034 {strides = array<i32>} : memref<1x16x64xf32, #tpu.memory_space<vmem>>, vector<1x16x64xf32>,
    return
  }
  func.func @transform_0(%arg0: i32) -> (i32, i32, i32) {
    %c0_i32 = arith.constant 0 : i32
    %c0_i32_0 = arith.constant 0 : i32
    %c0_i32_1 = arith.constant 0 : i32
    return %arg0, %c0_i32, %c0_i32_0 : i32, i32, i32
  }
  func.func @transform_1(%arg0: i32) -> (i32, i32) {
    %c0_i32 = arith.constant 0 : i32
    %c0_i32_0 = arith.constant 0 : i32
    %c0_i32_1 = arith.constant 0 : i32
    return %c0_i32, %c0_i32_0 : i32, i32
  }
  func.func @transform_2(%arg0: i32) -> (i32, i32) {
    %c0_i32 = arith.constant 0 : i32
    %c0_i32_0 = arith.constant 0 : i32
    %c0_i32_1 = arith.constant 0 : i32
    return %c0_i32, %c0_i32_0 : i32, i32
  }
  func.func @transform_3(%arg0: i32) -> (i32, i32) {
    %c0_i32 = arith.constant 0 : i32
    %c0_i32_0 = arith.constant 0 : i32
    %c0_i32_1 = arith.constant 0 : i32
    return %c0_i32, %c0_i32_0 : i32, i32
  }
  func.func @transform_4(%arg0: i32) -> i32 {
    %c0_i32 = arith.constant 0 : i32
    %c0_i32_0 = arith.constant 0 : i32
    return %c0_i32 : i32
  }
  func.func @transform_5(%arg0: i32) -> (i32, i32) {
    %c0_i32 = arith.constant 0 : i32
    %c0_i32_0 = arith.constant 0 : i32
    %c0_i32_1 = arith.constant 0 : i32
    return %c0_i32, %c0_i32_0 : i32, i32
  }
  func.func @transform_6(%arg0: i32) -> (i32, i32) {
    %c0_i32 = arith.constant 0 : i32
    %c0_i32_0 = arith.constant 0 : i32
    %c0_i32_1 = arith.constant 0 : i32
    return %c0_i32, %c0_i32_0 : i32, i32
  }
  func.func @transform_7(%arg0: i32) -> (i32, i32, i32) {
    %c0_i32 = arith.constant 0 : i32
    %c0_i32_0 = arith.constant 0 : i32
    %c0_i32_1 = arith.constant 0 : i32
    return %arg0, %c0_i32, %c0_i32_0 : i32, i32, i32
  }
}

</mosaic_0001>

<llo_original>
// kernel: inner_attention_pallas.1
$region0: #{inner_attention_pallas.1}
  #allocation0 [shape = 'u32[]', space=smem, size = 0x4, offset = 0x4, fixed_abs, tag = 'smem constant byte address 0x4 - core index']
  #allocation1 [shape = 'u32[144,128]{1,0:T(1,128)}', space=vmem, size = 0x12000, scoped, tag = 'internal scratch']
  %s0 = inlined_call_operand.hbm [shape: f32[2,16,64], index: 0, kind: input, shape index: {}]
  %s1 = inlined_call_operand.hbm [shape: f32[64,192], index: 1, kind: input, shape index: {}]
  %s2 = inlined_call_operand.vmem [shape: f32[1,192], index: 2, kind: input, shape index: {}]
  %s3 = inlined_call_operand.vmem [shape: f32[8,15], index: 3, kind: input, shape index: {}]
  %s4 = inlined_call_operand.vmem [shape: f32[8], index: 4, kind: input, shape index: {}]
  %s5 = inlined_call_operand.hbm [shape: f32[64,64], index: 5, kind: input, shape index: {}]
  %s6 = inlined_call_operand.vmem [shape: f32[1,64], index: 6, kind: input, shape index: {}]
  %s7 = inlined_call_operand.hbm [shape: f32[2,16,64], index: 7, kind: output, shape index: {}]
  %s8 = sld [smem:[#allocation0]]
  $region81: #{inner_attention_pallas.1} parent=0
    _
  %s10 = ssub.s32 1, %s8
  %s11 = scalar_select 0, %s10, %s8
  $region1: #{inner_attention_pallas.1} parent=0
    #allocation2 [shape = 'u8[16384]{0}', space=vmem, size = 0x4000, scoped, tag = 'input window, operand 0']
    #allocation3 [shape = 's32[2]{0}', space=sflag, size = 0x8, scoped, tag = 'scoped memory for inner_attention_pallas.1']
    #allocation4 [shape = 's32[2]{0}', space=sflag, size = 0x8, scoped, tag = 'scoped memory for inner_attention_pallas.1']
    #allocation5 [shape = 's32[2]{0}', space=sflag, size = 0x8, scoped, tag = 'scoped memory for inner_attention_pallas.1']
    #allocation6 [shape = 'u8[65536]{0}', space=vmem, size = 0x10000, scoped, tag = 'input window, operand 1, single buffered']
    #allocation7 [shape = 's32[1]{0}', space=sflag, size = 0x4, scoped, tag = 'scoped memory for inner_attention_pallas.1']
    #allocation8 [shape = 'u8[4096]{0}', space=smem, size = 0x1000, scoped, tag = 'input window, operand 3, single buffered']
    #allocation9 [shape = 'u8[512]{0}', space=smem, size = 0x200, scoped, tag = 'input window, operand 4, single buffered']
    #allocation10 [shape = 's32[1]{0}', space=sflag, size = 0x4, scoped, tag = 'scoped memory for inner_attention_pallas.1']
    #allocation11 [shape = 'u8[32768]{0}', space=vmem, size = 0x8000, scoped, tag = 'input window, operand 5, single buffered']
    #allocation12 [shape = 'u8[16384]{0}', space=vmem, size = 0x4000, scoped, tag = 'output window, operand 0']
    %12 = vsyncpa [#allocation3], 0
    %s13 = scalar_lea.sflag [#allocation3], 1
    %14 = vsyncpa %s13, 0
    %15 = vsyncpa [#allocation7], 0
    %16 = vsyncpa [#allocation5], 0
    %17 = vsyncpa [#allocation10], 0
    %18 = vsyncpa [#allocation4], 0
    %s19 = scalar_lea.sflag [#allocation4], 1
    %20 = vsyncpa %s19, 0
    loop: start=0, step=1, limit=4
    $region2: #{inner_attention_pallas.1} parent=1 // loop_pre_header
      _
    $region3: #{inner_attention_pallas.1} parent=1 // loop_header
      %s22 = sphi 0, %s26
      %p23 = scmp.ge.s32.totalorder %s22, 4
      %s32 = sphi 0, %s34
      %s35 = sphi 0, %s32
      %s36 = sphi 0, %s35
      %s52 = sphi 0, %s36
      %s56 = sphi 0, %s56
      %s58 = sphi 0, %s56
      %s59 = sphi 0, %s58
      %s73 = sphi 0, %s59
      %s77 = sphi 0, %s77
      %s79 = sphi 0, %s77
      %s80 = sphi 0, %s79
      %s94 = sphi 0, %s80
      %s98 = sphi 0, %s98
      %s100 = sphi 0, %s98
      %s101 = sphi 0, %s100
      %s115 = sphi 0, %s101
      %s119 = sphi 0, %s119
      %s121 = sphi 0, %s119
      %s122 = sphi 0, %s121
      %s136 = sphi 0, %s122
      %s140 = sphi 0, %s140
      %s142 = sphi 0, %s140
      %s143 = sphi 0, %s142
      %s157 = sphi 0, %s143
      %s161 = sphi 0, %s161
      %s163 = sphi 0, %s161
      %s164 = sphi 0, %s163
      %s178 = sphi 0, %s164
      %s184 = sphi 0, %s186
      %s187 = sphi 0, %s184
      %s188 = sphi 0, %s187
      %s204 = sphi 0, %s188
    $region4: #{inner_attention_pallas.1} parent=1 // loop_header_branch
      %25 = sbr.rel (%p23) target = $region8
    $region5: #{inner_attention_pallas.1} parent=1 // loop_body
      %s27 = ssub.s32 %s22, 1
      %s28 = ssub.s32 %s22, 2
      %s29 = sadd.s32 %s22, 1
      %s30 = ssub.s32 %s22, %s29
      %p31 = scmp.eq.s32.totalorder %s30, 0
      %s33 = sadd.s32 %s32, 1
      %s34 = scalar_select %p31, %s32, %s33
      %p37 = pneg %p31
      %p38 = scmp.eq.s32.totalorder %s22, 1
      %p39 = por %p37, %p38
      %p40 = scmp.ne.s32.totalorder %s32, %s35
      %p41 = scmp.eq.s32.totalorder %s22, 0
      %p42 = por %p40, %p41
      %p43 = scmp.ne.s32.totalorder %s32, %s35
      %p44 = scmp.eq.s32.totalorder %s27, 1
      %p45 = por %p43, %p44
      %p46 = scmp.ne.s32.totalorder %s35, %s36
      %p47 = scmp.eq.s32.totalorder %s27, 0
      %p48 = por %p46, %p47
      %p49 = scmp.ne.s32.totalorder %s35, %s36
      %p50 = scmp.eq.s32.totalorder %s28, 1
      %p51 = por %p49, %p50
      %p53 = scmp.ne.s32.totalorder %s36, %s52
      %p54 = scmp.eq.s32.totalorder %s28, 0
      %p55 = por %p53, %p54
      %s57 = sadd.s32 %s56, 1
      %p60 = scmp.eq.s32.totalorder %s22, 1
      %p61 = scmp.ne.s32.totalorder %s56, %s58
      %p62 = scmp.eq.s32.totalorder %s22, 0
      %p63 = por %p61, %p62
      %p64 = scmp.ne.s32.totalorder %s56, %s58
      %p65 = scmp.eq.s32.totalorder %s27, 1
      %p66 = por %p64, %p65
      %p67 = scmp.ne.s32.totalorder %s58, %s59
      %p68 = scmp.eq.s32.totalorder %s27, 0
      %p69 = por %p67, %p68
      %p70 = scmp.ne.s32.totalorder %s58, %s59
      %p71 = scmp.eq.s32.totalorder %s28, 1
      %p72 = por %p70, %p71
      %p74 = scmp.ne.s32.totalorder %s59, %s73
      %p75 = scmp.eq.s32.totalorder %s28, 0
      %p76 = por %p74, %p75
      %s78 = sadd.s32 %s77, 1
      %p81 = scmp.eq.s32.totalorder %s22, 1
      %p82 = scmp.ne.s32.totalorder %s77, %s79
      %p83 = scmp.eq.s32.totalorder %s22, 0
      %p84 = por %p82, %p83
      %p85 = scmp.ne.s32.totalorder %s77, %s79
      %p86 = scmp.eq.s32.totalorder %s27, 1
      %p87 = por %p85, %p86
      %p88 = scmp.ne.s32.totalorder %s79, %s80
      %p89 = scmp.eq.s32.totalorder %s27, 0
      %p90 = por %p88, %p89
      %p91 = scmp.ne.s32.totalorder %s79, %s80
      %p92 = scmp.eq.s32.totalorder %s28, 1
      %p93 = por %p91, %p92
      %p95 = scmp.ne.s32.totalorder %s80, %s94
      %p96 = scmp.eq.s32.totalorder %s28, 0
      %p97 = por %p95, %p96
      %s99 = sadd.s32 %s98, 1
      %p102 = scmp.eq.s32.totalorder %s22, 1
      %p103 = scmp.ne.s32.totalorder %s98, %s100
      %p104 = scmp.eq.s32.totalorder %s22, 0
      %p105 = por %p103, %p104
      %p106 = scmp.ne.s32.totalorder %s98, %s100
      %p107 = scmp.eq.s32.totalorder %s27, 1
      %p108 = por %p106, %p107
      %p109 = scmp.ne.s32.totalorder %s100, %s101
      %p110 = scmp.eq.s32.totalorder %s27, 0
      %p111 = por %p109, %p110
      %p112 = scmp.ne.s32.totalorder %s100, %s101
      %p113 = scmp.eq.s32.totalorder %s28, 1
      %p114 = por %p112, %p113
      %p116 = scmp.ne.s32.totalorder %s101, %s115
      %p117 = scmp.eq.s32.totalorder %s28, 0
      %p118 = por %p116, %p117
      %s120 = sadd.s32 %s119, 1
      %p123 = scmp.eq.s32.totalorder %s22, 1
      %p124 = scmp.ne.s32.totalorder %s119, %s121
      %p125 = scmp.eq.s32.totalorder %s22, 0
      %p126 = por %p124, %p125
      %p127 = scmp.ne.s32.totalorder %s119, %s121
      %p128 = scmp.eq.s32.totalorder %s27, 1
      %p129 = por %p127, %p128
      %p130 = scmp.ne.s32.totalorder %s121, %s122
      %p131 = scmp.eq.s32.totalorder %s27, 0
      %p132 = por %p130, %p131
      %p133 = scmp.ne.s32.totalorder %s121, %s122
      %p134 = scmp.eq.s32.totalorder %s28, 1
      %p135 = por %p133, %p134
      %p137 = scmp.ne.s32.totalorder %s122, %s136
      %p138 = scmp.eq.s32.totalorder %s28, 0
      %p139 = por %p137, %p138
      %s141 = sadd.s32 %s140, 1
      %p144 = scmp.eq.s32.totalorder %s22, 1
      %p145 = scmp.ne.s32.totalorder %s140, %s142
      %p146 = scmp.eq.s32.totalorder %s22, 0
      %p147 = por %p145, %p146
      %p148 = scmp.ne.s32.totalorder %s140, %s142
      %p149 = scmp.eq.s32.totalorder %s27, 1
      %p150 = por %p148, %p149
      %p151 = scmp.ne.s32.totalorder %s142, %s143
      %p152 = scmp.eq.s32.totalorder %s27, 0
      %p153 = por %p151, %p152
      %p154 = scmp.ne.s32.totalorder %s142, %s143
      %p155 = scmp.eq.s32.totalorder %s28, 1
      %p156 = por %p154, %p155
      %p158 = scmp.ne.s32.totalorder %s143, %s157
      %p159 = scmp.eq.s32.totalorder %s28, 0
      %p160 = por %p158, %p159
      %s162 = sadd.s32 %s161, 1
      %p165 = scmp.eq.s32.totalorder %s22, 1
      %p166 = scmp.ne.s32.totalorder %s161, %s163
      %p167 = scmp.eq.s32.totalorder %s22, 0
      %p168 = por %p166, %p167
      %p169 = scmp.ne.s32.totalorder %s161, %s163
      %p170 = scmp.eq.s32.totalorder %s27, 1
      %p171 = por %p169, %p170
      %p172 = scmp.ne.s32.totalorder %s163, %s164
      %p173 = scmp.eq.s32.totalorder %s27, 0
      %p174 = por %p172, %p173
      %p175 = scmp.ne.s32.totalorder %s163, %s164
      %p176 = scmp.eq.s32.totalorder %s28, 1
      %p177 = por %p175, %p176
      %p179 = scmp.ne.s32.totalorder %s164, %s178
      %p180 = scmp.eq.s32.totalorder %s28, 0
      %p181 = por %p179, %p180
      %s182 = ssub.s32 %s22, %s29
      %p183 = scmp.eq.s32.totalorder %s182, 0
      %s185 = sadd.s32 %s184, 1
      %s186 = scalar_select %p183, %s184, %s185
      %p189 = pneg %p183
      %p190 = scmp.eq.s32.totalorder %s22, 1
      %p191 = por %p189, %p190
      %p192 = scmp.ne.s32.totalorder %s184, %s187
      %p193 = scmp.eq.s32.totalorder %s22, 0
      %p194 = por %p192, %p193
      %p195 = scmp.ne.s32.totalorder %s184, %s187
      %p196 = scmp.eq.s32.totalorder %s27, 1
      %p197 = por %p195, %p196
      %p198 = scmp.ne.s32.totalorder %s187, %s188
      %p199 = scmp.eq.s32.totalorder %s27, 0
      %p200 = por %p198, %p199
      %p201 = scmp.ne.s32.totalorder %s187, %s188
      %p202 = scmp.eq.s32.totalorder %s28, 1
      %p203 = por %p201, %p202
      %p205 = scmp.ne.s32.totalorder %s188, %s204
      %p206 = scmp.eq.s32.totalorder %s28, 0
      %p207 = por %p205, %p206
      %p208 = scmp.le.s32.totalorder 1, %s22
      %p209 = scmp.lt.s32.totalorder %s22, 3
      %p210 = pnand %p208, %p209
      %p211 = pneg %p210
      // Predicated region
      $region9: #{inner_attention_pallas.1} parent=5 // pred_check
        _
      $region10: #{inner_attention_pallas.1} parent=5 // pred_check_branch
        %213 = sbr.rel (%p210) target = $region12
      $region11: #{inner_attention_pallas.1} parent=5 // pred_region
        %s214 = ssub.s32 %s22, 1
        // Predicated region
        $region13: #{inner_attention_pallas.1} parent=11 // pred_check
          %p215 = pneg %p69
        $region14: #{inner_attention_pallas.1} parent=11 // pred_check_branch
          %217 = sbr.rel (%p215) target = $region16
        $region15: #{inner_attention_pallas.1} parent=11 // pred_region
          %s219 = ssub.s32 2048, 2048
          %220 = vsyncadd [#allocation7], %s219
          %s221 = sshll.u32 [#allocation6], 4
          %s222 = int_to_ptr.vmem [resolvable:$true] %s221
          %227 = dma.hbm_to_vmem [thread:$0]  %s1, 2048, %s222, [#allocation7], 256, 256, 16
        $region16: #{inner_attention_pallas.1} parent=11 // pred_fallthru
          _
        // Predicated region
        $region17: #{inner_attention_pallas.1} parent=11 // pred_check
          %p228 = pneg %p90
        $region18: #{inner_attention_pallas.1} parent=11 // pred_check_branch
          %230 = sbr.rel (%p228) target = $region20
        $region19: #{inner_attention_pallas.1} parent=11 // pred_region
          _
        $region20: #{inner_attention_pallas.1} parent=11 // pred_fallthru
          _
        // Predicated region
        $region21: #{inner_attention_pallas.1} parent=11 // pred_check
          %p231 = pneg %p111
        $region22: #{inner_attention_pallas.1} parent=11 // pred_check_branch
          %233 = sbr.rel (%p231) target = $region24
        $region23: #{inner_attention_pallas.1} parent=11 // pred_region
          %s235 = ssub.s32 128, 128
          %236 = vsyncadd [#allocation5], %s235
          %s238 = sshll.u32 %s3, 4
          %s239 = int_to_ptr.vmem [resolvable:$true] %s238
          %241 = dma.vmem_to_smem %s239, 128, [#allocation8], [#allocation5]
        $region24: #{inner_attention_pallas.1} parent=11 // pred_fallthru
          _
        // Predicated region
        $region25: #{inner_attention_pallas.1} parent=11 // pred_check
          %p242 = pneg %p132
        $region26: #{inner_attention_pallas.1} parent=11 // pred_check_branch
          %244 = sbr.rel (%p242) target = $region28
        $region27: #{inner_attention_pallas.1} parent=11 // pred_region
          %s246 = ssub.s32 16, 16
          %247 = vsyncadd [#allocation10], %s246
          %s249 = sshll.u32 %s4, 4
          %s250 = int_to_ptr.vmem [resolvable:$true] %s249
          %252 = dma.vmem_to_smem %s250, 16, [#allocation9], [#allocation10]
        $region28: #{inner_attention_pallas.1} parent=11 // pred_fallthru
          _
        // Predicated region
        $region29: #{inner_attention_pallas.1} parent=11 // pred_check
          %p253 = pneg %p153
        $region30: #{inner_attention_pallas.1} parent=11 // pred_check_branch
          %255 = sbr.rel (%p253) target = $region32
        $region31: #{inner_attention_pallas.1} parent=11 // pred_region
          %s257 = ssub.s32 1024, 1024
          %258 = vsyncadd [#allocation7], %s257
          %s259 = sshll.u32 [#allocation11], 4
          %s260 = int_to_ptr.vmem [resolvable:$true] %s259
          %265 = dma.hbm_to_vmem [thread:$0]  %s5, 1024, %s260, [#allocation7], 128, 128, 8
        $region32: #{inner_attention_pallas.1} parent=11 // pred_fallthru
          _
        // Predicated region
        $region33: #{inner_attention_pallas.1} parent=11 // pred_check
          %p266 = pneg %p174
        $region34: #{inner_attention_pallas.1} parent=11 // pred_check_branch
          %268 = sbr.rel (%p266) target = $region36
        $region35: #{inner_attention_pallas.1} parent=11 // pred_region
          _
        $region36: #{inner_attention_pallas.1} parent=11 // pred_fallthru
          _
      $region12: #{inner_attention_pallas.1} parent=5 // pred_fallthru
        _
      %p269 = scmp.lt.s32.totalorder %s22, 2
      // Predicated region
      $region37: #{inner_attention_pallas.1} parent=5 // pred_check
        %p270 = pneg %p269
      $region38: #{inner_attention_pallas.1} parent=5 // pred_check_branch
        %272 = sbr.rel (%p270) target = $region40
      $region39: #{inner_attention_pallas.1} parent=5 // pred_region
        // Predicated region
        $region41: #{inner_attention_pallas.1} parent=39 // pred_check
          %p273 = pneg %p42
        $region42: #{inner_attention_pallas.1} parent=39 // pred_check_branch
          %275 = sbr.rel (%p273) target = $region44
        $region43: #{inner_attention_pallas.1} parent=39 // pred_region
          %s276 = sand.u32 %s32, 1
          %s277 = scalar_lea.sflag [#allocation3], %s276
          %s278 = sand.u32 %s32, 1
          %s279 = smul.addr %s278, 16
          %s280 = scalar_lea.vmem [#allocation2], %s279
          %s282 = ssub.s32 256, 256
          %283 = vsyncadd %s277, %s282
          %s284 = smul.addr %s22, 2
          %s285 = smul.addr %s284, 128
          %s286 = scalar_lea.hbm %s0, %s285
          %s287 = sshll.u32 %s280, 4
          %s288 = int_to_ptr.vmem [resolvable:$true] %s287
          %293 = dma.hbm_to_vmem [thread:$0]  %s286, 256, %s288, %s277, 128, 128, 8
        $region44: #{inner_attention_pallas.1} parent=39 // pred_fallthru
          _
      $region40: #{inner_attention_pallas.1} parent=5 // pred_fallthru
        _
      %p294 = scmp.le.s32.totalorder 1, %s22
      %p295 = scmp.lt.s32.totalorder %s22, 3
      %p296 = pnand %p294, %p295
      %p297 = pneg %p296
      // Predicated region
      $region45: #{inner_attention_pallas.1} parent=5 // pred_check
        _
      $region46: #{inner_attention_pallas.1} parent=5 // pred_check_branch
        %299 = sbr.rel (%p296) target = $region48
      $region47: #{inner_attention_pallas.1} parent=5 // pred_region
        %s300 = ssub.s32 %s22, 1
        %s301 = sand.u32 %s35, 1
        %s302 = scalar_lea.sflag [#allocation3], %s301
        %s303 = sand.u32 %s35, 1
        %s304 = smul.addr %s303, 16
        %s305 = scalar_lea.vmem [#allocation2], %s304
        // Predicated region
        $region49: #{inner_attention_pallas.1} parent=47 // pred_check
          %p306 = pneg %p48
        $region50: #{inner_attention_pallas.1} parent=47 // pred_check_branch
          %308 = sbr.rel (%p306) target = $region52
        $region51: #{inner_attention_pallas.1} parent=47 // pred_region
          %309 = dma.done %s302, 256
        $region52: #{inner_attention_pallas.1} parent=47 // pred_fallthru
          _
        // Predicated region
        $region53: #{inner_attention_pallas.1} parent=47 // pred_check
          %p310 = pneg %p69
        $region54: #{inner_attention_pallas.1} parent=47 // pred_check_branch
          %312 = sbr.rel (%p310) target = $region56
        $region55: #{inner_attention_pallas.1} parent=47 // pred_region
          %313 = dma.done [#allocation7], 2048
        $region56: #{inner_attention_pallas.1} parent=47 // pred_fallthru
          _
        // Predicated region
        $region57: #{inner_attention_pallas.1} parent=47 // pred_check
          %p314 = pneg %p111
        $region58: #{inner_attention_pallas.1} parent=47 // pred_check_branch
          %316 = sbr.rel (%p314) target = $region60
        $region59: #{inner_attention_pallas.1} parent=47 // pred_region
          %317 = dma.done [#allocation5], 128
        $region60: #{inner_attention_pallas.1} parent=47 // pred_fallthru
          _
        // Predicated region
        $region61: #{inner_attention_pallas.1} parent=47 // pred_check
          %p318 = pneg %p132
        $region62: #{inner_attention_pallas.1} parent=47 // pred_check_branch
          %320 = sbr.rel (%p318) target = $region64
        $region63: #{inner_attention_pallas.1} parent=47 // pred_region
          %321 = dma.done [#allocation10], 16
        $region64: #{inner_attention_pallas.1} parent=47 // pred_fallthru
          _
        // Predicated region
        $region65: #{inner_attention_pallas.1} parent=47 // pred_check
          %p322 = pneg %p153
        $region66: #{inner_attention_pallas.1} parent=47 // pred_check_branch
          %324 = sbr.rel (%p322) target = $region68
        $region67: #{inner_attention_pallas.1} parent=47 // pred_region
          %325 = dma.done [#allocation7], 1024
        $region68: #{inner_attention_pallas.1} parent=47 // pred_fallthru
          _
        %326 = sfence
        %s327 = sand.u32 %s35, 1
        %s328 = scalar_lea.sflag [#allocation3], %s327
        %s329 = sand.u32 %s35, 1
        %s330 = smul.addr %s329, 16
        %s331 = scalar_lea.vmem [#allocation2], %s330
        %p332 = pneg %p48
        %p333 = pneg %p45
        %p334 = pneg %p69
        %p335 = pneg %p66
        %p336 = pneg %p90
        %p337 = pneg %p87
        %p338 = pneg %p111
        %p339 = pneg %p108
        %p340 = pneg %p132
        %p341 = pneg %p129
        %p342 = pneg %p153
        %p343 = pneg %p150
        %p344 = pneg %p174
        %p345 = pneg %p171
        %p346 = pneg %p200
        %p347 = pneg %p197
        %s348 = sand.u32 %s187, 1
        %s349 = scalar_lea.sflag [#allocation4], %s348
        %s350 = sand.u32 %s187, 1
        %s351 = smul.addr %s350, 16
        %s352 = scalar_lea.vmem [#allocation12], %s351
        %v353 = vld [vmem:[%s305] sm:$0xff]
        %v354 = vld [vmem:[%s305 + $0x8] sm:$0xff]
        %v355 = vld [vmem:[#allocation6] sm:$0xff]
        %v356 = vld [vmem:[#allocation6 + $0x8] sm:$0xff]
        %v357 = vld [vmem:[#allocation6 + $0x10] sm:$0xff]
        %v358 = vld [vmem:[#allocation6 + $0x18] sm:$0xff]
        %v359 = vld [vmem:[#allocation6 + $0x20] sm:$0xff]
        %v360 = vld [vmem:[#allocation6 + $0x28] sm:$0xff]
        %v361 = vld [vmem:[#allocation6 + $0x30] sm:$0xff]
        %v362 = vld [vmem:[#allocation6 + $0x38] sm:$0xff]
        %v363 = vld [vmem:[#allocation6 + $0x40] sm:$0xff]
        %v364 = vld [vmem:[#allocation6 + $0x48] sm:$0xff]
        %v365 = vld [vmem:[#allocation6 + $0x50] sm:$0xff]
        %v366 = vld [vmem:[#allocation6 + $0x58] sm:$0xff]
        %v367 = vld [vmem:[#allocation6 + $0x60] sm:$0xff]
        %v368 = vld [vmem:[#allocation6 + $0x68] sm:$0xff]
        %v369 = vld [vmem:[#allocation6 + $0x70] sm:$0xff]
        %v370 = vld [vmem:[#allocation6 + $0x78] sm:$0xff]
        %v371 = vld [vmem:[%s2] sm:$0x3]
        %v373 = vlaneseq
        %v374 = vshrl.u32 %v373, 7
        %v375 = vsub.s32 0, %v374
        %v376 = vrot.slane %v371, %v375
        %v377 = vlaneseq
        %v378 = vshrl.u32 %v377, 7
        %v379 = vsub.s32 1, %v378
        %v380 = vrot.slane %v371, %v379
        %vm383 = vcmask 523264
        %v385 = vsel %vm383, %v353, 0
        %v388 = vsel %vm383, %v354, 0
        %390 = vmatprep.subr.mxu0 %v356
        %391 = vmatpush1.msra.mxu0 %v355
        %392 = vmatprep.subr.mxu0 %v358
        %393 = vmatpush1.msra.mxu0 %v357
        %394 = vmatprep.subr.mxu0 %v360
        %395 = vmatpush1.msra.mxu0 %v359
        %396 = vmatprep.subr.mxu0 %v362
        %397 = vmatpush1.msra.mxu0 %v361
        %398 = vmatprep.subr.mxu0 %v364
        %399 = vmatpush1.msra.mxu0 %v363
        %400 = vmatprep.subr.mxu0 %v366
        %401 = vmatpush1.msra.mxu0 %v365
        %402 = vmatprep.subr.mxu0 %v368
        %403 = vmatpush1.msra.mxu0 %v367
        %404 = vmatprep.subr.mxu0 %v370
        %405 = vmatpush1.msra.mxu0 %v369
        %406 = vmatprep.subr.mxu0 0.0
        %407 = vmatpush1.msra.mxu0 0.0
        %408 = vmatprep.subr.mxu0 0.0
        %409 = vmatpush1.msra.mxu0 0.0
        %410 = vmatprep.subr.mxu0 0.0
        %411 = vmatpush1.msra.mxu0 0.0
        %412 = vmatprep.subr.mxu0 0.0
        %413 = vmatpush1.msra.mxu0 0.0
        %414 = vmatprep.subr.mxu0 0.0
        %415 = vmatpush1.msra.mxu0 0.0
        %416 = vmatprep.subr.mxu0 0.0
        %417 = vmatpush1.msra.mxu0 0.0
        %418 = vmatprep.subr.mxu0 0.0
        %419 = vmatpush1.msra.mxu0 0.0
        %420 = vmatprep.subr.mxu0 0.0
        %421 = vmatpush1.msra.mxu0 0.0
        %422 = vmatprep.subr.mxu0 0.0
        %423 = vmatpush1.msra.mxu0 0.0
        %424 = vmatprep.subr.mxu0 0.0
        %425 = vmatpush1.msra.mxu0 0.0
        %426 = vmatprep.subr.mxu0 0.0
        %427 = vmatpush1.msra.mxu0 0.0
        %428 = vmatprep.subr.mxu0 0.0
        %429 = vmatpush1.msra.mxu0 0.0
        %430 = vmatprep.subr.mxu0 0.0
        %431 = vmatpush1.msra.mxu0 0.0
        %432 = vmatprep.subr.mxu0 0.0
        %433 = vmatpush1.msra.mxu0 0.0
        %434 = vmatprep.subr.mxu0 0.0
        %435 = vmatpush1.msra.mxu0 0.0
        %436 = vmatprep.subr.mxu0 0.0
        %437 = vmatpush1.msra.mxu0 0.0
        %438 = vmatprep.subr.mxu0 0.0
        %439 = vmatpush1.msra.mxu0 0.0
        %440 = vmatprep.subr.mxu0 0.0
        %441 = vmatpush1.msra.mxu0 0.0
        %442 = vmatprep.subr.mxu0 0.0
        %443 = vmatpush1.msra.mxu0 0.0
        %444 = vmatprep.subr.mxu0 0.0
        %445 = vmatpush1.msra.mxu0 0.0
        %446 = vmatprep.subr.mxu0 0.0
        %447 = vmatpush1.msra.mxu0 0.0
        %448 = vmatprep.subr.mxu0 0.0
        %449 = vmatpush1.msra.mxu0 0.0
        %450 = vmatprep.subr.mxu0 0.0
        %451 = vmatpush1.msra.mxu0 0.0
        %452 = vmatprep.subr.mxu0 0.0
        %453 = vmatpush1.msra.mxu0 0.0
        %454 = vmatprep.mubr.f32.mxu0 0.0
        %455 = vmatmul.mubr.f32.gmra.mrb[0].mxu0 %v385
        %v456 = vpop.f32.mrb[0].mxu0
        %v457 = vadd.f32 %v376, %v456
        %v458 = vpop.f32.mrb[0].mxu0
        %v459 = vadd.f32 %v380, %v458
        %460 = vmatprep.mubr.f32.mxu0 0.0
        %461 = vmatmul.mubr.f32.gmra.mrb[0].mxu0 %v388
        %v462 = vpop.f32.mrb[0].mxu0
        %v463 = vadd.f32 %v376, %v462
        %v464 = vpop.f32.mrb[0].mxu0
        %v465 = vadd.f32 %v380, %v464
        %466 = vdwg.mxu0
        %v467 = vlaneseq
        %v468 = vshrl.u32 %v467, 7
        %v469 = vadd.s32 %v468, 8
        %v470 = vlaneseq
        %v471 = vand.u32 %v470, 127
        %v472 = vsub.s32 %v471, %v468
        %v473 = vsub.s32 %v471, %v469
        %v474 = vmul.f32 %v457, 0.35355338
        %v475 = vmul.f32 %v463, 0.35355338
        %478 = vrot.lane.b32.xlu0 %v457, 64
        %v479 = vpop.permute.xlu0 %478
        %480 = vrot.lane.b32.xlu0 %v463, 64
        %v481 = vpop.permute.xlu0 %480
        %vm482 = vcmask 64512
        %v484 = vsel %vm482, %v474, 0
        %v487 = vsel %vm482, %v475, 0
        %v489 = vsel %vm482, %v479, 0
        %v491 = vsel %vm482, %v481, 0
        %493 = vmatprep.subr.mxu0 0.0
        %494 = vmatpush1.xpose.msra.mxu0 %v489
        %495 = vmatprep.subr.mxu0 0.0
        %496 = vmatpush1.xpose.msra.mxu0 %v491
        %497 = vmatprep.subr.mxu0 0.0
        %498 = vmatpush1.xpose.msra.mxu0 0.0
        %499 = vmatprep.subr.mxu0 0.0
        %500 = vmatpush1.xpose.msra.mxu0 0.0
        %501 = vmatprep.subr.mxu0 0.0
        %502 = vmatpush1.xpose.msra.mxu0 0.0
        %503 = vmatprep.subr.mxu0 0.0
        %504 = vmatpush1.xpose.msra.mxu0 0.0
        %505 = vmatprep.subr.mxu0 0.0
        %506 = vmatpush1.xpose.msra.mxu0 0.0
        %507 = vmatprep.subr.mxu0 0.0
        %508 = vmatpush1.xpose.msra.mxu0 0.0
        %509 = vmatprep.subr.mxu0 0.0
        %510 = vmatpush1.xpose.msra.mxu0 0.0
        %511 = vmatprep.subr.mxu0 0.0
        %512 = vmatpush1.xpose.msra.mxu0 0.0
        %513 = vmatprep.subr.mxu0 0.0
        %514 = vmatpush1.xpose.msra.mxu0 0.0
        %515 = vmatprep.subr.mxu0 0.0
        %516 = vmatpush1.xpose.msra.mxu0 0.0
        %517 = vmatprep.subr.mxu0 0.0
        %518 = vmatpush1.xpose.msra.mxu0 0.0
        %519 = vmatprep.subr.mxu0 0.0
        %520 = vmatpush1.xpose.msra.mxu0 0.0
        %521 = vmatprep.subr.mxu0 0.0
        %522 = vmatpush1.xpose.msra.mxu0 0.0
        %523 = vmatprep.subr.mxu0 0.0
        %524 = vmatpush1.xpose.msra.mxu0 0.0
        %525 = vmatprep.subr.mxu0 0.0
        %526 = vmatpush1.xpose.msra.mxu0 0.0
        %527 = vmatprep.subr.mxu0 0.0
        %528 = vmatpush1.xpose.msra.mxu0 0.0
        %529 = vmatprep.subr.mxu0 0.0
        %530 = vmatpush1.xpose.msra.mxu0 0.0
        %531 = vmatprep.subr.mxu0 0.0
        %532 = vmatpush1.xpose.msra.mxu0 0.0
        %533 = vmatprep.subr.mxu0 0.0
        %534 = vmatpush1.xpose.msra.mxu0 0.0
        %535 = vmatprep.subr.mxu0 0.0
        %536 = vmatpush1.xpose.msra.mxu0 0.0
        %537 = vmatprep.subr.mxu0 0.0
        %538 = vmatpush1.xpose.msra.mxu0 0.0
        %539 = vmatprep.subr.mxu0 0.0
        %540 = vmatpush1.xpose.msra.mxu0 0.0
        %541 = vmatprep.subr.mxu0 0.0
        %542 = vmatpush1.xpose.msra.mxu0 0.0
        %543 = vmatprep.subr.mxu0 0.0
        %544 = vmatpush1.xpose.msra.mxu0 0.0
        %545 = vmatprep.subr.mxu0 0.0
        %546 = vmatpush1.xpose.msra.mxu0 0.0
        %547 = vmatprep.subr.mxu0 0.0
        %548 = vmatpush1.xpose.msra.mxu0 0.0
        %549 = vmatprep.subr.mxu0 0.0
        %550 = vmatpush1.xpose.msra.mxu0 0.0
        %551 = vmatprep.subr.mxu0 0.0
        %552 = vmatpush1.xpose.msra.mxu0 0.0
        %553 = vmatprep.subr.mxu0 0.0
        %554 = vmatpush1.xpose.msra.mxu0 0.0
        %555 = vmatprep.subr.mxu0 0.0
        %556 = vmatpush1.xpose.msra.mxu0 0.0
        %557 = vmatprep.mubr.f32.mxu0 0.0
        %558 = vmatmul.mubr.f32.gmra.mrb[0].mxu0 %v484
        %v559 = vpop.f32.mrb[0].mxu0
        %v560 = vadd.f32 0.0, %v559
        %v561 = vpop.f32.mrb[0].mxu0
        %562 = vmatprep.mubr.f32.mxu0 0.0
        %563 = vmatmul.mubr.f32.gmra.mrb[0].mxu0 %v487
        %v564 = vpop.f32.mrb[0].mxu0
        %v565 = vadd.f32 0.0, %v564
        %v566 = vpop.f32.mrb[0].mxu0
        %567 = vdwg.mxu0
        %vm568 = vcmp.eq.s32.totalorder %v472, 4294967289
        %vm569 = vcmp.eq.s32.totalorder %v473, 4294967289
        %s570 = sld [smem:[#allocation8]]
        %v571 = vstv %s570
        %v572 = vsel %vm568, %v571, 0.0
        %v573 = vsel %vm569, %v571, 0.0
        %v574 = vadd.f32 %v572, 0.0
        %v575 = vadd.f32 %v573, 0.0
        %vm576 = vcmp.eq.s32.totalorder %v472, 4294967290
        %vm577 = vcmp.eq.s32.totalorder %v473, 4294967290
        %s578 = sld [smem:[#allocation8 + $0x1]]
        %v579 = vstv %s578
        %v580 = vsel %vm576, %v579, 0.0
        %v581 = vsel %vm577, %v579, 0.0
        %v582 = vadd.f32 %v574, %v580
        %v583 = vadd.f32 %v575, %v581
        %vm584 = vcmp.eq.s32.totalorder %v472, 4294967291
        %vm585 = vcmp.eq.s32.totalorder %v473, 4294967291
        %s586 = sld [smem:[#allocation8 + $0x2]]
        %v587 = vstv %s586
        %v588 = vsel %vm584, %v587, 0.0
        %v589 = vsel %vm585, %v587, 0.0
        %v590 = vadd.f32 %v582, %v588
        %v591 = vadd.f32 %v583, %v589
        %vm592 = vcmp.eq.s32.totalorder %v472, 4294967292
        %vm593 = vcmp.eq.s32.totalorder %v473, 4294967292
        %s594 = sld [smem:[#allocation8 + $0x3]]
        %v595 = vstv %s594
        %v596 = vsel %vm592, %v595, 0.0
        %v597 = vsel %vm593, %v595, 0.0
        %v598 = vadd.f32 %v590, %v596
        %v599 = vadd.f32 %v591, %v597
        %vm600 = vcmp.eq.s32.totalorder %v472, 4294967293
        %vm601 = vcmp.eq.s32.totalorder %v473, 4294967293
        %s602 = sld [smem:[#allocation8 + $0x4]]
        %v603 = vstv %s602
        %v604 = vsel %vm600, %v603, 0.0
        %v605 = vsel %vm601, %v603, 0.0
        %v606 = vadd.f32 %v598, %v604
        %v607 = vadd.f32 %v599, %v605
        %vm608 = vcmp.eq.s32.totalorder %v472, 4294967294
        %vm609 = vcmp.eq.s32.totalorder %v473, 4294967294
        %s610 = sld [smem:[#allocation8 + $0x5]]
        %v611 = vstv %s610
        %v612 = vsel %vm608, %v611, 0.0
        %v613 = vsel %vm609, %v611, 0.0
        %v614 = vadd.f32 %v606, %v612
        %v615 = vadd.f32 %v607, %v613
        %vm616 = vcmp.eq.s32.totalorder %v472, 4294967295
        %vm617 = vcmp.eq.s32.totalorder %v473, 4294967295
        %s618 = sld [smem:[#allocation8 + $0x6]]
        %v619 = vstv %s618
        %v620 = vsel %vm616, %v619, 0.0
        %v621 = vsel %vm617, %v619, 0.0
        %v622 = vadd.f32 %v614, %v620
        %v623 = vadd.f32 %v615, %v621
        %vm624 = vcmp.eq.s32.totalorder %v472, 0
        %vm625 = vcmp.eq.s32.totalorder %v473, 0
        %s626 = sld [smem:[#allocation8 + $0x7]]
        %v627 = vstv %s626
        %v628 = vsel %vm624, %v627, 0.0
        %v629 = vsel %vm625, %v627, 0.0
        %v630 = vadd.f32 %v622, %v628
        %v631 = vadd.f32 %v623, %v629
        %vm632 = vcmp.eq.s32.totalorder %v472, 1
        %vm633 = vcmp.eq.s32.totalorder %v473, 1
        %s634 = sld [smem:[#allocation8 + $0x8]]
        %v635 = vstv %s634
        %v636 = vsel %vm632, %v635, 0.0
        %v637 = vsel %vm633, %v635, 0.0
        %v638 = vadd.f32 %v630, %v636
        %v639 = vadd.f32 %v631, %v637
        %vm640 = vcmp.eq.s32.totalorder %v472, 2
        %vm641 = vcmp.eq.s32.totalorder %v473, 2
        %s642 = sld [smem:[#allocation8 + $0x9]]
        %v643 = vstv %s642
        %v644 = vsel %vm640, %v643, 0.0
        %v645 = vsel %vm641, %v643, 0.0
        %v646 = vadd.f32 %v638, %v644
        %v647 = vadd.f32 %v639, %v645
        %vm648 = vcmp.eq.s32.totalorder %v472, 3
        %vm649 = vcmp.eq.s32.totalorder %v473, 3
        %s650 = sld [smem:[#allocation8 + $0xa]]
        %v651 = vstv %s650
        %v652 = vsel %vm648, %v651, 0.0
        %v653 = vsel %vm649, %v651, 0.0
        %v654 = vadd.f32 %v646, %v652
        %v655 = vadd.f32 %v647, %v653
        %vm656 = vcmp.eq.s32.totalorder %v472, 4
        %vm657 = vcmp.eq.s32.totalorder %v473, 4
        %s658 = sld [smem:[#allocation8 + $0xb]]
        %v659 = vstv %s658
        %v660 = vsel %vm656, %v659, 0.0
        %v661 = vsel %vm657, %v659, 0.0
        %v662 = vadd.f32 %v654, %v660
        %v663 = vadd.f32 %v655, %v661
        %vm664 = vcmp.eq.s32.totalorder %v472, 5
        %vm665 = vcmp.eq.s32.totalorder %v473, 5
        %s666 = sld [smem:[#allocation8 + $0xc]]
        %v667 = vstv %s666
        %v668 = vsel %vm664, %v667, 0.0
        %v669 = vsel %vm665, %v667, 0.0
        %v670 = vadd.f32 %v662, %v668
        %v671 = vadd.f32 %v663, %v669
        %vm672 = vcmp.eq.s32.totalorder %v472, 6
        %vm673 = vcmp.eq.s32.totalorder %v473, 6
        %s674 = sld [smem:[#allocation8 + $0xd]]
        %v675 = vstv %s674
        %v676 = vsel %vm672, %v675, 0.0
        %v677 = vsel %vm673, %v675, 0.0
        %v678 = vadd.f32 %v670, %v676
        %v679 = vadd.f32 %v671, %v677
        %vm680 = vcmp.eq.s32.totalorder %v472, 7
        %vm681 = vcmp.eq.s32.totalorder %v473, 7
        %s682 = sld [smem:[#allocation8 + $0xe]]
        %v683 = vstv %s682
        %v684 = vsel %vm680, %v683, 0.0
        %v685 = vsel %vm681, %v683, 0.0
        %v686 = vadd.f32 %v678, %v684
        %v687 = vadd.f32 %v679, %v685
        %s688 = sld [smem:[#allocation9]]
        %v689 = vstv %s688
        %vm690 = vcmask 130048
        %v692 = vsel %vm690, %v686, 0
        %v695 = vsel %vm690, %v687, 0
        %697 = vmatprep.subr.mxu0 0.0
        %698 = vmatpush1.msra.mxu0 %v560
        %699 = vmatprep.subr.mxu0 0.0
        %700 = vmatpush1.msra.mxu0 %v565
        %701 = vmatprep.subr.mxu0 0.0
        %702 = vmatpush1.msra.mxu0 0.0
        %703 = vmatprep.subr.mxu0 0.0
        %704 = vmatpush1.msra.mxu0 0.0
        %705 = vmatprep.subr.mxu0 0.0
        %706 = vmatpush1.msra.mxu0 0.0
        %707 = vmatprep.subr.mxu0 0.0
        %708 = vmatpush1.msra.mxu0 0.0
        %709 = vmatprep.subr.mxu0 0.0
        %710 = vmatpush1.msra.mxu0 0.0
        %711 = vmatprep.subr.mxu0 0.0
        %712 = vmatpush1.msra.mxu0 0.0
        %713 = vmatprep.subr.mxu0 0.0
        %714 = vmatpush1.msra.mxu0 0.0
        %715 = vmatprep.subr.mxu0 0.0
        %716 = vmatpush1.msra.mxu0 0.0
        %717 = vmatprep.subr.mxu0 0.0
        %718 = vmatpush1.msra.mxu0 0.0
        %719 = vmatprep.subr.mxu0 0.0
        %720 = vmatpush1.msra.mxu0 0.0
        %721 = vmatprep.subr.mxu0 0.0
        %722 = vmatpush1.msra.mxu0 0.0
        %723 = vmatprep.subr.mxu0 0.0
        %724 = vmatpush1.msra.mxu0 0.0
        %725 = vmatprep.subr.mxu0 0.0
        %726 = vmatpush1.msra.mxu0 0.0
        %727 = vmatprep.subr.mxu0 0.0
        %728 = vmatpush1.msra.mxu0 0.0
        %729 = vmatprep.subr.mxu0 0.0
        %730 = vmatpush1.msra.mxu0 0.0
        %731 = vmatprep.subr.mxu0 0.0
        %732 = vmatpush1.msra.mxu0 0.0
        %733 = vmatprep.subr.mxu0 0.0
        %734 = vmatpush1.msra.mxu0 0.0
        %735 = vmatprep.subr.mxu0 0.0
        %736 = vmatpush1.msra.mxu0 0.0
        %737 = vmatprep.subr.mxu0 0.0
        %738 = vmatpush1.msra.mxu0 0.0
        %739 = vmatprep.subr.mxu0 0.0
        %740 = vmatpush1.msra.mxu0 0.0
        %741 = vmatprep.subr.mxu0 0.0
        %742 = vmatpush1.msra.mxu0 0.0
        %743 = vmatprep.subr.mxu0 0.0
        %744 = vmatpush1.msra.mxu0 0.0
        %745 = vmatprep.subr.mxu0 0.0
        %746 = vmatpush1.msra.mxu0 0.0
        %747 = vmatprep.subr.mxu0 0.0
        %748 = vmatpush1.msra.mxu0 0.0
        %749 = vmatprep.subr.mxu0 0.0
        %750 = vmatpush1.msra.mxu0 0.0
        %751 = vmatprep.subr.mxu0 0.0
        %752 = vmatpush1.msra.mxu0 0.0
        %753 = vmatprep.subr.mxu0 0.0
        %754 = vmatpush1.msra.mxu0 0.0
        %755 = vmatprep.subr.mxu0 0.0
        %756 = vmatpush1.msra.mxu0 0.0
        %757 = vmatprep.subr.mxu0 0.0
        %758 = vmatpush1.msra.mxu0 0.0
        %759 = vmatprep.subr.mxu0 0.0
        %760 = vmatpush1.msra.mxu0 0.0
        %761 = vmatprep.mubr.f32.mxu0 0.0
        %762 = vmatmul.mubr.f32.gmra.mrb[0].mxu0 %v692
        %v763 = vpop.f32.mrb[0].mxu0
        %v764 = vadd.f32 %v689, %v763
        %v765 = vpop.f32.mrb[0].mxu0
        %766 = vmatprep.mubr.f32.mxu0 0.0
        %767 = vmatmul.mubr.f32.gmra.mrb[0].mxu0 %v695
        %v768 = vpop.f32.mrb[0].mxu0
        %v769 = vadd.f32 %v689, %v768
        %v770 = vpop.f32.mrb[0].mxu0
        %771 = vdwg.mxu0
        %v772 = vadd.f32 %v560, %v764
        %v773 = vadd.f32 %v565, %v769
        %v774 = vsel %vm690, %v772, -inf
        %775 = vmax.xlane.f32.xlu0 %v774
        %v776 = vpop.xlane.xlu0 %775
        %v777 = vsel %vm690, %v773, -inf
        %778 = vmax.xlane.f32.xlu0 %v777
        %v779 = vpop.xlane.xlu0 %778
        %v780 = vsub.f32 %v772, %v776
        %v781 = vsub.f32 %v773, %v779
        %v782 = vmul.f32 %v780, 1.442695
        %v783 = vpow.pop %v782
        %v784 = vmul.f32 %v781, 1.442695
        %v785 = vpow.pop %v784
        %v786 = vsel %vm690, %v783, 0.0
        %787 = vadd.xlane.f32.xlu0 %v786
        %v788 = vpop.xlane.xlu0 %787
        %v789 = vsel %vm690, %v785, 0.0
        %790 = vadd.xlane.f32.xlu0 %v789
        %v791 = vpop.xlane.xlu0 %790
        %v792 = vrcp.pop %v788
        %v793 = vmul.f32 %v783, %v792
        %v794 = vrcp.pop %v791
        %v795 = vmul.f32 %v785, %v794
        %v797 = vsel %vm690, %v793, 0
        %v800 = vsel %vm690, %v795, 0
        %802 = vmatprep.subr.mxu0 0.0
        %803 = vmatpush1.msra.mxu0 %v459
        %804 = vmatprep.subr.mxu0 0.0
        %805 = vmatpush1.msra.mxu0 %v465
        %806 = vmatprep.subr.mxu0 0.0
        %807 = vmatpush1.msra.mxu0 0.0
        %808 = vmatprep.subr.mxu0 0.0
        %809 = vmatpush1.msra.mxu0 0.0
        %810 = vmatprep.subr.mxu0 0.0
        %811 = vmatpush1.msra.mxu0 0.0
        %812 = vmatprep.subr.mxu0 0.0
        %813 = vmatpush1.msra.mxu0 0.0
        %814 = vmatprep.subr.mxu0 0.0
        %815 = vmatpush1.msra.mxu0 0.0
        %816 = vmatprep.subr.mxu0 0.0
        %817 = vmatpush1.msra.mxu0 0.0
        %818 = vmatprep.subr.mxu0 0.0
        %819 = vmatpush1.msra.mxu0 0.0
        %820 = vmatprep.subr.mxu0 0.0
        %821 = vmatpush1.msra.mxu0 0.0
        %822 = vmatprep.subr.mxu0 0.0
        %823 = vmatpush1.msra.mxu0 0.0
        %824 = vmatprep.subr.mxu0 0.0
        %825 = vmatpush1.msra.mxu0 0.0
        %826 = vmatprep.subr.mxu0 0.0
        %827 = vmatpush1.msra.mxu0 0.0
        %828 = vmatprep.subr.mxu0 0.0
        %829 = vmatpush1.msra.mxu0 0.0
        %830 = vmatprep.subr.mxu0 0.0
        %831 = vmatpush1.msra.mxu0 0.0
        %832 = vmatprep.subr.mxu0 0.0
        %833 = vmatpush1.msra.mxu0 0.0
        %834 = vmatprep.subr.mxu0 0.0
        %835 = vmatpush1.msra.mxu0 0.0
        %836 = vmatprep.subr.mxu0 0.0
        %837 = vmatpush1.msra.mxu0 0.0
        %838 = vmatprep.subr.mxu0 0.0
        %839 = vmatpush1.msra.mxu0 0.0
        %840 = vmatprep.subr.mxu0 0.0
        %841 = vmatpush1.msra.mxu0 0.0
        %842 = vmatprep.subr.mxu0 0.0
        %843 = vmatpush1.msra.mxu0 0.0
        %844 = vmatprep.subr.mxu0 0.0
        %845 = vmatpush1.msra.mxu0 0.0
        %846 = vmatprep.subr.mxu0 0.0
        %847 = vmatpush1.msra.mxu0 0.0
        %848 = vmatprep.subr.mxu0 0.0
        %849 = vmatpush1.msra.mxu0 0.0
        %850 = vmatprep.subr.mxu0 0.0
        %851 = vmatpush1.msra.mxu0 0.0
        %852 = vmatprep.subr.mxu0 0.0
        %853 = vmatpush1.msra.mxu0 0.0
        %854 = vmatprep.subr.mxu0 0.0
        %855 = vmatpush1.msra.mxu0 0.0
        %856 = vmatprep.subr.mxu0 0.0
        %857 = vmatpush1.msra.mxu0 0.0
        %858 = vmatprep.subr.mxu0 0.0
        %859 = vmatpush1.msra.mxu0 0.0
        %860 = vmatprep.subr.mxu0 0.0
        %861 = vmatpush1.msra.mxu0 0.0
        %862 = vmatprep.subr.mxu0 0.0
        %863 = vmatpush1.msra.mxu0 0.0
        %864 = vmatprep.subr.mxu0 0.0
        %865 = vmatpush1.msra.mxu0 0.0
        %866 = vmatprep.mubr.f32.mxu0 0.0
        %867 = vmatmul.mubr.f32.gmra.mrb[0].mxu0 %v797
        %v868 = vpop.f32.mrb[0].mxu0
        %v869 = vadd.f32 0.0, %v868
        %v870 = vpop.f32.mrb[0].mxu0
        %871 = vmatprep.mubr.f32.mxu0 0.0
        %872 = vmatmul.mubr.f32.gmra.mrb[0].mxu0 %v800
        %v873 = vpop.f32.mrb[0].mxu0
        %v874 = vadd.f32 0.0, %v873
        %v875 = vpop.f32.mrb[0].mxu0
        %876 = vdwg.mxu0
        %877 = vrot.lane.b32.xlu0 %v474, 120
        %v878 = vpop.permute.xlu0 %877
        %879 = vrot.lane.b32.xlu0 %v475, 120
        %v880 = vpop.permute.xlu0 %879
        %881 = vrot.lane.b32.xlu0 %v457, 56
        %v882 = vpop.permute.xlu0 %881
        %883 = vrot.lane.b32.xlu0 %v463, 56
        %v884 = vpop.permute.xlu0 %883
        %v885 = vsel %vm482, %v878, 0
        %v887 = vsel %vm482, %v880, 0
        %v889 = vsel %vm482, %v882, 0
        %v891 = vsel %vm482, %v884, 0
        %893 = vmatprep.subr.mxu0 0.0
        %894 = vmatpush1.xpose.msra.mxu0 %v889
        %895 = vmatprep.subr.mxu0 0.0
        %896 = vmatpush1.xpose.msra.mxu0 %v891
        %897 = vmatprep.subr.mxu0 0.0
        %898 = vmatpush1.xpose.msra.mxu0 0.0
        %899 = vmatprep.subr.mxu0 0.0
        %900 = vmatpush1.xpose.msra.mxu0 0.0
        %901 = vmatprep.subr.mxu0 0.0
        %902 = vmatpush1.xpose.msra.mxu0 0.0
        %903 = vmatprep.subr.mxu0 0.0
        %904 = vmatpush1.xpose.msra.mxu0 0.0
        %905 = vmatprep.subr.mxu0 0.0
        %906 = vmatpush1.xpose.msra.mxu0 0.0
        %907 = vmatprep.subr.mxu0 0.0
        %908 = vmatpush1.xpose.msra.mxu0 0.0
        %909 = vmatprep.subr.mxu0 0.0
        %910 = vmatpush1.xpose.msra.mxu0 0.0
        %911 = vmatprep.subr.mxu0 0.0
        %912 = vmatpush1.xpose.msra.mxu0 0.0
        %913 = vmatprep.subr.mxu0 0.0
        %914 = vmatpush1.xpose.msra.mxu0 0.0
        %915 = vmatprep.subr.mxu0 0.0
        %916 = vmatpush1.xpose.msra.mxu0 0.0
        %917 = vmatprep.subr.mxu0 0.0
        %918 = vmatpush1.xpose.msra.mxu0 0.0
        %919 = vmatprep.subr.mxu0 0.0
        %920 = vmatpush1.xpose.msra.mxu0 0.0
        %921 = vmatprep.subr.mxu0 0.0
        %922 = vmatpush1.xpose.msra.mxu0 0.0
        %923 = vmatprep.subr.mxu0 0.0
        %924 = vmatpush1.xpose.msra.mxu0 0.0
        %925 = vmatprep.subr.mxu0 0.0
        %926 = vmatpush1.xpose.msra.mxu0 0.0
        %927 = vmatprep.subr.mxu0 0.0
        %928 = vmatpush1.xpose.msra.mxu0 0.0
        %929 = vmatprep.subr.mxu0 0.0
        %930 = vmatpush1.xpose.msra.mxu0 0.0
        %931 = vmatprep.subr.mxu0 0.0
        %932 = vmatpush1.xpose.msra.mxu0 0.0
        %933 = vmatprep.subr.mxu0 0.0
        %934 = vmatpush1.xpose.msra.mxu0 0.0
        %935 = vmatprep.subr.mxu0 0.0
        %936 = vmatpush1.xpose.msra.mxu0 0.0
        %937 = vmatprep.subr.mxu0 0.0
        %938 = vmatpush1.xpose.msra.mxu0 0.0
        %939 = vmatprep.subr.mxu0 0.0
        %940 = vmatpush1.xpose.msra.mxu0 0.0
        %941 = vmatprep.subr.mxu0 0.0
        %942 = vmatpush1.xpose.msra.mxu0 0.0
        %943 = vmatprep.subr.mxu0 0.0
        %944 = vmatpush1.xpose.msra.mxu0 0.0
        %945 = vmatprep.subr.mxu0 0.0
        %946 = vmatpush1.xpose.msra.mxu0 0.0
        %947 = vmatprep.subr.mxu0 0.0
        %948 = vmatpush1.xpose.msra.mxu0 0.0
        %949 = vmatprep.subr.mxu0 0.0
        %950 = vmatpush1.xpose.msra.mxu0 0.0
        %951 = vmatprep.subr.mxu0 0.0
        %952 = vmatpush1.xpose.msra.mxu0 0.0
        %953 = vmatprep.subr.mxu0 0.0
        %954 = vmatpush1.xpose.msra.mxu0 0.0
        %955 = vmatprep.subr.mxu0 0.0
        %956 = vmatpush1.xpose.msra.mxu0 0.0
        %957 = vmatprep.mubr.f32.mxu0 0.0
        %958 = vmatmul.mubr.f32.gmra.mrb[0].mxu0 %v885
        %v959 = vpop.f32.mrb[0].mxu0
        %v960 = vadd.f32 0.0, %v959
        %v961 = vpop.f32.mrb[0].mxu0
        %962 = vmatprep.mubr.f32.mxu0 0.0
        %963 = vmatmul.mubr.f32.gmra.mrb[0].mxu0 %v887
        %v964 = vpop.f32.mrb[0].mxu0
        %v965 = vadd.f32 0.0, %v964
        %v966 = vpop.f32.mrb[0].mxu0
        %967 = vdwg.mxu0
        %s968 = sld [smem:[#allocation8 + $0x80]]
        %v969 = vstv %s968
        %v970 = vsel %vm568, %v969, 0.0
        %v971 = vsel %vm569, %v969, 0.0
        %v972 = vadd.f32 %v970, 0.0
        %v973 = vadd.f32 %v971, 0.0
        %s974 = sld [smem:[#allocation8 + $0x81]]
        %v975 = vstv %s974
        %v976 = vsel %vm576, %v975, 0.0
        %v977 = vsel %vm577, %v975, 0.0
        %v978 = vadd.f32 %v972, %v976
        %v979 = vadd.f32 %v973, %v977
        %s980 = sld [smem:[#allocation8 + $0x82]]
        %v981 = vstv %s980
        %v982 = vsel %vm584, %v981, 0.0
        %v983 = vsel %vm585, %v981, 0.0
        %v984 = vadd.f32 %v978, %v982
        %v985 = vadd.f32 %v979, %v983
        %s986 = sld [smem:[#allocation8 + $0x83]]
        %v987 = vstv %s986
        %v988 = vsel %vm592, %v987, 0.0
        %v989 = vsel %vm593, %v987, 0.0
        %v990 = vadd.f32 %v984, %v988
        %v991 = vadd.f32 %v985, %v989
        %s992 = sld [smem:[#allocation8 + $0x84]]
        %v993 = vstv %s992
        %v994 = vsel %vm600, %v993, 0.0
        %v995 = vsel %vm601, %v993, 0.0
        %v996 = vadd.f32 %v990, %v994
        %v997 = vadd.f32 %v991, %v995
        %s998 = sld [smem:[#allocation8 + $0x85]]
        %v999 = vstv %s998
        %v1000 = vsel %vm608, %v999, 0.0
        %v1001 = vsel %vm609, %v999, 0.0
        %v1002 = vadd.f32 %v996, %v1000
        %v1003 = vadd.f32 %v997, %v1001
        %s1004 = sld [smem:[#allocation8 + $0x86]]
        %v1005 = vstv %s1004
        %v1006 = vsel %vm616, %v1005, 0.0
        %v1007 = vsel %vm617, %v1005, 0.0
        %v1008 = vadd.f32 %v1002, %v1006
        %v1009 = vadd.f32 %v1003, %v1007
        %s1010 = sld [smem:[#allocation8 + $0x87]]
        %v1011 = vstv %s1010
        %v1012 = vsel %vm624, %v1011, 0.0
        %v1013 = vsel %vm625, %v1011, 0.0
        %v1014 = vadd.f32 %v1008, %v1012
        %v1015 = vadd.f32 %v1009, %v1013
        %s1016 = sld [smem:[#allocation8 + $0x88]]
        %v1017 = vstv %s1016
        %v1018 = vsel %vm632, %v1017, 0.0
        %v1019 = vsel %vm633, %v1017, 0.0
        %v1020 = vadd.f32 %v1014, %v1018
        %v1021 = vadd.f32 %v1015, %v1019
        %s1022 = sld [smem:[#allocation8 + $0x89]]
        %v1023 = vstv %s1022
        %v1024 = vsel %vm640, %v1023, 0.0
        %v1025 = vsel %vm641, %v1023, 0.0
        %v1026 = vadd.f32 %v1020, %v1024
        %v1027 = vadd.f32 %v1021, %v1025
        %s1028 = sld [smem:[#allocation8 + $0x8a]]
        %v1029 = vstv %s1028
        %v1030 = vsel %vm648, %v1029, 0.0
        %v1031 = vsel %vm649, %v1029, 0.0
        %v1032 = vadd.f32 %v1026, %v1030
        %v1033 = vadd.f32 %v1027, %v1031
        %s1034 = sld [smem:[#allocation8 + $0x8b]]
        %v1035 = vstv %s1034
        %v1036 = vsel %vm656, %v1035, 0.0
        %v1037 = vsel %vm657, %v1035, 0.0
        %v1038 = vadd.f32 %v1032, %v1036
        %v1039 = vadd.f32 %v1033, %v1037
        %s1040 = sld [smem:[#allocation8 + $0x8c]]
        %v1041 = vstv %s1040
        %v1042 = vsel %vm664, %v1041, 0.0
        %v1043 = vsel %vm665, %v1041, 0.0
        %v1044 = vadd.f32 %v1038, %v1042
        %v1045 = vadd.f32 %v1039, %v1043
        %s1046 = sld [smem:[#allocation8 + $0x8d]]
        %v1047 = vstv %s1046
        %v1048 = vsel %vm672, %v1047, 0.0
        %v1049 = vsel %vm673, %v1047, 0.0
        %v1050 = vadd.f32 %v1044, %v1048
        %v1051 = vadd.f32 %v1045, %v1049
        %s1052 = sld [smem:[#allocation8 + $0x8e]]
        %v1053 = vstv %s1052
        %v1054 = vsel %vm680, %v1053, 0.0
        %v1055 = vsel %vm681, %v1053, 0.0
        %v1056 = vadd.f32 %v1050, %v1054
        %v1057 = vadd.f32 %v1051, %v1055
        %s1058 = sld [smem:[#allocation9 + $0x1]]
        %v1059 = vstv %s1058
        %v1061 = vsel %vm690, %v1056, 0
        %v1064 = vsel %vm690, %v1057, 0
        %1066 = vmatprep.subr.mxu0 0.0
        %1067 = vmatpush1.msra.mxu0 %v960
        %1068 = vmatprep.subr.mxu0 0.0
        %1069 = vmatpush1.msra.mxu0 %v965
        %1070 = vmatprep.subr.mxu0 0.0
        %1071 = vmatpush1.msra.mxu0 0.0
        %1072 = vmatprep.subr.mxu0 0.0
        %1073 = vmatpush1.msra.mxu0 0.0
        %1074 = vmatprep.subr.mxu0 0.0
        %1075 = vmatpush1.msra.mxu0 0.0
        %1076 = vmatprep.subr.mxu0 0.0
        %1077 = vmatpush1.msra.mxu0 0.0
        %1078 = vmatprep.subr.mxu0 0.0
        %1079 = vmatpush1.msra.mxu0 0.0
        %1080 = vmatprep.subr.mxu0 0.0
        %1081 = vmatpush1.msra.mxu0 0.0
        %1082 = vmatprep.subr.mxu0 0.0
        %1083 = vmatpush1.msra.mxu0 0.0
        %1084 = vmatprep.subr.mxu0 0.0
        %1085 = vmatpush1.msra.mxu0 0.0
        %1086 = vmatprep.subr.mxu0 0.0
        %1087 = vmatpush1.msra.mxu0 0.0
        %1088 = vmatprep.subr.mxu0 0.0
        %1089 = vmatpush1.msra.mxu0 0.0
        %1090 = vmatprep.subr.mxu0 0.0
        %1091 = vmatpush1.msra.mxu0 0.0
        %1092 = vmatprep.subr.mxu0 0.0
        %1093 = vmatpush1.msra.mxu0 0.0
        %1094 = vmatprep.subr.mxu0 0.0
        %1095 = vmatpush1.msra.mxu0 0.0
        %1096 = vmatprep.subr.mxu0 0.0
        %1097 = vmatpush1.msra.mxu0 0.0
        %1098 = vmatprep.subr.mxu0 0.0
        %1099 = vmatpush1.msra.mxu0 0.0
        %1100 = vmatprep.subr.mxu0 0.0
        %1101 = vmatpush1.msra.mxu0 0.0
        %1102 = vmatprep.subr.mxu0 0.0
        %1103 = vmatpush1.msra.mxu0 0.0
        %1104 = vmatprep.subr.mxu0 0.0
        %1105 = vmatpush1.msra.mxu0 0.0
        %1106 = vmatprep.subr.mxu0 0.0
        %1107 = vmatpush1.msra.mxu0 0.0
        %1108 = vmatprep.subr.mxu0 0.0
        %1109 = vmatpush1.msra.mxu0 0.0
        %1110 = vmatprep.subr.mxu0 0.0
        %1111 = vmatpush1.msra.mxu0 0.0
        %1112 = vmatprep.subr.mxu0 0.0
        %1113 = vmatpush1.msra.mxu0 0.0
        %1114 = vmatprep.subr.mxu0 0.0
        %1115 = vmatpush1.msra.mxu0 0.0
        %1116 = vmatprep.subr.mxu0 0.0
        %1117 = vmatpush1.msra.mxu0 0.0
        %1118 = vmatprep.subr.mxu0 0.0
        %1119 = vmatpush1.msra.mxu0 0.0
        %1120 = vmatprep.subr.mxu0 0.0
        %1121 = vmatpush1.msra.mxu0 0.0
        %1122 = vmatprep.subr.mxu0 0.0
        %1123 = vmatpush1.msra.mxu0 0.0
        %1124 = vmatprep.subr.mxu0 0.0
        %1125 = vmatpush1.msra.mxu0 0.0
        %1126 = vmatprep.subr.mxu0 0.0
        %1127 = vmatpush1.msra.mxu0 0.0
        %1128 = vmatprep.subr.mxu0 0.0
        %1129 = vmatpush1.msra.mxu0 0.0
        %1130 = vmatprep.mubr.f32.mxu0 0.0
        %1131 = vmatmul.mubr.f32.gmra.mrb[0].mxu0 %v1061
        %v1132 = vpop.f32.mrb[0].mxu0
        %v1133 = vadd.f32 %v1059, %v1132
        %v1134 = vpop.f32.mrb[0].mxu0
        %1135 = vmatprep.mubr.f32.mxu0 0.0
        %1136 = vmatmul.mubr.f32.gmra.mrb[0].mxu0 %v1064
        %v1137 = vpop.f32.mrb[0].mxu0
        %v1138 = vadd.f32 %v1059, %v1137
        %v1139 = vpop.f32.mrb[0].mxu0
        %1140 = vdwg.mxu0
        %v1141 = vadd.f32 %v960, %v1133
        %v1142 = vadd.f32 %v965, %v1138
        %v1143 = vsel %vm690, %v1141, -inf
        %1144 = vmax.xlane.f32.xlu0 %v1143
        %v1145 = vpop.xlane.xlu0 %1144
        %v1146 = vsel %vm690, %v1142, -inf
        %1147 = vmax.xlane.f32.xlu0 %v1146
        %v1148 = vpop.xlane.xlu0 %1147
        %v1149 = vsub.f32 %v1141, %v1145
        %v1150 = vsub.f32 %v1142, %v1148
        %v1151 = vmul.f32 %v1149, 1.442695
        %v1152 = vpow.pop %v1151
        %v1153 = vmul.f32 %v1150, 1.442695
        %v1154 = vpow.pop %v1153
        %v1155 = vsel %vm690, %v1152, 0.0
        %1156 = vadd.xlane.f32.xlu0 %v1155
        %v1157 = vpop.xlane.xlu0 %1156
        %v1158 = vsel %vm690, %v1154, 0.0
        %1159 = vadd.xlane.f32.xlu0 %v1158
        %v1160 = vpop.xlane.xlu0 %1159
        %v1161 = vrcp.pop %v1157
        %v1162 = vmul.f32 %v1152, %v1161
        %v1163 = vrcp.pop %v1160
        %v1164 = vmul.f32 %v1154, %v1163
        %1167 = vrot.lane.b32.xlu0 %v459, 120
        %v1168 = vpop.permute.xlu0 %1167
        %1169 = vrot.lane.b32.xlu0 %v465, 120
        %v1170 = vpop.permute.xlu0 %1169
        %v1174 = vsel %vm690, %v1162, 0
        %v1177 = vsel %vm690, %v1164, 0
        %1179 = vmatprep.subr.mxu0 0.0
        %1180 = vmatpush1.msra.mxu0 %v1168
        %1181 = vmatprep.subr.mxu0 0.0
        %1182 = vmatpush1.msra.mxu0 %v1170
        %1183 = vmatprep.subr.mxu0 0.0
        %1184 = vmatpush1.msra.mxu0 0.0
        %1185 = vmatprep.subr.mxu0 0.0
        %1186 = vmatpush1.msra.mxu0 0.0
        %1187 = vmatprep.subr.mxu0 0.0
        %1188 = vmatpush1.msra.mxu0 0.0
        %1189 = vmatprep.subr.mxu0 0.0
        %1190 = vmatpush1.msra.mxu0 0.0
        %1191 = vmatprep.subr.mxu0 0.0
        %1192 = vmatpush1.msra.mxu0 0.0
        %1193 = vmatprep.subr.mxu0 0.0
        %1194 = vmatpush1.msra.mxu0 0.0
        %1195 = vmatprep.subr.mxu0 0.0
        %1196 = vmatpush1.msra.mxu0 0.0
        %1197 = vmatprep.subr.mxu0 0.0
        %1198 = vmatpush1.msra.mxu0 0.0
        %1199 = vmatprep.subr.mxu0 0.0
        %1200 = vmatpush1.msra.mxu0 0.0
        %1201 = vmatprep.subr.mxu0 0.0
        %1202 = vmatpush1.msra.mxu0 0.0
        %1203 = vmatprep.subr.mxu0 0.0
        %1204 = vmatpush1.msra.mxu0 0.0
        %1205 = vmatprep.subr.mxu0 0.0
        %1206 = vmatpush1.msra.mxu0 0.0
        %1207 = vmatprep.subr.mxu0 0.0
        %1208 = vmatpush1.msra.mxu0 0.0
        %1209 = vmatprep.subr.mxu0 0.0
        %1210 = vmatpush1.msra.mxu0 0.0
        %1211 = vmatprep.subr.mxu0 0.0
        %1212 = vmatpush1.msra.mxu0 0.0
        %1213 = vmatprep.subr.mxu0 0.0
        %1214 = vmatpush1.msra.mxu0 0.0
        %1215 = vmatprep.subr.mxu0 0.0
        %1216 = vmatpush1.msra.mxu0 0.0
        %1217 = vmatprep.subr.mxu0 0.0
        %1218 = vmatpush1.msra.mxu0 0.0
        %1219 = vmatprep.subr.mxu0 0.0
        %1220 = vmatpush1.msra.mxu0 0.0
        %1221 = vmatprep.subr.mxu0 0.0
        %1222 = vmatpush1.msra.mxu0 0.0
        %1223 = vmatprep.subr.mxu0 0.0
        %1224 = vmatpush1.msra.mxu0 0.0
        %1225 = vmatprep.subr.mxu0 0.0
        %1226 = vmatpush1.msra.mxu0 0.0
        %1227 = vmatprep.subr.mxu0 0.0
        %1228 = vmatpush1.msra.mxu0 0.0
        %1229 = vmatprep.subr.mxu0 0.0
        %1230 = vmatpush1.msra.mxu0 0.0
        %1231 = vmatprep.subr.mxu0 0.0
        %1232 = vmatpush1.msra.mxu0 0.0
        %1233 = vmatprep.subr.mxu0 0.0
        %1234 = vmatpush1.msra.mxu0 0.0
        %1235 = vmatprep.subr.mxu0 0.0
        %1236 = vmatpush1.msra.mxu0 0.0
        %1237 = vmatprep.subr.mxu0 0.0
        %1238 = vmatpush1.msra.mxu0 0.0
        %1239 = vmatprep.subr.mxu0 0.0
        %1240 = vmatpush1.msra.mxu0 0.0
        %1241 = vmatprep.subr.mxu0 0.0
        %1242 = vmatpush1.msra.mxu0 0.0
        %1243 = vmatprep.mubr.f32.mxu0 0.0
        %1244 = vmatmul.mubr.f32.gmra.mrb[0].mxu0 %v1174
        %v1245 = vpop.f32.mrb[0].mxu0
        %v1246 = vadd.f32 0.0, %v1245
        %v1247 = vpop.f32.mrb[0].mxu0
        %1248 = vmatprep.mubr.f32.mxu0 0.0
        %1249 = vmatmul.mubr.f32.gmra.mrb[0].mxu0 %v1177
        %v1250 = vpop.f32.mrb[0].mxu0
        %v1251 = vadd.f32 0.0, %v1250
        %v1252 = vpop.f32.mrb[0].mxu0
        %1253 = vdwg.mxu0
        %1254 = vrot.lane.b32.xlu0 %v474, 112
        %v1255 = vpop.permute.xlu0 %1254
        %1256 = vrot.lane.b32.xlu0 %v475, 112
        %v1257 = vpop.permute.xlu0 %1256
        %1258 = vrot.lane.b32.xlu0 %v457, 48
        %v1259 = vpop.permute.xlu0 %1258
        %1260 = vrot.lane.b32.xlu0 %v463, 48
        %v1261 = vpop.permute.xlu0 %1260
        %v1262 = vsel %vm482, %v1255, 0
        %v1264 = vsel %vm482, %v1257, 0
        %v1266 = vsel %vm482, %v1259, 0
        %v1268 = vsel %vm482, %v1261, 0
        %1270 = vmatprep.subr.mxu0 0.0
        %1271 = vmatpush1.xpose.msra.mxu0 %v1266
        %1272 = vmatprep.subr.mxu0 0.0
        %1273 = vmatpush1.xpose.msra.mxu0 %v1268
        %1274 = vmatprep.subr.mxu0 0.0
        %1275 = vmatpush1.xpose.msra.mxu0 0.0
        %1276 = vmatprep.subr.mxu0 0.0
        %1277 = vmatpush1.xpose.msra.mxu0 0.0
        %1278 = vmatprep.subr.mxu0 0.0
        %1279 = vmatpush1.xpose.msra.mxu0 0.0
        %1280 = vmatprep.subr.mxu0 0.0
        %1281 = vmatpush1.xpose.msra.mxu0 0.0
        %1282 = vmatprep.subr.mxu0 0.0
        %1283 = vmatpush1.xpose.msra.mxu0 0.0
        %1284 = vmatprep.subr.mxu0 0.0
        %1285 = vmatpush1.xpose.msra.mxu0 0.0
        %1286 = vmatprep.subr.mxu0 0.0
        %1287 = vmatpush1.xpose.msra.mxu0 0.0
        %1288 = vmatprep.subr.mxu0 0.0
        %1289 = vmatpush1.xpose.msra.mxu0 0.0
        %1290 = vmatprep.subr.mxu0 0.0
        %1291 = vmatpush1.xpose.msra.mxu0 0.0
        %1292 = vmatprep.subr.mxu0 0.0
        %1293 = vmatpush1.xpose.msra.mxu0 0.0
        %1294 = vmatprep.subr.mxu0 0.0
        %1295 = vmatpush1.xpose.msra.mxu0 0.0
        %1296 = vmatprep.subr.mxu0 0.0
        %1297 = vmatpush1.xpose.msra.mxu0 0.0
        %1298 = vmatprep.subr.mxu0 0.0
        %1299 = vmatpush1.xpose.msra.mxu0 0.0
        %1300 = vmatprep.subr.mxu0 0.0
        %1301 = vmatpush1.xpose.msra.mxu0 0.0
        %1302 = vmatprep.subr.mxu0 0.0
        %1303 = vmatpush1.xpose.msra.mxu0 0.0
        %1304 = vmatprep.subr.mxu0 0.0
        %1305 = vmatpush1.xpose.msra.mxu0 0.0
        %1306 = vmatprep.subr.mxu0 0.0
        %1307 = vmatpush1.xpose.msra.mxu0 0.0
        %1308 = vmatprep.subr.mxu0 0.0
        %1309 = vmatpush1.xpose.msra.mxu0 0.0
        %1310 = vmatprep.subr.mxu0 0.0
        %1311 = vmatpush1.xpose.msra.mxu0 0.0
        %1312 = vmatprep.subr.mxu0 0.0
        %1313 = vmatpush1.xpose.msra.mxu0 0.0
        %1314 = vmatprep.subr.mxu0 0.0
        %1315 = vmatpush1.xpose.msra.mxu0 0.0
        %1316 = vmatprep.subr.mxu0 0.0
        %1317 = vmatpush1.xpose.msra.mxu0 0.0
        %1318 = vmatprep.subr.mxu0 0.0
        %1319 = vmatpush1.xpose.msra.mxu0 0.0
        %1320 = vmatprep.subr.mxu0 0.0
        %1321 = vmatpush1.xpose.msra.mxu0 0.0
        %1322 = vmatprep.subr.mxu0 0.0
        %1323 = vmatpush1.xpose.msra.mxu0 0.0
        %1324 = vmatprep.subr.mxu0 0.0
        %1325 = vmatpush1.xpose.msra.mxu0 0.0
        %1326 = vmatprep.subr.mxu0 0.0
        %1327 = vmatpush1.xpose.msra.mxu0 0.0
        %1328 = vmatprep.subr.mxu0 0.0
        %1329 = vmatpush1.xpose.msra.mxu0 0.0
        %1330 = vmatprep.subr.mxu0 0.0
        %1331 = vmatpush1.xpose.msra.mxu0 0.0
        %1332 = vmatprep.subr.mxu0 0.0
        %1333 = vmatpush1.xpose.msra.mxu0 0.0
        %1334 = vmatprep.mubr.f32.mxu0 0.0
        %1335 = vmatmul.mubr.f32.gmra.mrb[0].mxu0 %v1262
        %v1336 = vpop.f32.mrb[0].mxu0
        %v1337 = vadd.f32 0.0, %v1336
        %v1338 = vpop.f32.mrb[0].mxu0
        %1339 = vmatprep.mubr.f32.mxu0 0.0
        %1340 = vmatmul.mubr.f32.gmra.mrb[0].mxu0 %v1264
        %v1341 = vpop.f32.mrb[0].mxu0
        %v1342 = vadd.f32 0.0, %v1341
        %v1343 = vpop.f32.mrb[0].mxu0
        %1344 = vdwg.mxu0
        %s1345 = sld [smem:[#allocation8 + $0x100]]
        %v1346 = vstv %s1345
        %v1347 = vsel %vm568, %v1346, 0.0
        %v1348 = vsel %vm569, %v1346, 0.0
        %v1349 = vadd.f32 %v1347, 0.0
        %v1350 = vadd.f32 %v1348, 0.0
        %s1351 = sld [smem:[#allocation8 + $0x101]]
        %v1352 = vstv %s1351
        %v1353 = vsel %vm576, %v1352, 0.0
        %v1354 = vsel %vm577, %v1352, 0.0
        %v1355 = vadd.f32 %v1349, %v1353
        %v1356 = vadd.f32 %v1350, %v1354
        %s1357 = sld [smem:[#allocation8 + $0x102]]
        %v1358 = vstv %s1357
        %v1359 = vsel %vm584, %v1358, 0.0
        %v1360 = vsel %vm585, %v1358, 0.0
        %v1361 = vadd.f32 %v1355, %v1359
        %v1362 = vadd.f32 %v1356, %v1360
        %s1363 = sld [smem:[#allocation8 + $0x103]]
        %v1364 = vstv %s1363
        %v1365 = vsel %vm592, %v1364, 0.0
        %v1366 = vsel %vm593, %v1364, 0.0
        %v1367 = vadd.f32 %v1361, %v1365
        %v1368 = vadd.f32 %v1362, %v1366
        %s1369 = sld [smem:[#allocation8 + $0x104]]
        %v1370 = vstv %s1369
        %v1371 = vsel %vm600, %v1370, 0.0
        %v1372 = vsel %vm601, %v1370, 0.0
        %v1373 = vadd.f32 %v1367, %v1371
        %v1374 = vadd.f32 %v1368, %v1372
        %s1375 = sld [smem:[#allocation8 + $0x105]]
        %v1376 = vstv %s1375
        %v1377 = vsel %vm608, %v1376, 0.0
        %v1378 = vsel %vm609, %v1376, 0.0
        %v1379 = vadd.f32 %v1373, %v1377
        %v1380 = vadd.f32 %v1374, %v1378
        %s1381 = sld [smem:[#allocation8 + $0x106]]
        %v1382 = vstv %s1381
        %v1383 = vsel %vm616, %v1382, 0.0
        %v1384 = vsel %vm617, %v1382, 0.0
        %v1385 = vadd.f32 %v1379, %v1383
        %v1386 = vadd.f32 %v1380, %v1384
        %s1387 = sld [smem:[#allocation8 + $0x107]]
        %v1388 = vstv %s1387
        %v1389 = vsel %vm624, %v1388, 0.0
        %v1390 = vsel %vm625, %v1388, 0.0
        %v1391 = vadd.f32 %v1385, %v1389
        %v1392 = vadd.f32 %v1386, %v1390
        %s1393 = sld [smem:[#allocation8 + $0x108]]
        %v1394 = vstv %s1393
        %v1395 = vsel %vm632, %v1394, 0.0
        %v1396 = vsel %vm633, %v1394, 0.0
        %v1397 = vadd.f32 %v1391, %v1395
        %v1398 = vadd.f32 %v1392, %v1396
        %s1399 = sld [smem:[#allocation8 + $0x109]]
        %v1400 = vstv %s1399
        %v1401 = vsel %vm640, %v1400, 0.0
        %v1402 = vsel %vm641, %v1400, 0.0
        %v1403 = vadd.f32 %v1397, %v1401
        %v1404 = vadd.f32 %v1398, %v1402
        %s1405 = sld [smem:[#allocation8 + $0x10a]]
        %v1406 = vstv %s1405
        %v1407 = vsel %vm648, %v1406, 0.0
        %v1408 = vsel %vm649, %v1406, 0.0
        %v1409 = vadd.f32 %v1403, %v1407
        %v1410 = vadd.f32 %v1404, %v1408
        %s1411 = sld [smem:[#allocation8 + $0x10b]]
        %v1412 = vstv %s1411
        %v1413 = vsel %vm656, %v1412, 0.0
        %v1414 = vsel %vm657, %v1412, 0.0
        %v1415 = vadd.f32 %v1409, %v1413
        %v1416 = vadd.f32 %v1410, %v1414
        %s1417 = sld [smem:[#allocation8 + $0x10c]]
        %v1418 = vstv %s1417
        %v1419 = vsel %vm664, %v1418, 0.0
        %v1420 = vsel %vm665, %v1418, 0.0
        %v1421 = vadd.f32 %v1415, %v1419
        %v1422 = vadd.f32 %v1416, %v1420
        %s1423 = sld [smem:[#allocation8 + $0x10d]]
        %v1424 = vstv %s1423
        %v1425 = vsel %vm672, %v1424, 0.0
        %v1426 = vsel %vm673, %v1424, 0.0
        %v1427 = vadd.f32 %v1421, %v1425
        %v1428 = vadd.f32 %v1422, %v1426
        %s1429 = sld [smem:[#allocation8 + $0x10e]]
        %v1430 = vstv %s1429
        %v1431 = vsel %vm680, %v1430, 0.0
        %v1432 = vsel %vm681, %v1430, 0.0
        %v1433 = vadd.f32 %v1427, %v1431
        %v1434 = vadd.f32 %v1428, %v1432
        %s1435 = sld [smem:[#allocation9 + $0x2]]
        %v1436 = vstv %s1435
        %v1438 = vsel %vm690, %v1433, 0
        %v1441 = vsel %vm690, %v1434, 0
        %1443 = vmatprep.subr.mxu0 0.0
        %1444 = vmatpush1.msra.mxu0 %v1337
        %1445 = vmatprep.subr.mxu0 0.0
        %1446 = vmatpush1.msra.mxu0 %v1342
        %1447 = vmatprep.subr.mxu0 0.0
        %1448 = vmatpush1.msra.mxu0 0.0
        %1449 = vmatprep.subr.mxu0 0.0
        %1450 = vmatpush1.msra.mxu0 0.0
        %1451 = vmatprep.subr.mxu0 0.0
        %1452 = vmatpush1.msra.mxu0 0.0
        %1453 = vmatprep.subr.mxu0 0.0
        %1454 = vmatpush1.msra.mxu0 0.0
        %1455 = vmatprep.subr.mxu0 0.0
        %1456 = vmatpush1.msra.mxu0 0.0
        %1457 = vmatprep.subr.mxu0 0.0
        %1458 = vmatpush1.msra.mxu0 0.0
        %1459 = vmatprep.subr.mxu0 0.0
        %1460 = vmatpush1.msra.mxu0 0.0
        %1461 = vmatprep.subr.mxu0 0.0
        %1462 = vmatpush1.msra.mxu0 0.0
        %1463 = vmatprep.subr.mxu0 0.0
        %1464 = vmatpush1.msra.mxu0 0.0
        %1465 = vmatprep.subr.mxu0 0.0
        %1466 = vmatpush1.msra.mxu0 0.0
        %1467 = vmatprep.subr.mxu0 0.0
        %1468 = vmatpush1.msra.mxu0 0.0
        %1469 = vmatprep.subr.mxu0 0.0
        %1470 = vmatpush1.msra.mxu0 0.0
        %1471 = vmatprep.subr.mxu0 0.0
        %1472 = vmatpush1.msra.mxu0 0.0
        %1473 = vmatprep.subr.mxu0 0.0
        %1474 = vmatpush1.msra.mxu0 0.0
        %1475 = vmatprep.subr.mxu0 0.0
        %1476 = vmatpush1.msra.mxu0 0.0
        %1477 = vmatprep.subr.mxu0 0.0
        %1478 = vmatpush1.msra.mxu0 0.0
        %1479 = vmatprep.subr.mxu0 0.0
        %1480 = vmatpush1.msra.mxu0 0.0
        %1481 = vmatprep.subr.mxu0 0.0
        %1482 = vmatpush1.msra.mxu0 0.0
        %1483 = vmatprep.subr.mxu0 0.0
        %1484 = vmatpush1.msra.mxu0 0.0
        %1485 = vmatprep.subr.mxu0 0.0
        %1486 = vmatpush1.msra.mxu0 0.0
        %1487 = vmatprep.subr.mxu0 0.0
        %1488 = vmatpush1.msra.mxu0 0.0
        %1489 = vmatprep.subr.mxu0 0.0
        %1490 = vmatpush1.msra.mxu0 0.0
        %1491 = vmatprep.subr.mxu0 0.0
        %1492 = vmatpush1.msra.mxu0 0.0
        %1493 = vmatprep.subr.mxu0 0.0
        %1494 = vmatpush1.msra.mxu0 0.0
        %1495 = vmatprep.subr.mxu0 0.0
        %1496 = vmatpush1.msra.mxu0 0.0
        %1497 = vmatprep.subr.mxu0 0.0
        %1498 = vmatpush1.msra.mxu0 0.0
        %1499 = vmatprep.subr.mxu0 0.0
        %1500 = vmatpush1.msra.mxu0 0.0
        %1501 = vmatprep.subr.mxu0 0.0
        %1502 = vmatpush1.msra.mxu0 0.0
        %1503 = vmatprep.subr.mxu0 0.0
        %1504 = vmatpush1.msra.mxu0 0.0
        %1505 = vmatprep.subr.mxu0 0.0
        %1506 = vmatpush1.msra.mxu0 0.0
        %1507 = vmatprep.mubr.f32.mxu0 0.0
        %1508 = vmatmul.mubr.f32.gmra.mrb[0].mxu0 %v1438
        %v1509 = vpop.f32.mrb[0].mxu0
        %v1510 = vadd.f32 %v1436, %v1509
        %v1511 = vpop.f32.mrb[0].mxu0
        %1512 = vmatprep.mubr.f32.mxu0 0.0
        %1513 = vmatmul.mubr.f32.gmra.mrb[0].mxu0 %v1441
        %v1514 = vpop.f32.mrb[0].mxu0
        %v1515 = vadd.f32 %v1436, %v1514
        %v1516 = vpop.f32.mrb[0].mxu0
        %1517 = vdwg.mxu0
        %v1518 = vadd.f32 %v1337, %v1510
        %v1519 = vadd.f32 %v1342, %v1515
        %v1520 = vsel %vm690, %v1518, -inf
        %1521 = vmax.xlane.f32.xlu0 %v1520
        %v1522 = vpop.xlane.xlu0 %1521
        %v1523 = vsel %vm690, %v1519, -inf
        %1524 = vmax.xlane.f32.xlu0 %v1523
        %v1525 = vpop.xlane.xlu0 %1524
        %v1526 = vsub.f32 %v1518, %v1522
        %v1527 = vsub.f32 %v1519, %v1525
        %v1528 = vmul.f32 %v1526, 1.442695
        %v1529 = vpow.pop %v1528
        %v1530 = vmul.f32 %v1527, 1.442695
        %v1531 = vpow.pop %v1530
        %v1532 = vsel %vm690, %v1529, 0.0
        %1533 = vadd.xlane.f32.xlu0 %v1532
        %v1534 = vpop.xlane.xlu0 %1533
        %v1535 = vsel %vm690, %v1531, 0.0
        %1536 = vadd.xlane.f32.xlu0 %v1535
        %v1537 = vpop.xlane.xlu0 %1536
        %v1538 = vrcp.pop %v1534
        %v1539 = vmul.f32 %v1529, %v1538
        %v1540 = vrcp.pop %v1537
        %v1541 = vmul.f32 %v1531, %v1540
        %1542 = vrot.lane.b32.xlu0 %v459, 112
        %v1543 = vpop.permute.xlu0 %1542
        %1544 = vrot.lane.b32.xlu0 %v465, 112
        %v1545 = vpop.permute.xlu0 %1544
        %v1549 = vsel %vm690, %v1539, 0
        %v1552 = vsel %vm690, %v1541, 0
        %1554 = vmatprep.subr.mxu0 0.0
        %1555 = vmatpush1.msra.mxu0 %v1543
        %1556 = vmatprep.subr.mxu0 0.0
        %1557 = vmatpush1.msra.mxu0 %v1545
        %1558 = vmatprep.subr.mxu0 0.0
        %1559 = vmatpush1.msra.mxu0 0.0
        %1560 = vmatprep.subr.mxu0 0.0
        %1561 = vmatpush1.msra.mxu0 0.0
        %1562 = vmatprep.subr.mxu0 0.0
        %1563 = vmatpush1.msra.mxu0 0.0
        %1564 = vmatprep.subr.mxu0 0.0
        %1565 = vmatpush1.msra.mxu0 0.0
        %1566 = vmatprep.subr.mxu0 0.0
        %1567 = vmatpush1.msra.mxu0 0.0
        %1568 = vmatprep.subr.mxu0 0.0
        %1569 = vmatpush1.msra.mxu0 0.0
        %1570 = vmatprep.subr.mxu0 0.0
        %1571 = vmatpush1.msra.mxu0 0.0
        %1572 = vmatprep.subr.mxu0 0.0
        %1573 = vmatpush1.msra.mxu0 0.0
        %1574 = vmatprep.subr.mxu0 0.0
        %1575 = vmatpush1.msra.mxu0 0.0
        %1576 = vmatprep.subr.mxu0 0.0
        %1577 = vmatpush1.msra.mxu0 0.0
        %1578 = vmatprep.subr.mxu0 0.0
        %1579 = vmatpush1.msra.mxu0 0.0
        %1580 = vmatprep.subr.mxu0 0.0
        %1581 = vmatpush1.msra.mxu0 0.0
        %1582 = vmatprep.subr.mxu0 0.0
        %1583 = vmatpush1.msra.mxu0 0.0
        %1584 = vmatprep.subr.mxu0 0.0
        %1585 = vmatpush1.msra.mxu0 0.0
        %1586 = vmatprep.subr.mxu0 0.0
        %1587 = vmatpush1.msra.mxu0 0.0
        %1588 = vmatprep.subr.mxu0 0.0
        %1589 = vmatpush1.msra.mxu0 0.0
        %1590 = vmatprep.subr.mxu0 0.0
        %1591 = vmatpush1.msra.mxu0 0.0
        %1592 = vmatprep.subr.mxu0 0.0
        %1593 = vmatpush1.msra.mxu0 0.0
        %1594 = vmatprep.subr.mxu0 0.0
        %1595 = vmatpush1.msra.mxu0 0.0
        %1596 = vmatprep.subr.mxu0 0.0
        %1597 = vmatpush1.msra.mxu0 0.0
        %1598 = vmatprep.subr.mxu0 0.0
        %1599 = vmatpush1.msra.mxu0 0.0
        %1600 = vmatprep.subr.mxu0 0.0
        %1601 = vmatpush1.msra.mxu0 0.0
        %1602 = vmatprep.subr.mxu0 0.0
        %1603 = vmatpush1.msra.mxu0 0.0
        %1604 = vmatprep.subr.mxu0 0.0
        %1605 = vmatpush1.msra.mxu0 0.0
        %1606 = vmatprep.subr.mxu0 0.0
        %1607 = vmatpush1.msra.mxu0 0.0
        %1608 = vmatprep.subr.mxu0 0.0
        %1609 = vmatpush1.msra.mxu0 0.0
        %1610 = vmatprep.subr.mxu0 0.0
        %1611 = vmatpush1.msra.mxu0 0.0
        %1612 = vmatprep.subr.mxu0 0.0
        %1613 = vmatpush1.msra.mxu0 0.0
        %1614 = vmatprep.subr.mxu0 0.0
        %1615 = vmatpush1.msra.mxu0 0.0
        %1616 = vmatprep.subr.mxu0 0.0
        %1617 = vmatpush1.msra.mxu0 0.0
        %1618 = vmatprep.mubr.f32.mxu0 0.0
        %1619 = vmatmul.mubr.f32.gmra.mrb[0].mxu0 %v1549
        %v1620 = vpop.f32.mrb[0].mxu0
        %v1621 = vadd.f32 0.0, %v1620
        %v1622 = vpop.f32.mrb[0].mxu0
        %1623 = vmatprep.mubr.f32.mxu0 0.0
        %1624 = vmatmul.mubr.f32.gmra.mrb[0].mxu0 %v1552
        %v1625 = vpop.f32.mrb[0].mxu0
        %v1626 = vadd.f32 0.0, %v1625
        %v1627 = vpop.f32.mrb[0].mxu0
        %1628 = vdwg.mxu0
        %1629 = vrot.lane.b32.xlu0 %v474, 104
        %v1630 = vpop.permute.xlu0 %1629
        %1631 = vrot.lane.b32.xlu0 %v475, 104
        %v1632 = vpop.permute.xlu0 %1631
        %1633 = vrot.lane.b32.xlu0 %v457, 40
        %v1634 = vpop.permute.xlu0 %1633
        %1635 = vrot.lane.b32.xlu0 %v463, 40
        %v1636 = vpop.permute.xlu0 %1635
        %v1637 = vsel %vm482, %v1630, 0
        %v1639 = vsel %vm482, %v1632, 0
        %v1641 = vsel %vm482, %v1634, 0
        %v1643 = vsel %vm482, %v1636, 0
        %1645 = vmatprep.subr.mxu0 0.0
        %1646 = vmatpush1.xpose.msra.mxu0 %v1641
        %1647 = vmatprep.subr.mxu0 0.0
        %1648 = vmatpush1.xpose.msra.mxu0 %v1643
        %1649 = vmatprep.subr.mxu0 0.0
        %1650 = vmatpush1.xpose.msra.mxu0 0.0
        %1651 = vmatprep.subr.mxu0 0.0
        %1652 = vmatpush1.xpose.msra.mxu0 0.0
        %1653 = vmatprep.subr.mxu0 0.0
        %1654 = vmatpush1.xpose.msra.mxu0 0.0
        %1655 = vmatprep.subr.mxu0 0.0
        %1656 = vmatpush1.xpose.msra.mxu0 0.0
        %1657 = vmatprep.subr.mxu0 0.0
        %1658 = vmatpush1.xpose.msra.mxu0 0.0
        %1659 = vmatprep.subr.mxu0 0.0
        %1660 = vmatpush1.xpose.msra.mxu0 0.0
        %1661 = vmatprep.subr.mxu0 0.0
        %1662 = vmatpush1.xpose.msra.mxu0 0.0
        %1663 = vmatprep.subr.mxu0 0.0
        %1664 = vmatpush1.xpose.msra.mxu0 0.0
        %1665 = vmatprep.subr.mxu0 0.0
        %1666 = vmatpush1.xpose.msra.mxu0 0.0
        %1667 = vmatprep.subr.mxu0 0.0
        %1668 = vmatpush1.xpose.msra.mxu0 0.0
        %1669 = vmatprep.subr.mxu0 0.0
        %1670 = vmatpush1.xpose.msra.mxu0 0.0
        %1671 = vmatprep.subr.mxu0 0.0
        %1672 = vmatpush1.xpose.msra.mxu0 0.0
        %1673 = vmatprep.subr.mxu0 0.0
        %1674 = vmatpush1.xpose.msra.mxu0 0.0
        %1675 = vmatprep.subr.mxu0 0.0
        %1676 = vmatpush1.xpose.msra.mxu0 0.0
        %1677 = vmatprep.subr.mxu0 0.0
        %1678 = vmatpush1.xpose.msra.mxu0 0.0
        %1679 = vmatprep.subr.mxu0 0.0
        %1680 = vmatpush1.xpose.msra.mxu0 0.0
        %1681 = vmatprep.subr.mxu0 0.0
        %1682 = vmatpush1.xpose.msra.mxu0 0.0
        %1683 = vmatprep.subr.mxu0 0.0
        %1684 = vmatpush1.xpose.msra.mxu0 0.0
        %1685 = vmatprep.subr.mxu0 0.0
        %1686 = vmatpush1.xpose.msra.mxu0 0.0
        %1687 = vmatprep.subr.mxu0 0.0
        %1688 = vmatpush1.xpose.msra.mxu0 0.0
        %1689 = vmatprep.subr.mxu0 0.0
        %1690 = vmatpush1.xpose.msra.mxu0 0.0
        %1691 = vmatprep.subr.mxu0 0.0
        %1692 = vmatpush1.xpose.msra.mxu0 0.0
        %1693 = vmatprep.subr.mxu0 0.0
        %1694 = vmatpush1.xpose.msra.mxu0 0.0
        %1695 = vmatprep.subr.mxu0 0.0
        %1696 = vmatpush1.xpose.msra.mxu0 0.0
        %1697 = vmatprep.subr.mxu0 0.0
        %1698 = vmatpush1.xpose.msra.mxu0 0.0
        %1699 = vmatprep.subr.mxu0 0.0
        %1700 = vmatpush1.xpose.msra.mxu0 0.0
        %1701 = vmatprep.subr.mxu0 0.0
        %1702 = vmatpush1.xpose.msra.mxu0 0.0
        %1703 = vmatprep.subr.mxu0 0.0
        %1704 = vmatpush1.xpose.msra.mxu0 0.0
        %1705 = vmatprep.subr.mxu0 0.0
        %1706 = vmatpush1.xpose.msra.mxu0 0.0
        %1707 = vmatprep.subr.mxu0 0.0
        %1708 = vmatpush1.xpose.msra.mxu0 0.0
        %1709 = vmatprep.mubr.f32.mxu0 0.0
        %1710 = vmatmul.mubr.f32.gmra.mrb[0].mxu0 %v1637
        %v1711 = vpop.f32.mrb[0].mxu0
        %v1712 = vadd.f32 0.0, %v1711
        %v1713 = vpop.f32.mrb[0].mxu0
        %1714 = vmatprep.mubr.f32.mxu0 0.0
        %1715 = vmatmul.mubr.f32.gmra.mrb[0].mxu0 %v1639
        %v1716 = vpop.f32.mrb[0].mxu0
        %v1717 = vadd.f32 0.0, %v1716
        %v1718 = vpop.f32.mrb[0].mxu0
        %1719 = vdwg.mxu0
        %s1720 = sld [smem:[#allocation8 + $0x180]]
        %v1721 = vstv %s1720
        %v1722 = vsel %vm568, %v1721, 0.0
        %v1723 = vsel %vm569, %v1721, 0.0
        %v1724 = vadd.f32 %v1722, 0.0
        %v1725 = vadd.f32 %v1723, 0.0
        %s1726 = sld [smem:[#allocation8 + $0x181]]
        %v1727 = vstv %s1726
        %v1728 = vsel %vm576, %v1727, 0.0
        %v1729 = vsel %vm577, %v1727, 0.0
        %v1730 = vadd.f32 %v1724, %v1728
        %v1731 = vadd.f32 %v1725, %v1729
        %s1732 = sld [smem:[#allocation8 + $0x182]]
        %v1733 = vstv %s1732
        %v1734 = vsel %vm584, %v1733, 0.0
        %v1735 = vsel %vm585, %v1733, 0.0
        %v1736 = vadd.f32 %v1730, %v1734
        %v1737 = vadd.f32 %v1731, %v1735
        %s1738 = sld [smem:[#allocation8 + $0x183]]
        %v1739 = vstv %s1738
        %v1740 = vsel %vm592, %v1739, 0.0
        %v1741 = vsel %vm593, %v1739, 0.0
        %v1742 = vadd.f32 %v1736, %v1740
        %v1743 = vadd.f32 %v1737, %v1741
        %s1744 = sld [smem:[#allocation8 + $0x184]]
        %v1745 = vstv %s1744
        %v1746 = vsel %vm600, %v1745, 0.0
        %v1747 = vsel %vm601, %v1745, 0.0
        %v1748 = vadd.f32 %v1742, %v1746
        %v1749 = vadd.f32 %v1743, %v1747
        %s1750 = sld [smem:[#allocation8 + $0x185]]
        %v1751 = vstv %s1750
        %v1752 = vsel %vm608, %v1751, 0.0
        %v1753 = vsel %vm609, %v1751, 0.0
        %v1754 = vadd.f32 %v1748, %v1752
        %v1755 = vadd.f32 %v1749, %v1753
        %s1756 = sld [smem:[#allocation8 + $0x186]]
        %v1757 = vstv %s1756
        %v1758 = vsel %vm616, %v1757, 0.0
        %v1759 = vsel %vm617, %v1757, 0.0
        %v1760 = vadd.f32 %v1754, %v1758
        %v1761 = vadd.f32 %v1755, %v1759
        %s1762 = sld [smem:[#allocation8 + $0x187]]
        %v1763 = vstv %s1762
        %v1764 = vsel %vm624, %v1763, 0.0
        %v1765 = vsel %vm625, %v1763, 0.0
        %v1766 = vadd.f32 %v1760, %v1764
        %v1767 = vadd.f32 %v1761, %v1765
        %s1768 = sld [smem:[#allocation8 + $0x188]]
        %v1769 = vstv %s1768
        %v1770 = vsel %vm632, %v1769, 0.0
        %v1771 = vsel %vm633, %v1769, 0.0
        %v1772 = vadd.f32 %v1766, %v1770
        %v1773 = vadd.f32 %v1767, %v1771
        %s1774 = sld [smem:[#allocation8 + $0x189]]
        %v1775 = vstv %s1774
        %v1776 = vsel %vm640, %v1775, 0.0
        %v1777 = vsel %vm641, %v1775, 0.0
        %v1778 = vadd.f32 %v1772, %v1776
        %v1779 = vadd.f32 %v1773, %v1777
        %s1780 = sld [smem:[#allocation8 + $0x18a]]
        %v1781 = vstv %s1780
        %v1782 = vsel %vm648, %v1781, 0.0
        %v1783 = vsel %vm649, %v1781, 0.0
        %v1784 = vadd.f32 %v1778, %v1782
        %v1785 = vadd.f32 %v1779, %v1783
        %s1786 = sld [smem:[#allocation8 + $0x18b]]
        %v1787 = vstv %s1786
        %v1788 = vsel %vm656, %v1787, 0.0
        %v1789 = vsel %vm657, %v1787, 0.0
        %v1790 = vadd.f32 %v1784, %v1788
        %v1791 = vadd.f32 %v1785, %v1789
        %s1792 = sld [smem:[#allocation8 + $0x18c]]
        %v1793 = vstv %s1792
        %v1794 = vsel %vm664, %v1793, 0.0
        %v1795 = vsel %vm665, %v1793, 0.0
        %v1796 = vadd.f32 %v1790, %v1794
        %v1797 = vadd.f32 %v1791, %v1795
        %s1798 = sld [smem:[#allocation8 + $0x18d]]
        %v1799 = vstv %s1798
        %v1800 = vsel %vm672, %v1799, 0.0
        %v1801 = vsel %vm673, %v1799, 0.0
        %v1802 = vadd.f32 %v1796, %v1800
        %v1803 = vadd.f32 %v1797, %v1801
        %s1804 = sld [smem:[#allocation8 + $0x18e]]
        %v1805 = vstv %s1804
        %v1806 = vsel %vm680, %v1805, 0.0
        %v1807 = vsel %vm681, %v1805, 0.0
        %v1808 = vadd.f32 %v1802, %v1806
        %v1809 = vadd.f32 %v1803, %v1807
        %s1810 = sld [smem:[#allocation9 + $0x3]]
        %v1811 = vstv %s1810
        %v1813 = vsel %vm690, %v1808, 0
        %v1816 = vsel %vm690, %v1809, 0
        %1818 = vmatprep.subr.mxu0 0.0
        %1819 = vmatpush1.msra.mxu0 %v1712
        %1820 = vmatprep.subr.mxu0 0.0
        %1821 = vmatpush1.msra.mxu0 %v1717
        %1822 = vmatprep.subr.mxu0 0.0
        %1823 = vmatpush1.msra.mxu0 0.0
        %1824 = vmatprep.subr.mxu0 0.0
        %1825 = vmatpush1.msra.mxu0 0.0
        %1826 = vmatprep.subr.mxu0 0.0
        %1827 = vmatpush1.msra.mxu0 0.0
        %1828 = vmatprep.subr.mxu0 0.0
        %1829 = vmatpush1.msra.mxu0 0.0
        %1830 = vmatprep.subr.mxu0 0.0
        %1831 = vmatpush1.msra.mxu0 0.0
        %1832 = vmatprep.subr.mxu0 0.0
        %1833 = vmatpush1.msra.mxu0 0.0
        %1834 = vmatprep.subr.mxu0 0.0
        %1835 = vmatpush1.msra.mxu0 0.0
        %1836 = vmatprep.subr.mxu0 0.0
        %1837 = vmatpush1.msra.mxu0 0.0
        %1838 = vmatprep.subr.mxu0 0.0
        %1839 = vmatpush1.msra.mxu0 0.0
        %1840 = vmatprep.subr.mxu0 0.0
        %1841 = vmatpush1.msra.mxu0 0.0
        %1842 = vmatprep.subr.mxu0 0.0
        %1843 = vmatpush1.msra.mxu0 0.0
        %1844 = vmatprep.subr.mxu0 0.0
        %1845 = vmatpush1.msra.mxu0 0.0
        %1846 = vmatprep.subr.mxu0 0.0
        %1847 = vmatpush1.msra.mxu0 0.0
        %1848 = vmatprep.subr.mxu0 0.0
        %1849 = vmatpush1.msra.mxu0 0.0
        %1850 = vmatprep.subr.mxu0 0.0
        %1851 = vmatpush1.msra.mxu0 0.0
        %1852 = vmatprep.subr.mxu0 0.0
        %1853 = vmatpush1.msra.mxu0 0.0
        %1854 = vmatprep.subr.mxu0 0.0
        %1855 = vmatpush1.msra.mxu0 0.0
        %1856 = vmatprep.subr.mxu0 0.0
        %1857 = vmatpush1.msra.mxu0 0.0
        %1858 = vmatprep.subr.mxu0 0.0
        %1859 = vmatpush1.msra.mxu0 0.0
        %1860 = vmatprep.subr.mxu0 0.0
        %1861 = vmatpush1.msra.mxu0 0.0
        %1862 = vmatprep.subr.mxu0 0.0
        %1863 = vmatpush1.msra.mxu0 0.0
        %1864 = vmatprep.subr.mxu0 0.0
        %1865 = vmatpush1.msra.mxu0 0.0
        %1866 = vmatprep.subr.mxu0 0.0
        %1867 = vmatpush1.msra.mxu0 0.0
        %1868 = vmatprep.subr.mxu0 0.0
        %1869 = vmatpush1.msra.mxu0 0.0
        %1870 = vmatprep.subr.mxu0 0.0
        %1871 = vmatpush1.msra.mxu0 0.0
        %1872 = vmatprep.subr.mxu0 0.0
        %1873 = vmatpush1.msra.mxu0 0.0
        %1874 = vmatprep.subr.mxu0 0.0
        %1875 = vmatpush1.msra.mxu0 0.0
        %1876 = vmatprep.subr.mxu0 0.0
        %1877 = vmatpush1.msra.mxu0 0.0
        %1878 = vmatprep.subr.mxu0 0.0
        %1879 = vmatpush1.msra.mxu0 0.0
        %1880 = vmatprep.subr.mxu0 0.0
        %1881 = vmatpush1.msra.mxu0 0.0
        %1882 = vmatprep.mubr.f32.mxu0 0.0
        %1883 = vmatmul.mubr.f32.gmra.mrb[0].mxu0 %v1813
        %v1884 = vpop.f32.mrb[0].mxu0
        %v1885 = vadd.f32 %v1811, %v1884
        %v1886 = vpop.f32.mrb[0].mxu0
        %1887 = vmatprep.mubr.f32.mxu0 0.0
        %1888 = vmatmul.mubr.f32.gmra.mrb[0].mxu0 %v1816
        %v1889 = vpop.f32.mrb[0].mxu0
        %v1890 = vadd.f32 %v1811, %v1889
        %v1891 = vpop.f32.mrb[0].mxu0
        %1892 = vdwg.mxu0
        %v1893 = vadd.f32 %v1712, %v1885
        %v1894 = vadd.f32 %v1717, %v1890
        %v1895 = vsel %vm690, %v1893, -inf
        %1896 = vmax.xlane.f32.xlu0 %v1895
        %v1897 = vpop.xlane.xlu0 %1896
        %v1898 = vsel %vm690, %v1894, -inf
        %1899 = vmax.xlane.f32.xlu0 %v1898
        %v1900 = vpop.xlane.xlu0 %1899
        %v1901 = vsub.f32 %v1893, %v1897
        %v1902 = vsub.f32 %v1894, %v1900
        %v1903 = vmul.f32 %v1901, 1.442695
        %v1904 = vpow.pop %v1903
        %v1905 = vmul.f32 %v1902, 1.442695
        %v1906 = vpow.pop %v1905
        %v1907 = vsel %vm690, %v1904, 0.0
        %1908 = vadd.xlane.f32.xlu0 %v1907
        %v1909 = vpop.xlane.xlu0 %1908
        %v1910 = vsel %vm690, %v1906, 0.0
        %1911 = vadd.xlane.f32.xlu0 %v1910
        %v1912 = vpop.xlane.xlu0 %1911
        %v1913 = vrcp.pop %v1909
        %v1914 = vmul.f32 %v1904, %v1913
        %v1915 = vrcp.pop %v1912
        %v1916 = vmul.f32 %v1906, %v1915
        %1917 = vrot.lane.b32.xlu0 %v459, 104
        %v1918 = vpop.permute.xlu0 %1917
        %1919 = vrot.lane.b32.xlu0 %v465, 104
        %v1920 = vpop.permute.xlu0 %1919
        %v1924 = vsel %vm690, %v1914, 0
        %v1927 = vsel %vm690, %v1916, 0
        %1929 = vmatprep.subr.mxu0 0.0
        %1930 = vmatpush1.msra.mxu0 %v1918
        %1931 = vmatprep.subr.mxu0 0.0
        %1932 = vmatpush1.msra.mxu0 %v1920
        %1933 = vmatprep.subr.mxu0 0.0
        %1934 = vmatpush1.msra.mxu0 0.0
        %1935 = vmatprep.subr.mxu0 0.0
        %1936 = vmatpush1.msra.mxu0 0.0
        %1937 = vmatprep.subr.mxu0 0.0
        %1938 = vmatpush1.msra.mxu0 0.0
        %1939 = vmatprep.subr.mxu0 0.0
        %1940 = vmatpush1.msra.mxu0 0.0
        %1941 = vmatprep.subr.mxu0 0.0
        %1942 = vmatpush1.msra.mxu0 0.0
        %1943 = vmatprep.subr.mxu0 0.0
        %1944 = vmatpush1.msra.mxu0 0.0
        %1945 = vmatprep.subr.mxu0 0.0
        %1946 = vmatpush1.msra.mxu0 0.0
        %1947 = vmatprep.subr.mxu0 0.0
        %1948 = vmatpush1.msra.mxu0 0.0
        %1949 = vmatprep.subr.mxu0 0.0
        %1950 = vmatpush1.msra.mxu0 0.0
        %1951 = vmatprep.subr.mxu0 0.0
        %1952 = vmatpush1.msra.mxu0 0.0
        %1953 = vmatprep.subr.mxu0 0.0
        %1954 = vmatpush1.msra.mxu0 0.0
        %1955 = vmatprep.subr.mxu0 0.0
        %1956 = vmatpush1.msra.mxu0 0.0
        %1957 = vmatprep.subr.mxu0 0.0
        %1958 = vmatpush1.msra.mxu0 0.0
        %1959 = vmatprep.subr.mxu0 0.0
        %1960 = vmatpush1.msra.mxu0 0.0
        %1961 = vmatprep.subr.mxu0 0.0
        %1962 = vmatpush1.msra.mxu0 0.0
        %1963 = vmatprep.subr.mxu0 0.0
        %1964 = vmatpush1.msra.mxu0 0.0
        %1965 = vmatprep.subr.mxu0 0.0
        %1966 = vmatpush1.msra.mxu0 0.0
        %1967 = vmatprep.subr.mxu0 0.0
        %1968 = vmatpush1.msra.mxu0 0.0
        %1969 = vmatprep.subr.mxu0 0.0
        %1970 = vmatpush1.msra.mxu0 0.0
        %1971 = vmatprep.subr.mxu0 0.0
        %1972 = vmatpush1.msra.mxu0 0.0
        %1973 = vmatprep.subr.mxu0 0.0
        %1974 = vmatpush1.msra.mxu0 0.0
        %1975 = vmatprep.subr.mxu0 0.0
        %1976 = vmatpush1.msra.mxu0 0.0
        %1977 = vmatprep.subr.mxu0 0.0
        %1978 = vmatpush1.msra.mxu0 0.0
        %1979 = vmatprep.subr.mxu0 0.0
        %1980 = vmatpush1.msra.mxu0 0.0
        %1981 = vmatprep.subr.mxu0 0.0
        %1982 = vmatpush1.msra.mxu0 0.0
        %1983 = vmatprep.subr.mxu0 0.0
        %1984 = vmatpush1.msra.mxu0 0.0
        %1985 = vmatprep.subr.mxu0 0.0
        %1986 = vmatpush1.msra.mxu0 0.0
        %1987 = vmatprep.subr.mxu0 0.0
        %1988 = vmatpush1.msra.mxu0 0.0
        %1989 = vmatprep.subr.mxu0 0.0
        %1990 = vmatpush1.msra.mxu0 0.0
        %1991 = vmatprep.subr.mxu0 0.0
        %1992 = vmatpush1.msra.mxu0 0.0
        %1993 = vmatprep.mubr.f32.mxu0 0.0
        %1994 = vmatmul.mubr.f32.gmra.mrb[0].mxu0 %v1924
        %v1995 = vpop.f32.mrb[0].mxu0
        %v1996 = vadd.f32 0.0, %v1995
        %v1997 = vpop.f32.mrb[0].mxu0
        %1998 = vmatprep.mubr.f32.mxu0 0.0
        %1999 = vmatmul.mubr.f32.gmra.mrb[0].mxu0 %v1927
        %v2000 = vpop.f32.mrb[0].mxu0
        %v2001 = vadd.f32 0.0, %v2000
        %v2002 = vpop.f32.mrb[0].mxu0
        %2003 = vdwg.mxu0
        %2004 = vrot.lane.b32.xlu0 %v474, 96
        %v2005 = vpop.permute.xlu0 %2004
        %2006 = vrot.lane.b32.xlu0 %v475, 96
        %v2007 = vpop.permute.xlu0 %2006
        %2008 = vrot.lane.b32.xlu0 %v457, 32
        %v2009 = vpop.permute.xlu0 %2008
        %2010 = vrot.lane.b32.xlu0 %v463, 32
        %v2011 = vpop.permute.xlu0 %2010
        %v2012 = vsel %vm482, %v2005, 0
        %v2014 = vsel %vm482, %v2007, 0
        %v2016 = vsel %vm482, %v2009, 0
        %v2018 = vsel %vm482, %v2011, 0
        %2020 = vmatprep.subr.mxu0 0.0
        %2021 = vmatpush1.xpose.msra.mxu0 %v2016
        %2022 = vmatprep.subr.mxu0 0.0
        %2023 = vmatpush1.xpose.msra.mxu0 %v2018
        %2024 = vmatprep.subr.mxu0 0.0
        %2025 = vmatpush1.xpose.msra.mxu0 0.0
        %2026 = vmatprep.subr.mxu0 0.0
        %2027 = vmatpush1.xpose.msra.mxu0 0.0
        %2028 = vmatprep.subr.mxu0 0.0
        %2029 = vmatpush1.xpose.msra.mxu0 0.0
        %2030 = vmatprep.subr.mxu0 0.0
        %2031 = vmatpush1.xpose.msra.mxu0 0.0
        %2032 = vmatprep.subr.mxu0 0.0
        %2033 = vmatpush1.xpose.msra.mxu0 0.0
        %2034 = vmatprep.subr.mxu0 0.0
        %2035 = vmatpush1.xpose.msra.mxu0 0.0
        %2036 = vmatprep.subr.mxu0 0.0
        %2037 = vmatpush1.xpose.msra.mxu0 0.0
        %2038 = vmatprep.subr.mxu0 0.0
        %2039 = vmatpush1.xpose.msra.mxu0 0.0
        %2040 = vmatprep.subr.mxu0 0.0
        %2041 = vmatpush1.xpose.msra.mxu0 0.0
        %2042 = vmatprep.subr.mxu0 0.0
        %2043 = vmatpush1.xpose.msra.mxu0 0.0
        %2044 = vmatprep.subr.mxu0 0.0
        %2045 = vmatpush1.xpose.msra.mxu0 0.0
        %2046 = vmatprep.subr.mxu0 0.0
        %2047 = vmatpush1.xpose.msra.mxu0 0.0
        %2048 = vmatprep.subr.mxu0 0.0
        %2049 = vmatpush1.xpose.msra.mxu0 0.0
        %2050 = vmatprep.subr.mxu0 0.0
        %2051 = vmatpush1.xpose.msra.mxu0 0.0
        %2052 = vmatprep.subr.mxu0 0.0
        %2053 = vmatpush1.xpose.msra.mxu0 0.0
        %2054 = vmatprep.subr.mxu0 0.0
        %2055 = vmatpush1.xpose.msra.mxu0 0.0
        %2056 = vmatprep.subr.mxu0 0.0
        %2057 = vmatpush1.xpose.msra.mxu0 0.0
        %2058 = vmatprep.subr.mxu0 0.0
        %2059 = vmatpush1.xpose.msra.mxu0 0.0
        %2060 = vmatprep.subr.mxu0 0.0
        %2061 = vmatpush1.xpose.msra.mxu0 0.0
        %2062 = vmatprep.subr.mxu0 0.0
        %2063 = vmatpush1.xpose.msra.mxu0 0.0
        %2064 = vmatprep.subr.mxu0 0.0
        %2065 = vmatpush1.xpose.msra.mxu0 0.0
        %2066 = vmatprep.subr.mxu0 0.0
        %2067 = vmatpush1.xpose.msra.mxu0 0.0
        %2068 = vmatprep.subr.mxu0 0.0
        %2069 = vmatpush1.xpose.msra.mxu0 0.0
        %2070 = vmatprep.subr.mxu0 0.0
        %2071 = vmatpush1.xpose.msra.mxu0 0.0
        %2072 = vmatprep.subr.mxu0 0.0
        %2073 = vmatpush1.xpose.msra.mxu0 0.0
        %2074 = vmatprep.subr.mxu0 0.0
        %2075 = vmatpush1.xpose.msra.mxu0 0.0
        %2076 = vmatprep.subr.mxu0 0.0
        %2077 = vmatpush1.xpose.msra.mxu0 0.0
        %2078 = vmatprep.subr.mxu0 0.0
        %2079 = vmatpush1.xpose.msra.mxu0 0.0
        %2080 = vmatprep.subr.mxu0 0.0
        %2081 = vmatpush1.xpose.msra.mxu0 0.0
        %2082 = vmatprep.subr.mxu0 0.0
        %2083 = vmatpush1.xpose.msra.mxu0 0.0
        %2084 = vmatprep.mubr.f32.mxu0 0.0
        %2085 = vmatmul.mubr.f32.gmra.mrb[0].mxu0 %v2012
        %v2086 = vpop.f32.mrb[0].mxu0
        %v2087 = vadd.f32 0.0, %v2086
        %v2088 = vpop.f32.mrb[0].mxu0
        %2089 = vmatprep.mubr.f32.mxu0 0.0
        %2090 = vmatmul.mubr.f32.gmra.mrb[0].mxu0 %v2014
        %v2091 = vpop.f32.mrb[0].mxu0
        %v2092 = vadd.f32 0.0, %v2091
        %v2093 = vpop.f32.mrb[0].mxu0
        %2094 = vdwg.mxu0
        %s2095 = sld [smem:[#allocation8 + $0x200]]
        %v2096 = vstv %s2095
        %v2097 = vsel %vm568, %v2096, 0.0
        %v2098 = vsel %vm569, %v2096, 0.0
        %v2099 = vadd.f32 %v2097, 0.0
        %v2100 = vadd.f32 %v2098, 0.0
        %s2101 = sld [smem:[#allocation8 + $0x201]]
        %v2102 = vstv %s2101
        %v2103 = vsel %vm576, %v2102, 0.0
        %v2104 = vsel %vm577, %v2102, 0.0
        %v2105 = vadd.f32 %v2099, %v2103
        %v2106 = vadd.f32 %v2100, %v2104
        %s2107 = sld [smem:[#allocation8 + $0x202]]
        %v2108 = vstv %s2107
        %v2109 = vsel %vm584, %v2108, 0.0
        %v2110 = vsel %vm585, %v2108, 0.0
        %v2111 = vadd.f32 %v2105, %v2109
        %v2112 = vadd.f32 %v2106, %v2110
        %s2113 = sld [smem:[#allocation8 + $0x203]]
        %v2114 = vstv %s2113
        %v2115 = vsel %vm592, %v2114, 0.0
        %v2116 = vsel %vm593, %v2114, 0.0
        %v2117 = vadd.f32 %v2111, %v2115
        %v2118 = vadd.f32 %v2112, %v2116
        %s2119 = sld [smem:[#allocation8 + $0x204]]
        %v2120 = vstv %s2119
        %v2121 = vsel %vm600, %v2120, 0.0
        %v2122 = vsel %vm601, %v2120, 0.0
        %v2123 = vadd.f32 %v2117, %v2121
        %v2124 = vadd.f32 %v2118, %v2122
        %s2125 = sld [smem:[#allocation8 + $0x205]]
        %v2126 = vstv %s2125
        %v2127 = vsel %vm608, %v2126, 0.0
        %v2128 = vsel %vm609, %v2126, 0.0
        %v2129 = vadd.f32 %v2123, %v2127
        %v2130 = vadd.f32 %v2124, %v2128
        %s2131 = sld [smem:[#allocation8 + $0x206]]
        %v2132 = vstv %s2131
        %v2133 = vsel %vm616, %v2132, 0.0
        %v2134 = vsel %vm617, %v2132, 0.0
        %v2135 = vadd.f32 %v2129, %v2133
        %v2136 = vadd.f32 %v2130, %v2134
        %s2137 = sld [smem:[#allocation8 + $0x207]]
        %v2138 = vstv %s2137
        %v2139 = vsel %vm624, %v2138, 0.0
        %v2140 = vsel %vm625, %v2138, 0.0
        %v2141 = vadd.f32 %v2135, %v2139
        %v2142 = vadd.f32 %v2136, %v2140
        %s2143 = sld [smem:[#allocation8 + $0x208]]
        %v2144 = vstv %s2143
        %v2145 = vsel %vm632, %v2144, 0.0
        %v2146 = vsel %vm633, %v2144, 0.0
        %v2147 = vadd.f32 %v2141, %v2145
        %v2148 = vadd.f32 %v2142, %v2146
        %s2149 = sld [smem:[#allocation8 + $0x209]]
        %v2150 = vstv %s2149
        %v2151 = vsel %vm640, %v2150, 0.0
        %v2152 = vsel %vm641, %v2150, 0.0
        %v2153 = vadd.f32 %v2147, %v2151
        %v2154 = vadd.f32 %v2148, %v2152
        %s2155 = sld [smem:[#allocation8 + $0x20a]]
        %v2156 = vstv %s2155
        %v2157 = vsel %vm648, %v2156, 0.0
        %v2158 = vsel %vm649, %v2156, 0.0
        %v2159 = vadd.f32 %v2153, %v2157
        %v2160 = vadd.f32 %v2154, %v2158
        %s2161 = sld [smem:[#allocation8 + $0x20b]]
        %v2162 = vstv %s2161
        %v2163 = vsel %vm656, %v2162, 0.0
        %v2164 = vsel %vm657, %v2162, 0.0
        %v2165 = vadd.f32 %v2159, %v2163
        %v2166 = vadd.f32 %v2160, %v2164
        %s2167 = sld [smem:[#allocation8 + $0x20c]]
        %v2168 = vstv %s2167
        %v2169 = vsel %vm664, %v2168, 0.0
        %v2170 = vsel %vm665, %v2168, 0.0
        %v2171 = vadd.f32 %v2165, %v2169
        %v2172 = vadd.f32 %v2166, %v2170
        %s2173 = sld [smem:[#allocation8 + $0x20d]]
        %v2174 = vstv %s2173
        %v2175 = vsel %vm672, %v2174, 0.0
        %v2176 = vsel %vm673, %v2174, 0.0
        %v2177 = vadd.f32 %v2171, %v2175
        %v2178 = vadd.f32 %v2172, %v2176
        %s2179 = sld [smem:[#allocation8 + $0x20e]]
        %v2180 = vstv %s2179
        %v2181 = vsel %vm680, %v2180, 0.0
        %v2182 = vsel %vm681, %v2180, 0.0
        %v2183 = vadd.f32 %v2177, %v2181
        %v2184 = vadd.f32 %v2178, %v2182
        %s2185 = sld [smem:[#allocation9 + $0x4]]
        %v2186 = vstv %s2185
        %v2188 = vsel %vm690, %v2183, 0
        %v2191 = vsel %vm690, %v2184, 0
        %2193 = vmatprep.subr.mxu0 0.0
        %2194 = vmatpush1.msra.mxu0 %v2087
        %2195 = vmatprep.subr.mxu0 0.0
        %2196 = vmatpush1.msra.mxu0 %v2092
        %2197 = vmatprep.subr.mxu0 0.0
        %2198 = vmatpush1.msra.mxu0 0.0
        %2199 = vmatprep.subr.mxu0 0.0
        %2200 = vmatpush1.msra.mxu0 0.0
        %2201 = vmatprep.subr.mxu0 0.0
        %2202 = vmatpush1.msra.mxu0 0.0
        %2203 = vmatprep.subr.mxu0 0.0
        %2204 = vmatpush1.msra.mxu0 0.0
        %2205 = vmatprep.subr.mxu0 0.0
        %2206 = vmatpush1.msra.mxu0 0.0
        %2207 = vmatprep.subr.mxu0 0.0
        %2208 = vmatpush1.msra.mxu0 0.0
        %2209 = vmatprep.subr.mxu0 0.0
        %2210 = vmatpush1.msra.mxu0 0.0
        %2211 = vmatprep.subr.mxu0 0.0
        %2212 = vmatpush1.msra.mxu0 0.0
        %2213 = vmatprep.subr.mxu0 0.0
        %2214 = vmatpush1.msra.mxu0 0.0
        %2215 = vmatprep.subr.mxu0 0.0
        %2216 = vmatpush1.msra.mxu0 0.0
        %2217 = vmatprep.subr.mxu0 0.0
        %2218 = vmatpush1.msra.mxu0 0.0
        %2219 = vmatprep.subr.mxu0 0.0
        %2220 = vmatpush1.msra.mxu0 0.0
        %2221 = vmatprep.subr.mxu0 0.0
        %2222 = vmatpush1.msra.mxu0 0.0
        %2223 = vmatprep.subr.mxu0 0.0
        %2224 = vmatpush1.msra.mxu0 0.0
        %2225 = vmatprep.subr.mxu0 0.0
        %2226 = vmatpush1.msra.mxu0 0.0
        %2227 = vmatprep.subr.mxu0 0.0
        %2228 = vmatpush1.msra.mxu0 0.0
        %2229 = vmatprep.subr.mxu0 0.0
        %2230 = vmatpush1.msra.mxu0 0.0
        %2231 = vmatprep.subr.mxu0 0.0
        %2232 = vmatpush1.msra.mxu0 0.0
        %2233 = vmatprep.subr.mxu0 0.0
        %2234 = vmatpush1.msra.mxu0 0.0
        %2235 = vmatprep.subr.mxu0 0.0
        %2236 = vmatpush1.msra.mxu0 0.0
        %2237 = vmatprep.subr.mxu0 0.0
        %2238 = vmatpush1.msra.mxu0 0.0
        %2239 = vmatprep.subr.mxu0 0.0
        %2240 = vmatpush1.msra.mxu0 0.0
        %2241 = vmatprep.subr.mxu0 0.0
        %2242 = vmatpush1.msra.mxu0 0.0
        %2243 = vmatprep.subr.mxu0 0.0
        %2244 = vmatpush1.msra.mxu0 0.0
        %2245 = vmatprep.subr.mxu0 0.0
        %2246 = vmatpush1.msra.mxu0 0.0
        %2247 = vmatprep.subr.mxu0 0.0
        %2248 = vmatpush1.msra.mxu0 0.0
        %2249 = vmatprep.subr.mxu0 0.0
        %2250 = vmatpush1.msra.mxu0 0.0
        %2251 = vmatprep.subr.mxu0 0.0
        %2252 = vmatpush1.msra.mxu0 0.0
        %2253 = vmatprep.subr.mxu0 0.0
        %2254 = vmatpush1.msra.mxu0 0.0
        %2255 = vmatprep.subr.mxu0 0.0
        %2256 = vmatpush1.msra.mxu0 0.0
        %2257 = vmatprep.mubr.f32.mxu0 0.0
        %2258 = vmatmul.mubr.f32.gmra.mrb[0].mxu0 %v2188
        %v2259 = vpop.f32.mrb[0].mxu0
        %v2260 = vadd.f32 %v2186, %v2259
        %v2261 = vpop.f32.mrb[0].mxu0
        %2262 = vmatprep.mubr.f32.mxu0 0.0
        %2263 = vmatmul.mubr.f32.gmra.mrb[0].mxu0 %v2191
        %v2264 = vpop.f32.mrb[0].mxu0
        %v2265 = vadd.f32 %v2186, %v2264
        %v2266 = vpop.f32.mrb[0].mxu0
        %2267 = vdwg.mxu0
        %v2268 = vadd.f32 %v2087, %v2260
        %v2269 = vadd.f32 %v2092, %v2265
        %v2270 = vsel %vm690, %v2268, -inf
        %2271 = vmax.xlane.f32.xlu0 %v2270
        %v2272 = vpop.xlane.xlu0 %2271
        %v2273 = vsel %vm690, %v2269, -inf
        %2274 = vmax.xlane.f32.xlu0 %v2273
        %v2275 = vpop.xlane.xlu0 %2274
        %v2276 = vsub.f32 %v2268, %v2272
        %v2277 = vsub.f32 %v2269, %v2275
        %v2278 = vmul.f32 %v2276, 1.442695
        %v2279 = vpow.pop %v2278
        %v2280 = vmul.f32 %v2277, 1.442695
        %v2281 = vpow.pop %v2280
        %v2282 = vsel %vm690, %v2279, 0.0
        %2283 = vadd.xlane.f32.xlu0 %v2282
        %v2284 = vpop.xlane.xlu0 %2283
        %v2285 = vsel %vm690, %v2281, 0.0
        %2286 = vadd.xlane.f32.xlu0 %v2285
        %v2287 = vpop.xlane.xlu0 %2286
        %v2288 = vrcp.pop %v2284
        %v2289 = vmul.f32 %v2279, %v2288
        %v2290 = vrcp.pop %v2287
        %v2291 = vmul.f32 %v2281, %v2290
        %2292 = vrot.lane.b32.xlu0 %v459, 96
        %v2293 = vpop.permute.xlu0 %2292
        %2294 = vrot.lane.b32.xlu0 %v465, 96
        %v2295 = vpop.permute.xlu0 %2294
        %v2299 = vsel %vm690, %v2289, 0
        %v2302 = vsel %vm690, %v2291, 0
        %2304 = vmatprep.subr.mxu0 0.0
        %2305 = vmatpush1.msra.mxu0 %v2293
        %2306 = vmatprep.subr.mxu0 0.0
        %2307 = vmatpush1.msra.mxu0 %v2295
        %2308 = vmatprep.subr.mxu0 0.0
        %2309 = vmatpush1.msra.mxu0 0.0
        %2310 = vmatprep.subr.mxu0 0.0
        %2311 = vmatpush1.msra.mxu0 0.0
        %2312 = vmatprep.subr.mxu0 0.0
        %2313 = vmatpush1.msra.mxu0 0.0
        %2314 = vmatprep.subr.mxu0 0.0
        %2315 = vmatpush1.msra.mxu0 0.0
        %2316 = vmatprep.subr.mxu0 0.0
        %2317 = vmatpush1.msra.mxu0 0.0
        %2318 = vmatprep.subr.mxu0 0.0
        %2319 = vmatpush1.msra.mxu0 0.0
        %2320 = vmatprep.subr.mxu0 0.0
        %2321 = vmatpush1.msra.mxu0 0.0
        %2322 = vmatprep.subr.mxu0 0.0
        %2323 = vmatpush1.msra.mxu0 0.0
        %2324 = vmatprep.subr.mxu0 0.0
        %2325 = vmatpush1.msra.mxu0 0.0
        %2326 = vmatprep.subr.mxu0 0.0
        %2327 = vmatpush1.msra.mxu0 0.0
        %2328 = vmatprep.subr.mxu0 0.0
        %2329 = vmatpush1.msra.mxu0 0.0
        %2330 = vmatprep.subr.mxu0 0.0
        %2331 = vmatpush1.msra.mxu0 0.0
        %2332 = vmatprep.subr.mxu0 0.0
        %2333 = vmatpush1.msra.mxu0 0.0
        %2334 = vmatprep.subr.mxu0 0.0
        %2335 = vmatpush1.msra.mxu0 0.0
        %2336 = vmatprep.subr.mxu0 0.0
        %2337 = vmatpush1.msra.mxu0 0.0
        %2338 = vmatprep.subr.mxu0 0.0
        %2339 = vmatpush1.msra.mxu0 0.0
        %2340 = vmatprep.subr.mxu0 0.0
        %2341 = vmatpush1.msra.mxu0 0.0
        %2342 = vmatprep.subr.mxu0 0.0
        %2343 = vmatpush1.msra.mxu0 0.0
        %2344 = vmatprep.subr.mxu0 0.0
        %2345 = vmatpush1.msra.mxu0 0.0
        %2346 = vmatprep.subr.mxu0 0.0
        %2347 = vmatpush1.msra.mxu0 0.0
        %2348 = vmatprep.subr.mxu0 0.0
        %2349 = vmatpush1.msra.mxu0 0.0
        %2350 = vmatprep.subr.mxu0 0.0
        %2351 = vmatpush1.msra.mxu0 0.0
        %2352 = vmatprep.subr.mxu0 0.0
        %2353 = vmatpush1.msra.mxu0 0.0
        %2354 = vmatprep.subr.mxu0 0.0
        %2355 = vmatpush1.msra.mxu0 0.0
        %2356 = vmatprep.subr.mxu0 0.0
        %2357 = vmatpush1.msra.mxu0 0.0
        %2358 = vmatprep.subr.mxu0 0.0
        %2359 = vmatpush1.msra.mxu0 0.0
        %2360 = vmatprep.subr.mxu0 0.0
        %2361 = vmatpush1.msra.mxu0 0.0
        %2362 = vmatprep.subr.mxu0 0.0
        %2363 = vmatpush1.msra.mxu0 0.0
        %2364 = vmatprep.subr.mxu0 0.0
        %2365 = vmatpush1.msra.mxu0 0.0
        %2366 = vmatprep.subr.mxu0 0.0
        %2367 = vmatpush1.msra.mxu0 0.0
        %2368 = vmatprep.mubr.f32.mxu0 0.0
        %2369 = vmatmul.mubr.f32.gmra.mrb[0].mxu0 %v2299
        %v2370 = vpop.f32.mrb[0].mxu0
        %v2371 = vadd.f32 0.0, %v2370
        %v2372 = vpop.f32.mrb[0].mxu0
        %2373 = vmatprep.mubr.f32.mxu0 0.0
        %2374 = vmatmul.mubr.f32.gmra.mrb[0].mxu0 %v2302
        %v2375 = vpop.f32.mrb[0].mxu0
        %v2376 = vadd.f32 0.0, %v2375
        %v2377 = vpop.f32.mrb[0].mxu0
        %2378 = vdwg.mxu0
        %2379 = vrot.lane.b32.xlu0 %v474, 88
        %v2380 = vpop.permute.xlu0 %2379
        %2381 = vrot.lane.b32.xlu0 %v475, 88
        %v2382 = vpop.permute.xlu0 %2381
        %2383 = vrot.lane.b32.xlu0 %v457, 24
        %v2384 = vpop.permute.xlu0 %2383
        %2385 = vrot.lane.b32.xlu0 %v463, 24
        %v2386 = vpop.permute.xlu0 %2385
        %v2387 = vsel %vm482, %v2380, 0
        %v2389 = vsel %vm482, %v2382, 0
        %v2391 = vsel %vm482, %v2384, 0
        %v2393 = vsel %vm482, %v2386, 0
        %2395 = vmatprep.subr.mxu0 0.0
        %2396 = vmatpush1.xpose.msra.mxu0 %v2391
        %2397 = vmatprep.subr.mxu0 0.0
        %2398 = vmatpush1.xpose.msra.mxu0 %v2393
        %2399 = vmatprep.subr.mxu0 0.0
        %2400 = vmatpush1.xpose.msra.mxu0 0.0
        %2401 = vmatprep.subr.mxu0 0.0
        %2402 = vmatpush1.xpose.msra.mxu0 0.0
        %2403 = vmatprep.subr.mxu0 0.0
        %2404 = vmatpush1.xpose.msra.mxu0 0.0
        %2405 = vmatprep.subr.mxu0 0.0
        %2406 = vmatpush1.xpose.msra.mxu0 0.0
        %2407 = vmatprep.subr.mxu0 0.0
        %2408 = vmatpush1.xpose.msra.mxu0 0.0
        %2409 = vmatprep.subr.mxu0 0.0
        %2410 = vmatpush1.xpose.msra.mxu0 0.0
        %2411 = vmatprep.subr.mxu0 0.0
        %2412 = vmatpush1.xpose.msra.mxu0 0.0
        %2413 = vmatprep.subr.mxu0 0.0
        %2414 = vmatpush1.xpose.msra.mxu0 0.0
        %2415 = vmatprep.subr.mxu0 0.0
        %2416 = vmatpush1.xpose.msra.mxu0 0.0
        %2417 = vmatprep.subr.mxu0 0.0
        %2418 = vmatpush1.xpose.msra.mxu0 0.0
        %2419 = vmatprep.subr.mxu0 0.0
        %2420 = vmatpush1.xpose.msra.mxu0 0.0
        %2421 = vmatprep.subr.mxu0 0.0
        %2422 = vmatpush1.xpose.msra.mxu0 0.0
        %2423 = vmatprep.subr.mxu0 0.0
        %2424 = vmatpush1.xpose.msra.mxu0 0.0
        %2425 = vmatprep.subr.mxu0 0.0
        %2426 = vmatpush1.xpose.msra.mxu0 0.0
        %2427 = vmatprep.subr.mxu0 0.0
        %2428 = vmatpush1.xpose.msra.mxu0 0.0
        %2429 = vmatprep.subr.mxu0 0.0
        %2430 = vmatpush1.xpose.msra.mxu0 0.0
        %2431 = vmatprep.subr.mxu0 0.0
        %2432 = vmatpush1.xpose.msra.mxu0 0.0
        %2433 = vmatprep.subr.mxu0 0.0
        %2434 = vmatpush1.xpose.msra.mxu0 0.0
        %2435 = vmatprep.subr.mxu0 0.0
        %2436 = vmatpush1.xpose.msra.mxu0 0.0
        %2437 = vmatprep.subr.mxu0 0.0
        %2438 = vmatpush1.xpose.msra.mxu0 0.0
        %2439 = vmatprep.subr.mxu0 0.0
        %2440 = vmatpush1.xpose.msra.mxu0 0.0
        %2441 = vmatprep.subr.mxu0 0.0
        %2442 = vmatpush1.xpose.msra.mxu0 0.0
        %2443 = vmatprep.subr.mxu0 0.0
        %2444 = vmatpush1.xpose.msra.mxu0 0.0
        %2445 = vmatprep.subr.mxu0 0.0
        %2446 = vmatpush1.xpose.msra.mxu0 0.0
        %2447 = vmatprep.subr.mxu0 0.0
        %2448 = vmatpush1.xpose.msra.mxu0 0.0
        %2449 = vmatprep.subr.mxu0 0.0
        %2450 = vmatpush1.xpose.msra.mxu0 0.0
        %2451 = vmatprep.subr.mxu0 0.0
        %2452 = vmatpush1.xpose.msra.mxu0 0.0
        %2453 = vmatprep.subr.mxu0 0.0
        %2454 = vmatpush1.xpose.msra.mxu0 0.0
        %2455 = vmatprep.subr.mxu0 0.0
        %2456 = vmatpush1.xpose.msra.mxu0 0.0
        %2457 = vmatprep.subr.mxu0 0.0
        %2458 = vmatpush1.xpose.msra.mxu0 0.0
        %2459 = vmatprep.mubr.f32.mxu0 0.0
        %2460 = vmatmul.mubr.f32.gmra.mrb[0].mxu0 %v2387
        %v2461 = vpop.f32.mrb[0].mxu0
        %v2462 = vadd.f32 0.0, %v2461
        %v2463 = vpop.f32.mrb[0].mxu0
        %2464 = vmatprep.mubr.f32.mxu0 0.0
        %2465 = vmatmul.mubr.f32.gmra.mrb[0].mxu0 %v2389
        %v2466 = vpop.f32.mrb[0].mxu0
        %v2467 = vadd.f32 0.0, %v2466
        %v2468 = vpop.f32.mrb[0].mxu0
        %2469 = vdwg.mxu0
        %s2470 = sld [smem:[#allocation8 + $0x280]]
        %v2471 = vstv %s2470
        %v2472 = vsel %vm568, %v2471, 0.0
        %v2473 = vsel %vm569, %v2471, 0.0
        %v2474 = vadd.f32 %v2472, 0.0
        %v2475 = vadd.f32 %v2473, 0.0
        %s2476 = sld [smem:[#allocation8 + $0x281]]
        %v2477 = vstv %s2476
        %v2478 = vsel %vm576, %v2477, 0.0
        %v2479 = vsel %vm577, %v2477, 0.0
        %v2480 = vadd.f32 %v2474, %v2478
        %v2481 = vadd.f32 %v2475, %v2479
        %s2482 = sld [smem:[#allocation8 + $0x282]]
        %v2483 = vstv %s2482
        %v2484 = vsel %vm584, %v2483, 0.0
        %v2485 = vsel %vm585, %v2483, 0.0
        %v2486 = vadd.f32 %v2480, %v2484
        %v2487 = vadd.f32 %v2481, %v2485
        %s2488 = sld [smem:[#allocation8 + $0x283]]
        %v2489 = vstv %s2488
        %v2490 = vsel %vm592, %v2489, 0.0
        %v2491 = vsel %vm593, %v2489, 0.0
        %v2492 = vadd.f32 %v2486, %v2490
        %v2493 = vadd.f32 %v2487, %v2491
        %s2494 = sld [smem:[#allocation8 + $0x284]]
        %v2495 = vstv %s2494
        %v2496 = vsel %vm600, %v2495, 0.0
        %v2497 = vsel %vm601, %v2495, 0.0
        %v2498 = vadd.f32 %v2492, %v2496
        %v2499 = vadd.f32 %v2493, %v2497
        %s2500 = sld [smem:[#allocation8 + $0x285]]
        %v2501 = vstv %s2500
        %v2502 = vsel %vm608, %v2501, 0.0
        %v2503 = vsel %vm609, %v2501, 0.0
        %v2504 = vadd.f32 %v2498, %v2502
        %v2505 = vadd.f32 %v2499, %v2503
        %s2506 = sld [smem:[#allocation8 + $0x286]]
        %v2507 = vstv %s2506
        %v2508 = vsel %vm616, %v2507, 0.0
        %v2509 = vsel %vm617, %v2507, 0.0
        %v2510 = vadd.f32 %v2504, %v2508
        %v2511 = vadd.f32 %v2505, %v2509
        %s2512 = sld [smem:[#allocation8 + $0x287]]
        %v2513 = vstv %s2512
        %v2514 = vsel %vm624, %v2513, 0.0
        %v2515 = vsel %vm625, %v2513, 0.0
        %v2516 = vadd.f32 %v2510, %v2514
        %v2517 = vadd.f32 %v2511, %v2515
        %s2518 = sld [smem:[#allocation8 + $0x288]]
        %v2519 = vstv %s2518
        %v2520 = vsel %vm632, %v2519, 0.0
        %v2521 = vsel %vm633, %v2519, 0.0
        %v2522 = vadd.f32 %v2516, %v2520
        %v2523 = vadd.f32 %v2517, %v2521
        %s2524 = sld [smem:[#allocation8 + $0x289]]
        %v2525 = vstv %s2524
        %v2526 = vsel %vm640, %v2525, 0.0
        %v2527 = vsel %vm641, %v2525, 0.0
        %v2528 = vadd.f32 %v2522, %v2526
        %v2529 = vadd.f32 %v2523, %v2527
        %s2530 = sld [smem:[#allocation8 + $0x28a]]
        %v2531 = vstv %s2530
        %v2532 = vsel %vm648, %v2531, 0.0
        %v2533 = vsel %vm649, %v2531, 0.0
        %v2534 = vadd.f32 %v2528, %v2532
        %v2535 = vadd.f32 %v2529, %v2533
        %s2536 = sld [smem:[#allocation8 + $0x28b]]
        %v2537 = vstv %s2536
        %v2538 = vsel %vm656, %v2537, 0.0
        %v2539 = vsel %vm657, %v2537, 0.0
        %v2540 = vadd.f32 %v2534, %v2538
        %v2541 = vadd.f32 %v2535, %v2539
        %s2542 = sld [smem:[#allocation8 + $0x28c]]
        %v2543 = vstv %s2542
        %v2544 = vsel %vm664, %v2543, 0.0
        %v2545 = vsel %vm665, %v2543, 0.0
        %v2546 = vadd.f32 %v2540, %v2544
        %v2547 = vadd.f32 %v2541, %v2545
        %s2548 = sld [smem:[#allocation8 + $0x28d]]
        %v2549 = vstv %s2548
        %v2550 = vsel %vm672, %v2549, 0.0
        %v2551 = vsel %vm673, %v2549, 0.0
        %v2552 = vadd.f32 %v2546, %v2550
        %v2553 = vadd.f32 %v2547, %v2551
        %s2554 = sld [smem:[#allocation8 + $0x28e]]
        %v2555 = vstv %s2554
        %v2556 = vsel %vm680, %v2555, 0.0
        %v2557 = vsel %vm681, %v2555, 0.0
        %v2558 = vadd.f32 %v2552, %v2556
        %v2559 = vadd.f32 %v2553, %v2557
        %s2560 = sld [smem:[#allocation9 + $0x5]]
        %v2561 = vstv %s2560
        %v2563 = vsel %vm690, %v2558, 0
        %v2566 = vsel %vm690, %v2559, 0
        %2568 = vmatprep.subr.mxu0 0.0
        %2569 = vmatpush1.msra.mxu0 %v2462
        %2570 = vmatprep.subr.mxu0 0.0
        %2571 = vmatpush1.msra.mxu0 %v2467
        %2572 = vmatprep.subr.mxu0 0.0
        %2573 = vmatpush1.msra.mxu0 0.0
        %2574 = vmatprep.subr.mxu0 0.0
        %2575 = vmatpush1.msra.mxu0 0.0
        %2576 = vmatprep.subr.mxu0 0.0
        %2577 = vmatpush1.msra.mxu0 0.0
        %2578 = vmatprep.subr.mxu0 0.0
        %2579 = vmatpush1.msra.mxu0 0.0
        %2580 = vmatprep.subr.mxu0 0.0
        %2581 = vmatpush1.msra.mxu0 0.0
        %2582 = vmatprep.subr.mxu0 0.0
        %2583 = vmatpush1.msra.mxu0 0.0
        %2584 = vmatprep.subr.mxu0 0.0
        %2585 = vmatpush1.msra.mxu0 0.0
        %2586 = vmatprep.subr.mxu0 0.0
        %2587 = vmatpush1.msra.mxu0 0.0
        %2588 = vmatprep.subr.mxu0 0.0
        %2589 = vmatpush1.msra.mxu0 0.0
        %2590 = vmatprep.subr.mxu0 0.0
        %2591 = vmatpush1.msra.mxu0 0.0
        %2592 = vmatprep.subr.mxu0 0.0
        %2593 = vmatpush1.msra.mxu0 0.0
        %2594 = vmatprep.subr.mxu0 0.0
        %2595 = vmatpush1.msra.mxu0 0.0
        %2596 = vmatprep.subr.mxu0 0.0
        %2597 = vmatpush1.msra.mxu0 0.0
        %2598 = vmatprep.subr.mxu0 0.0
        %2599 = vmatpush1.msra.mxu0 0.0
        %2600 = vmatprep.subr.mxu0 0.0
        %2601 = vmatpush1.msra.mxu0 0.0
        %2602 = vmatprep.subr.mxu0 0.0
        %2603 = vmatpush1.msra.mxu0 0.0
        %2604 = vmatprep.subr.mxu0 0.0
        %2605 = vmatpush1.msra.mxu0 0.0
        %2606 = vmatprep.subr.mxu0 0.0
        %2607 = vmatpush1.msra.mxu0 0.0
        %2608 = vmatprep.subr.mxu0 0.0
        %2609 = vmatpush1.msra.mxu0 0.0
        %2610 = vmatprep.subr.mxu0 0.0
        %2611 = vmatpush1.msra.mxu0 0.0
        %2612 = vmatprep.subr.mxu0 0.0
        %2613 = vmatpush1.msra.mxu0 0.0
        %2614 = vmatprep.subr.mxu0 0.0
        %2615 = vmatpush1.msra.mxu0 0.0
        %2616 = vmatprep.subr.mxu0 0.0
        %2617 = vmatpush1.msra.mxu0 0.0
        %2618 = vmatprep.subr.mxu0 0.0
        %2619 = vmatpush1.msra.mxu0 0.0
        %2620 = vmatprep.subr.mxu0 0.0
        %2621 = vmatpush1.msra.mxu0 0.0
        %2622 = vmatprep.subr.mxu0 0.0
        %2623 = vmatpush1.msra.mxu0 0.0
        %2624 = vmatprep.subr.mxu0 0.0
        %2625 = vmatpush1.msra.mxu0 0.0
        %2626 = vmatprep.subr.mxu0 0.0
        %2627 = vmatpush1.msra.mxu0 0.0
        %2628 = vmatprep.subr.mxu0 0.0
        %2629 = vmatpush1.msra.mxu0 0.0
        %2630 = vmatprep.subr.mxu0 0.0
        %2631 = vmatpush1.msra.mxu0 0.0
        %2632 = vmatprep.mubr.f32.mxu0 0.0
        %2633 = vmatmul.mubr.f32.gmra.mrb[0].mxu0 %v2563
        %v2634 = vpop.f32.mrb[0].mxu0
        %v2635 = vadd.f32 %v2561, %v2634
        %v2636 = vpop.f32.mrb[0].mxu0
        %2637 = vmatprep.mubr.f32.mxu0 0.0
        %2638 = vmatmul.mubr.f32.gmra.mrb[0].mxu0 %v2566
        %v2639 = vpop.f32.mrb[0].mxu0
        %v2640 = vadd.f32 %v2561, %v2639
        %v2641 = vpop.f32.mrb[0].mxu0
        %2642 = vdwg.mxu0
        %v2643 = vadd.f32 %v2462, %v2635
        %v2644 = vadd.f32 %v2467, %v2640
        %v2645 = vsel %vm690, %v2643, -inf
        %2646 = vmax.xlane.f32.xlu0 %v2645
        %v2647 = vpop.xlane.xlu0 %2646
        %v2648 = vsel %vm690, %v2644, -inf
        %2649 = vmax.xlane.f32.xlu0 %v2648
        %v2650 = vpop.xlane.xlu0 %2649
        %v2651 = vsub.f32 %v2643, %v2647
        %v2652 = vsub.f32 %v2644, %v2650
        %v2653 = vmul.f32 %v2651, 1.442695
        %v2654 = vpow.pop %v2653
        %v2655 = vmul.f32 %v2652, 1.442695
        %v2656 = vpow.pop %v2655
        %v2657 = vsel %vm690, %v2654, 0.0
        %2658 = vadd.xlane.f32.xlu0 %v2657
        %v2659 = vpop.xlane.xlu0 %2658
        %v2660 = vsel %vm690, %v2656, 0.0
        %2661 = vadd.xlane.f32.xlu0 %v2660
        %v2662 = vpop.xlane.xlu0 %2661
        %v2663 = vrcp.pop %v2659
        %v2664 = vmul.f32 %v2654, %v2663
        %v2665 = vrcp.pop %v2662
        %v2666 = vmul.f32 %v2656, %v2665
        %2667 = vrot.lane.b32.xlu0 %v459, 88
        %v2668 = vpop.permute.xlu0 %2667
        %2669 = vrot.lane.b32.xlu0 %v465, 88
        %v2670 = vpop.permute.xlu0 %2669
        %v2674 = vsel %vm690, %v2664, 0
        %v2677 = vsel %vm690, %v2666, 0
        %2679 = vmatprep.subr.mxu0 0.0
        %2680 = vmatpush1.msra.mxu0 %v2668
        %2681 = vmatprep.subr.mxu0 0.0
        %2682 = vmatpush1.msra.mxu0 %v2670
        %2683 = vmatprep.subr.mxu0 0.0
        %2684 = vmatpush1.msra.mxu0 0.0
        %2685 = vmatprep.subr.mxu0 0.0
        %2686 = vmatpush1.msra.mxu0 0.0
        %2687 = vmatprep.subr.mxu0 0.0
        %2688 = vmatpush1.msra.mxu0 0.0
        %2689 = vmatprep.subr.mxu0 0.0
        %2690 = vmatpush1.msra.mxu0 0.0
        %2691 = vmatprep.subr.mxu0 0.0
        %2692 = vmatpush1.msra.mxu0 0.0
        %2693 = vmatprep.subr.mxu0 0.0
        %2694 = vmatpush1.msra.mxu0 0.0
        %2695 = vmatprep.subr.mxu0 0.0
        %2696 = vmatpush1.msra.mxu0 0.0
        %2697 = vmatprep.subr.mxu0 0.0
        %2698 = vmatpush1.msra.mxu0 0.0
        %2699 = vmatprep.subr.mxu0 0.0
        %2700 = vmatpush1.msra.mxu0 0.0
        %2701 = vmatprep.subr.mxu0 0.0
        %2702 = vmatpush1.msra.mxu0 0.0
        %2703 = vmatprep.subr.mxu0 0.0
        %2704 = vmatpush1.msra.mxu0 0.0
        %2705 = vmatprep.subr.mxu0 0.0
        %2706 = vmatpush1.msra.mxu0 0.0
        %2707 = vmatprep.subr.mxu0 0.0
        %2708 = vmatpush1.msra.mxu0 0.0
        %2709 = vmatprep.subr.mxu0 0.0
        %2710 = vmatpush1.msra.mxu0 0.0
        %2711 = vmatprep.subr.mxu0 0.0
        %2712 = vmatpush1.msra.mxu0 0.0
        %2713 = vmatprep.subr.mxu0 0.0
        %2714 = vmatpush1.msra.mxu0 0.0
        %2715 = vmatprep.subr.mxu0 0.0
        %2716 = vmatpush1.msra.mxu0 0.0
        %2717 = vmatprep.subr.mxu0 0.0
        %2718 = vmatpush1.msra.mxu0 0.0
        %2719 = vmatprep.subr.mxu0 0.0
        %2720 = vmatpush1.msra.mxu0 0.0
        %2721 = vmatprep.subr.mxu0 0.0
        %2722 = vmatpush1.msra.mxu0 0.0
        %2723 = vmatprep.subr.mxu0 0.0
        %2724 = vmatpush1.msra.mxu0 0.0
        %2725 = vmatprep.subr.mxu0 0.0
        %2726 = vmatpush1.msra.mxu0 0.0
        %2727 = vmatprep.subr.mxu0 0.0
        %2728 = vmatpush1.msra.mxu0 0.0
        %2729 = vmatprep.subr.mxu0 0.0
        %2730 = vmatpush1.msra.mxu0 0.0
        %2731 = vmatprep.subr.mxu0 0.0
        %2732 = vmatpush1.msra.mxu0 0.0
        %2733 = vmatprep.subr.mxu0 0.0
        %2734 = vmatpush1.msra.mxu0 0.0
        %2735 = vmatprep.subr.mxu0 0.0
        %2736 = vmatpush1.msra.mxu0 0.0
        %2737 = vmatprep.subr.mxu0 0.0
        %2738 = vmatpush1.msra.mxu0 0.0
        %2739 = vmatprep.subr.mxu0 0.0
        %2740 = vmatpush1.msra.mxu0 0.0
        %2741 = vmatprep.subr.mxu0 0.0
        %2742 = vmatpush1.msra.mxu0 0.0
        %2743 = vmatprep.mubr.f32.mxu0 0.0
        %2744 = vmatmul.mubr.f32.gmra.mrb[0].mxu0 %v2674
        %v2745 = vpop.f32.mrb[0].mxu0
        %v2746 = vadd.f32 0.0, %v2745
        %v2747 = vpop.f32.mrb[0].mxu0
        %2748 = vmatprep.mubr.f32.mxu0 0.0
        %2749 = vmatmul.mubr.f32.gmra.mrb[0].mxu0 %v2677
        %v2750 = vpop.f32.mrb[0].mxu0
        %v2751 = vadd.f32 0.0, %v2750
        %v2752 = vpop.f32.mrb[0].mxu0
        %2753 = vdwg.mxu0
        %2754 = vrot.lane.b32.xlu0 %v474, 80
        %v2755 = vpop.permute.xlu0 %2754
        %2756 = vrot.lane.b32.xlu0 %v475, 80
        %v2757 = vpop.permute.xlu0 %2756
        %2758 = vrot.lane.b32.xlu0 %v457, 16
        %v2759 = vpop.permute.xlu0 %2758
        %2760 = vrot.lane.b32.xlu0 %v463, 16
        %v2761 = vpop.permute.xlu0 %2760
        %v2762 = vsel %vm482, %v2755, 0
        %v2764 = vsel %vm482, %v2757, 0
        %v2766 = vsel %vm482, %v2759, 0
        %v2768 = vsel %vm482, %v2761, 0
        %2770 = vmatprep.subr.mxu0 0.0
        %2771 = vmatpush1.xpose.msra.mxu0 %v2766
        %2772 = vmatprep.subr.mxu0 0.0
        %2773 = vmatpush1.xpose.msra.mxu0 %v2768
        %2774 = vmatprep.subr.mxu0 0.0
        %2775 = vmatpush1.xpose.msra.mxu0 0.0
        %2776 = vmatprep.subr.mxu0 0.0
        %2777 = vmatpush1.xpose.msra.mxu0 0.0
        %2778 = vmatprep.subr.mxu0 0.0
        %2779 = vmatpush1.xpose.msra.mxu0 0.0
        %2780 = vmatprep.subr.mxu0 0.0
        %2781 = vmatpush1.xpose.msra.mxu0 0.0
        %2782 = vmatprep.subr.mxu0 0.0
        %2783 = vmatpush1.xpose.msra.mxu0 0.0
        %2784 = vmatprep.subr.mxu0 0.0
        %2785 = vmatpush1.xpose.msra.mxu0 0.0
        %2786 = vmatprep.subr.mxu0 0.0
        %2787 = vmatpush1.xpose.msra.mxu0 0.0
        %2788 = vmatprep.subr.mxu0 0.0
        %2789 = vmatpush1.xpose.msra.mxu0 0.0
        %2790 = vmatprep.subr.mxu0 0.0
        %2791 = vmatpush1.xpose.msra.mxu0 0.0
        %2792 = vmatprep.subr.mxu0 0.0
        %2793 = vmatpush1.xpose.msra.mxu0 0.0
        %2794 = vmatprep.subr.mxu0 0.0
        %2795 = vmatpush1.xpose.msra.mxu0 0.0
        %2796 = vmatprep.subr.mxu0 0.0
        %2797 = vmatpush1.xpose.msra.mxu0 0.0
        %2798 = vmatprep.subr.mxu0 0.0
        %2799 = vmatpush1.xpose.msra.mxu0 0.0
        %2800 = vmatprep.subr.mxu0 0.0
        %2801 = vmatpush1.xpose.msra.mxu0 0.0
        %2802 = vmatprep.subr.mxu0 0.0
        %2803 = vmatpush1.xpose.msra.mxu0 0.0
        %2804 = vmatprep.subr.mxu0 0.0
        %2805 = vmatpush1.xpose.msra.mxu0 0.0
        %2806 = vmatprep.subr.mxu0 0.0
        %2807 = vmatpush1.xpose.msra.mxu0 0.0
        %2808 = vmatprep.subr.mxu0 0.0
        %2809 = vmatpush1.xpose.msra.mxu0 0.0
        %2810 = vmatprep.subr.mxu0 0.0
        %2811 = vmatpush1.xpose.msra.mxu0 0.0
        %2812 = vmatprep.subr.mxu0 0.0
        %2813 = vmatpush1.xpose.msra.mxu0 0.0
        %2814 = vmatprep.subr.mxu0 0.0
        %2815 = vmatpush1.xpose.msra.mxu0 0.0
        %2816 = vmatprep.subr.mxu0 0.0
        %2817 = vmatpush1.xpose.msra.mxu0 0.0
        %2818 = vmatprep.subr.mxu0 0.0
        %2819 = vmatpush1.xpose.msra.mxu0 0.0
        %2820 = vmatprep.subr.mxu0 0.0
        %2821 = vmatpush1.xpose.msra.mxu0 0.0
        %2822 = vmatprep.subr.mxu0 0.0
        %2823 = vmatpush1.xpose.msra.mxu0 0.0
        %2824 = vmatprep.subr.mxu0 0.0
        %2825 = vmatpush1.xpose.msra.mxu0 0.0
        %2826 = vmatprep.subr.mxu0 0.0
        %2827 = vmatpush1.xpose.msra.mxu0 0.0
        %2828 = vmatprep.subr.mxu0 0.0
        %2829 = vmatpush1.xpose.msra.mxu0 0.0
        %2830 = vmatprep.subr.mxu0 0.0
        %2831 = vmatpush1.xpose.msra.mxu0 0.0
        %2832 = vmatprep.subr.mxu0 0.0
        %2833 = vmatpush1.xpose.msra.mxu0 0.0
        %2834 = vmatprep.mubr.f32.mxu0 0.0
        %2835 = vmatmul.mubr.f32.gmra.mrb[0].mxu0 %v2762
        %v2836 = vpop.f32.mrb[0].mxu0
        %v2837 = vadd.f32 0.0, %v2836
        %v2838 = vpop.f32.mrb[0].mxu0
        %2839 = vmatprep.mubr.f32.mxu0 0.0
        %2840 = vmatmul.mubr.f32.gmra.mrb[0].mxu0 %v2764
        %v2841 = vpop.f32.mrb[0].mxu0
        %v2842 = vadd.f32 0.0, %v2841
        %v2843 = vpop.f32.mrb[0].mxu0
        %2844 = vdwg.mxu0
        %s2845 = sld [smem:[#allocation8 + $0x300]]
        %v2846 = vstv %s2845
        %v2847 = vsel %vm568, %v2846, 0.0
        %v2848 = vsel %vm569, %v2846, 0.0
        %v2849 = vadd.f32 %v2847, 0.0
        %v2850 = vadd.f32 %v2848, 0.0
        %s2851 = sld [smem:[#allocation8 + $0x301]]
        %v2852 = vstv %s2851
        %v2853 = vsel %vm576, %v2852, 0.0
        %v2854 = vsel %vm577, %v2852, 0.0
        %v2855 = vadd.f32 %v2849, %v2853
        %v2856 = vadd.f32 %v2850, %v2854
        %s2857 = sld [smem:[#allocation8 + $0x302]]
        %v2858 = vstv %s2857
        %v2859 = vsel %vm584, %v2858, 0.0
        %v2860 = vsel %vm585, %v2858, 0.0
        %v2861 = vadd.f32 %v2855, %v2859
        %v2862 = vadd.f32 %v2856, %v2860
        %s2863 = sld [smem:[#allocation8 + $0x303]]
        %v2864 = vstv %s2863
        %v2865 = vsel %vm592, %v2864, 0.0
        %v2866 = vsel %vm593, %v2864, 0.0
        %v2867 = vadd.f32 %v2861, %v2865
        %v2868 = vadd.f32 %v2862, %v2866
        %s2869 = sld [smem:[#allocation8 + $0x304]]
        %v2870 = vstv %s2869
        %v2871 = vsel %vm600, %v2870, 0.0
        %v2872 = vsel %vm601, %v2870, 0.0
        %v2873 = vadd.f32 %v2867, %v2871
        %v2874 = vadd.f32 %v2868, %v2872
        %s2875 = sld [smem:[#allocation8 + $0x305]]
        %v2876 = vstv %s2875
        %v2877 = vsel %vm608, %v2876, 0.0
        %v2878 = vsel %vm609, %v2876, 0.0
        %v2879 = vadd.f32 %v2873, %v2877
        %v2880 = vadd.f32 %v2874, %v2878
        %s2881 = sld [smem:[#allocation8 + $0x306]]
        %v2882 = vstv %s2881
        %v2883 = vsel %vm616, %v2882, 0.0
        %v2884 = vsel %vm617, %v2882, 0.0
        %v2885 = vadd.f32 %v2879, %v2883
        %v2886 = vadd.f32 %v2880, %v2884
        %s2887 = sld [smem:[#allocation8 + $0x307]]
        %v2888 = vstv %s2887
        %v2889 = vsel %vm624, %v2888, 0.0
        %v2890 = vsel %vm625, %v2888, 0.0
        %v2891 = vadd.f32 %v2885, %v2889
        %v2892 = vadd.f32 %v2886, %v2890
        %s2893 = sld [smem:[#allocation8 + $0x308]]
        %v2894 = vstv %s2893
        %v2895 = vsel %vm632, %v2894, 0.0
        %v2896 = vsel %vm633, %v2894, 0.0
        %v2897 = vadd.f32 %v2891, %v2895
        %v2898 = vadd.f32 %v2892, %v2896
        %s2899 = sld [smem:[#allocation8 + $0x309]]
        %v2900 = vstv %s2899
        %v2901 = vsel %vm640, %v2900, 0.0
        %v2902 = vsel %vm641, %v2900, 0.0
        %v2903 = vadd.f32 %v2897, %v2901
        %v2904 = vadd.f32 %v2898, %v2902
        %s2905 = sld [smem:[#allocation8 + $0x30a]]
        %v2906 = vstv %s2905
        %v2907 = vsel %vm648, %v2906, 0.0
        %v2908 = vsel %vm649, %v2906, 0.0
        %v2909 = vadd.f32 %v2903, %v2907
        %v2910 = vadd.f32 %v2904, %v2908
        %s2911 = sld [smem:[#allocation8 + $0x30b]]
        %v2912 = vstv %s2911
        %v2913 = vsel %vm656, %v2912, 0.0
        %v2914 = vsel %vm657, %v2912, 0.0
        %v2915 = vadd.f32 %v2909, %v2913
        %v2916 = vadd.f32 %v2910, %v2914
        %s2917 = sld [smem:[#allocation8 + $0x30c]]
        %v2918 = vstv %s2917
        %v2919 = vsel %vm664, %v2918, 0.0
        %v2920 = vsel %vm665, %v2918, 0.0
        %v2921 = vadd.f32 %v2915, %v2919
        %v2922 = vadd.f32 %v2916, %v2920
        %s2923 = sld [smem:[#allocation8 + $0x30d]]
        %v2924 = vstv %s2923
        %v2925 = vsel %vm672, %v2924, 0.0
        %v2926 = vsel %vm673, %v2924, 0.0
        %v2927 = vadd.f32 %v2921, %v2925
        %v2928 = vadd.f32 %v2922, %v2926
        %s2929 = sld [smem:[#allocation8 + $0x30e]]
        %v2930 = vstv %s2929
        %v2931 = vsel %vm680, %v2930, 0.0
        %v2932 = vsel %vm681, %v2930, 0.0
        %v2933 = vadd.f32 %v2927, %v2931
        %v2934 = vadd.f32 %v2928, %v2932
        %s2935 = sld [smem:[#allocation9 + $0x6]]
        %v2936 = vstv %s2935
        %v2938 = vsel %vm690, %v2933, 0
        %v2941 = vsel %vm690, %v2934, 0
        %2943 = vmatprep.subr.mxu0 0.0
        %2944 = vmatpush1.msra.mxu0 %v2837
        %2945 = vmatprep.subr.mxu0 0.0
        %2946 = vmatpush1.msra.mxu0 %v2842
        %2947 = vmatprep.subr.mxu0 0.0
        %2948 = vmatpush1.msra.mxu0 0.0
        %2949 = vmatprep.subr.mxu0 0.0
        %2950 = vmatpush1.msra.mxu0 0.0
        %2951 = vmatprep.subr.mxu0 0.0
        %2952 = vmatpush1.msra.mxu0 0.0
        %2953 = vmatprep.subr.mxu0 0.0
        %2954 = vmatpush1.msra.mxu0 0.0
        %2955 = vmatprep.subr.mxu0 0.0
        %2956 = vmatpush1.msra.mxu0 0.0
        %2957 = vmatprep.subr.mxu0 0.0
        %2958 = vmatpush1.msra.mxu0 0.0
        %2959 = vmatprep.subr.mxu0 0.0
        %2960 = vmatpush1.msra.mxu0 0.0
        %2961 = vmatprep.subr.mxu0 0.0
        %2962 = vmatpush1.msra.mxu0 0.0
        %2963 = vmatprep.subr.mxu0 0.0
        %2964 = vmatpush1.msra.mxu0 0.0
        %2965 = vmatprep.subr.mxu0 0.0
        %2966 = vmatpush1.msra.mxu0 0.0
        %2967 = vmatprep.subr.mxu0 0.0
        %2968 = vmatpush1.msra.mxu0 0.0
        %2969 = vmatprep.subr.mxu0 0.0
        %2970 = vmatpush1.msra.mxu0 0.0
        %2971 = vmatprep.subr.mxu0 0.0
        %2972 = vmatpush1.msra.mxu0 0.0
        %2973 = vmatprep.subr.mxu0 0.0
        %2974 = vmatpush1.msra.mxu0 0.0
        %2975 = vmatprep.subr.mxu0 0.0
        %2976 = vmatpush1.msra.mxu0 0.0
        %2977 = vmatprep.subr.mxu0 0.0
        %2978 = vmatpush1.msra.mxu0 0.0
        %2979 = vmatprep.subr.mxu0 0.0
        %2980 = vmatpush1.msra.mxu0 0.0
        %2981 = vmatprep.subr.mxu0 0.0
        %2982 = vmatpush1.msra.mxu0 0.0
        %2983 = vmatprep.subr.mxu0 0.0
        %2984 = vmatpush1.msra.mxu0 0.0
        %2985 = vmatprep.subr.mxu0 0.0
        %2986 = vmatpush1.msra.mxu0 0.0
        %2987 = vmatprep.subr.mxu0 0.0
        %2988 = vmatpush1.msra.mxu0 0.0
        %2989 = vmatprep.subr.mxu0 0.0
        %2990 = vmatpush1.msra.mxu0 0.0
        %2991 = vmatprep.subr.mxu0 0.0
        %2992 = vmatpush1.msra.mxu0 0.0
        %2993 = vmatprep.subr.mxu0 0.0
        %2994 = vmatpush1.msra.mxu0 0.0
        %2995 = vmatprep.subr.mxu0 0.0
        %2996 = vmatpush1.msra.mxu0 0.0
        %2997 = vmatprep.subr.mxu0 0.0
        %2998 = vmatpush1.msra.mxu0 0.0
        %2999 = vmatprep.subr.mxu0 0.0
        %3000 = vmatpush1.msra.mxu0 0.0
        %3001 = vmatprep.subr.mxu0 0.0
        %3002 = vmatpush1.msra.mxu0 0.0
        %3003 = vmatprep.subr.mxu0 0.0
        %3004 = vmatpush1.msra.mxu0 0.0
        %3005 = vmatprep.subr.mxu0 0.0
        %3006 = vmatpush1.msra.mxu0 0.0
        %3007 = vmatprep.mubr.f32.mxu0 0.0
        %3008 = vmatmul.mubr.f32.gmra.mrb[0].mxu0 %v2938
        %v3009 = vpop.f32.mrb[0].mxu0
        %v3010 = vadd.f32 %v2936, %v3009
        %v3011 = vpop.f32.mrb[0].mxu0
        %3012 = vmatprep.mubr.f32.mxu0 0.0
        %3013 = vmatmul.mubr.f32.gmra.mrb[0].mxu0 %v2941
        %v3014 = vpop.f32.mrb[0].mxu0
        %v3015 = vadd.f32 %v2936, %v3014
        %v3016 = vpop.f32.mrb[0].mxu0
        %3017 = vdwg.mxu0
        %v3018 = vadd.f32 %v2837, %v3010
        %v3019 = vadd.f32 %v2842, %v3015
        %v3020 = vsel %vm690, %v3018, -inf
        %3021 = vmax.xlane.f32.xlu0 %v3020
        %v3022 = vpop.xlane.xlu0 %3021
        %v3023 = vsel %vm690, %v3019, -inf
        %3024 = vmax.xlane.f32.xlu0 %v3023
        %v3025 = vpop.xlane.xlu0 %3024
        %v3026 = vsub.f32 %v3018, %v3022
        %v3027 = vsub.f32 %v3019, %v3025
        %v3028 = vmul.f32 %v3026, 1.442695
        %v3029 = vpow.pop %v3028
        %v3030 = vmul.f32 %v3027, 1.442695
        %v3031 = vpow.pop %v3030
        %v3032 = vsel %vm690, %v3029, 0.0
        %3033 = vadd.xlane.f32.xlu0 %v3032
        %v3034 = vpop.xlane.xlu0 %3033
        %v3035 = vsel %vm690, %v3031, 0.0
        %3036 = vadd.xlane.f32.xlu0 %v3035
        %v3037 = vpop.xlane.xlu0 %3036
        %v3038 = vrcp.pop %v3034
        %v3039 = vmul.f32 %v3029, %v3038
        %v3040 = vrcp.pop %v3037
        %v3041 = vmul.f32 %v3031, %v3040
        %3042 = vrot.lane.b32.xlu0 %v459, 80
        %v3043 = vpop.permute.xlu0 %3042
        %3044 = vrot.lane.b32.xlu0 %v465, 80
        %v3045 = vpop.permute.xlu0 %3044
        %v3049 = vsel %vm690, %v3039, 0
        %v3052 = vsel %vm690, %v3041, 0
        %3054 = vmatprep.subr.mxu0 0.0
        %3055 = vmatpush1.msra.mxu0 %v3043
        %3056 = vmatprep.subr.mxu0 0.0
        %3057 = vmatpush1.msra.mxu0 %v3045
        %3058 = vmatprep.subr.mxu0 0.0
        %3059 = vmatpush1.msra.mxu0 0.0
        %3060 = vmatprep.subr.mxu0 0.0
        %3061 = vmatpush1.msra.mxu0 0.0
        %3062 = vmatprep.subr.mxu0 0.0
        %3063 = vmatpush1.msra.mxu0 0.0
        %3064 = vmatprep.subr.mxu0 0.0
        %3065 = vmatpush1.msra.mxu0 0.0
        %3066 = vmatprep.subr.mxu0 0.0
        %3067 = vmatpush1.msra.mxu0 0.0
        %3068 = vmatprep.subr.mxu0 0.0
        %3069 = vmatpush1.msra.mxu0 0.0
        %3070 = vmatprep.subr.mxu0 0.0
        %3071 = vmatpush1.msra.mxu0 0.0
        %3072 = vmatprep.subr.mxu0 0.0
        %3073 = vmatpush1.msra.mxu0 0.0
        %3074 = vmatprep.subr.mxu0 0.0
        %3075 = vmatpush1.msra.mxu0 0.0
        %3076 = vmatprep.subr.mxu0 0.0
        %3077 = vmatpush1.msra.mxu0 0.0
        %3078 = vmatprep.subr.mxu0 0.0
        %3079 = vmatpush1.msra.mxu0 0.0
        %3080 = vmatprep.subr.mxu0 0.0
        %3081 = vmatpush1.msra.mxu0 0.0
        %3082 = vmatprep.subr.mxu0 0.0
        %3083 = vmatpush1.msra.mxu0 0.0
        %3084 = vmatprep.subr.mxu0 0.0
        %3085 = vmatpush1.msra.mxu0 0.0
        %3086 = vmatprep.subr.mxu0 0.0
        %3087 = vmatpush1.msra.mxu0 0.0
        %3088 = vmatprep.subr.mxu0 0.0
        %3089 = vmatpush1.msra.mxu0 0.0
        %3090 = vmatprep.subr.mxu0 0.0
        %3091 = vmatpush1.msra.mxu0 0.0
        %3092 = vmatprep.subr.mxu0 0.0
        %3093 = vmatpush1.msra.mxu0 0.0
        %3094 = vmatprep.subr.mxu0 0.0
        %3095 = vmatpush1.msra.mxu0 0.0
        %3096 = vmatprep.subr.mxu0 0.0
        %3097 = vmatpush1.msra.mxu0 0.0
        %3098 = vmatprep.subr.mxu0 0.0
        %3099 = vmatpush1.msra.mxu0 0.0
        %3100 = vmatprep.subr.mxu0 0.0
        %3101 = vmatpush1.msra.mxu0 0.0
        %3102 = vmatprep.subr.mxu0 0.0
        %3103 = vmatpush1.msra.mxu0 0.0
        %3104 = vmatprep.subr.mxu0 0.0
        %3105 = vmatpush1.msra.mxu0 0.0
        %3106 = vmatprep.subr.mxu0 0.0
        %3107 = vmatpush1.msra.mxu0 0.0
        %3108 = vmatprep.subr.mxu0 0.0
        %3109 = vmatpush1.msra.mxu0 0.0
        %3110 = vmatprep.subr.mxu0 0.0
        %3111 = vmatpush1.msra.mxu0 0.0
        %3112 = vmatprep.subr.mxu0 0.0
        %3113 = vmatpush1.msra.mxu0 0.0
        %3114 = vmatprep.subr.mxu0 0.0
        %3115 = vmatpush1.msra.mxu0 0.0
        %3116 = vmatprep.subr.mxu0 0.0
        %3117 = vmatpush1.msra.mxu0 0.0
        %3118 = vmatprep.mubr.f32.mxu0 0.0
        %3119 = vmatmul.mubr.f32.gmra.mrb[0].mxu0 %v3049
        %v3120 = vpop.f32.mrb[0].mxu0
        %v3121 = vadd.f32 0.0, %v3120
        %v3122 = vpop.f32.mrb[0].mxu0
        %3123 = vmatprep.mubr.f32.mxu0 0.0
        %3124 = vmatmul.mubr.f32.gmra.mrb[0].mxu0 %v3052
        %v3125 = vpop.f32.mrb[0].mxu0
        %v3126 = vadd.f32 0.0, %v3125
        %v3127 = vpop.f32.mrb[0].mxu0
        %3128 = vdwg.mxu0
        %3129 = vrot.lane.b32.xlu0 %v474, 72
        %v3130 = vpop.permute.xlu0 %3129
        %3131 = vrot.lane.b32.xlu0 %v475, 72
        %v3132 = vpop.permute.xlu0 %3131
        %3133 = vrot.lane.b32.xlu0 %v457, 8
        %v3134 = vpop.permute.xlu0 %3133
        %3135 = vrot.lane.b32.xlu0 %v463, 8
        %v3136 = vpop.permute.xlu0 %3135
        %v3137 = vsel %vm482, %v3130, 0
        %v3139 = vsel %vm482, %v3132, 0
        %v3141 = vsel %vm482, %v3134, 0
        %v3143 = vsel %vm482, %v3136, 0
        %3145 = vmatprep.subr.mxu0 0.0
        %3146 = vmatpush1.xpose.msra.mxu0 %v3141
        %3147 = vmatprep.subr.mxu0 0.0
        %3148 = vmatpush1.xpose.msra.mxu0 %v3143
        %3149 = vmatprep.subr.mxu0 0.0
        %3150 = vmatpush1.xpose.msra.mxu0 0.0
        %3151 = vmatprep.subr.mxu0 0.0
        %3152 = vmatpush1.xpose.msra.mxu0 0.0
        %3153 = vmatprep.subr.mxu0 0.0
        %3154 = vmatpush1.xpose.msra.mxu0 0.0
        %3155 = vmatprep.subr.mxu0 0.0
        %3156 = vmatpush1.xpose.msra.mxu0 0.0
        %3157 = vmatprep.subr.mxu0 0.0
        %3158 = vmatpush1.xpose.msra.mxu0 0.0
        %3159 = vmatprep.subr.mxu0 0.0
        %3160 = vmatpush1.xpose.msra.mxu0 0.0
        %3161 = vmatprep.subr.mxu0 0.0
        %3162 = vmatpush1.xpose.msra.mxu0 0.0
        %3163 = vmatprep.subr.mxu0 0.0
        %3164 = vmatpush1.xpose.msra.mxu0 0.0
        %3165 = vmatprep.subr.mxu0 0.0
        %3166 = vmatpush1.xpose.msra.mxu0 0.0
        %3167 = vmatprep.subr.mxu0 0.0
        %3168 = vmatpush1.xpose.msra.mxu0 0.0
        %3169 = vmatprep.subr.mxu0 0.0
        %3170 = vmatpush1.xpose.msra.mxu0 0.0
        %3171 = vmatprep.subr.mxu0 0.0
        %3172 = vmatpush1.xpose.msra.mxu0 0.0
        %3173 = vmatprep.subr.mxu0 0.0
        %3174 = vmatpush1.xpose.msra.mxu0 0.0
        %3175 = vmatprep.subr.mxu0 0.0
        %3176 = vmatpush1.xpose.msra.mxu0 0.0
        %3177 = vmatprep.subr.mxu0 0.0
        %3178 = vmatpush1.xpose.msra.mxu0 0.0
        %3179 = vmatprep.subr.mxu0 0.0
        %3180 = vmatpush1.xpose.msra.mxu0 0.0
        %3181 = vmatprep.subr.mxu0 0.0
        %3182 = vmatpush1.xpose.msra.mxu0 0.0
        %3183 = vmatprep.subr.mxu0 0.0
        %3184 = vmatpush1.xpose.msra.mxu0 0.0
        %3185 = vmatprep.subr.mxu0 0.0
        %3186 = vmatpush1.xpose.msra.mxu0 0.0
        %3187 = vmatprep.subr.mxu0 0.0
        %3188 = vmatpush1.xpose.msra.mxu0 0.0
        %3189 = vmatprep.subr.mxu0 0.0
        %3190 = vmatpush1.xpose.msra.mxu0 0.0
        %3191 = vmatprep.subr.mxu0 0.0
        %3192 = vmatpush1.xpose.msra.mxu0 0.0
        %3193 = vmatprep.subr.mxu0 0.0
        %3194 = vmatpush1.xpose.msra.mxu0 0.0
        %3195 = vmatprep.subr.mxu0 0.0
        %3196 = vmatpush1.xpose.msra.mxu0 0.0
        %3197 = vmatprep.subr.mxu0 0.0
        %3198 = vmatpush1.xpose.msra.mxu0 0.0
        %3199 = vmatprep.subr.mxu0 0.0
        %3200 = vmatpush1.xpose.msra.mxu0 0.0
        %3201 = vmatprep.subr.mxu0 0.0
        %3202 = vmatpush1.xpose.msra.mxu0 0.0
        %3203 = vmatprep.subr.mxu0 0.0
        %3204 = vmatpush1.xpose.msra.mxu0 0.0
        %3205 = vmatprep.subr.mxu0 0.0
        %3206 = vmatpush1.xpose.msra.mxu0 0.0
        %3207 = vmatprep.subr.mxu0 0.0
        %3208 = vmatpush1.xpose.msra.mxu0 0.0
        %3209 = vmatprep.mubr.f32.mxu0 0.0
        %3210 = vmatmul.mubr.f32.gmra.mrb[0].mxu0 %v3137
        %v3211 = vpop.f32.mrb[0].mxu0
        %v3212 = vadd.f32 0.0, %v3211
        %v3213 = vpop.f32.mrb[0].mxu0
        %3214 = vmatprep.mubr.f32.mxu0 0.0
        %3215 = vmatmul.mubr.f32.gmra.mrb[0].mxu0 %v3139
        %v3216 = vpop.f32.mrb[0].mxu0
        %v3217 = vadd.f32 0.0, %v3216
        %v3218 = vpop.f32.mrb[0].mxu0
        %3219 = vdwg.mxu0
        %s3220 = sld [smem:[#allocation8 + $0x380]]
        %v3221 = vstv %s3220
        %v3222 = vsel %vm568, %v3221, 0.0
        %v3223 = vsel %vm569, %v3221, 0.0
        %v3224 = vadd.f32 %v3222, 0.0
        %v3225 = vadd.f32 %v3223, 0.0
        %s3226 = sld [smem:[#allocation8 + $0x381]]
        %v3227 = vstv %s3226
        %v3228 = vsel %vm576, %v3227, 0.0
        %v3229 = vsel %vm577, %v3227, 0.0
        %v3230 = vadd.f32 %v3224, %v3228
        %v3231 = vadd.f32 %v3225, %v3229
        %s3232 = sld [smem:[#allocation8 + $0x382]]
        %v3233 = vstv %s3232
        %v3234 = vsel %vm584, %v3233, 0.0
        %v3235 = vsel %vm585, %v3233, 0.0
        %v3236 = vadd.f32 %v3230, %v3234
        %v3237 = vadd.f32 %v3231, %v3235
        %s3238 = sld [smem:[#allocation8 + $0x383]]
        %v3239 = vstv %s3238
        %v3240 = vsel %vm592, %v3239, 0.0
        %v3241 = vsel %vm593, %v3239, 0.0
        %v3242 = vadd.f32 %v3236, %v3240
        %v3243 = vadd.f32 %v3237, %v3241
        %s3244 = sld [smem:[#allocation8 + $0x384]]
        %v3245 = vstv %s3244
        %v3246 = vsel %vm600, %v3245, 0.0
        %v3247 = vsel %vm601, %v3245, 0.0
        %v3248 = vadd.f32 %v3242, %v3246
        %v3249 = vadd.f32 %v3243, %v3247
        %s3250 = sld [smem:[#allocation8 + $0x385]]
        %v3251 = vstv %s3250
        %v3252 = vsel %vm608, %v3251, 0.0
        %v3253 = vsel %vm609, %v3251, 0.0
        %v3254 = vadd.f32 %v3248, %v3252
        %v3255 = vadd.f32 %v3249, %v3253
        %s3256 = sld [smem:[#allocation8 + $0x386]]
        %v3257 = vstv %s3256
        %v3258 = vsel %vm616, %v3257, 0.0
        %v3259 = vsel %vm617, %v3257, 0.0
        %v3260 = vadd.f32 %v3254, %v3258
        %v3261 = vadd.f32 %v3255, %v3259
        %s3262 = sld [smem:[#allocation8 + $0x387]]
        %v3263 = vstv %s3262
        %v3264 = vsel %vm624, %v3263, 0.0
        %v3265 = vsel %vm625, %v3263, 0.0
        %v3266 = vadd.f32 %v3260, %v3264
        %v3267 = vadd.f32 %v3261, %v3265
        %s3268 = sld [smem:[#allocation8 + $0x388]]
        %v3269 = vstv %s3268
        %v3270 = vsel %vm632, %v3269, 0.0
        %v3271 = vsel %vm633, %v3269, 0.0
        %v3272 = vadd.f32 %v3266, %v3270
        %v3273 = vadd.f32 %v3267, %v3271
        %s3274 = sld [smem:[#allocation8 + $0x389]]
        %v3275 = vstv %s3274
        %v3276 = vsel %vm640, %v3275, 0.0
        %v3277 = vsel %vm641, %v3275, 0.0
        %v3278 = vadd.f32 %v3272, %v3276
        %v3279 = vadd.f32 %v3273, %v3277
        %s3280 = sld [smem:[#allocation8 + $0x38a]]
        %v3281 = vstv %s3280
        %v3282 = vsel %vm648, %v3281, 0.0
        %v3283 = vsel %vm649, %v3281, 0.0
        %v3284 = vadd.f32 %v3278, %v3282
        %v3285 = vadd.f32 %v3279, %v3283
        %s3286 = sld [smem:[#allocation8 + $0x38b]]
        %v3287 = vstv %s3286
        %v3288 = vsel %vm656, %v3287, 0.0
        %v3289 = vsel %vm657, %v3287, 0.0
        %v3290 = vadd.f32 %v3284, %v3288
        %v3291 = vadd.f32 %v3285, %v3289
        %s3292 = sld [smem:[#allocation8 + $0x38c]]
        %v3293 = vstv %s3292
        %v3294 = vsel %vm664, %v3293, 0.0
        %v3295 = vsel %vm665, %v3293, 0.0
        %v3296 = vadd.f32 %v3290, %v3294
        %v3297 = vadd.f32 %v3291, %v3295
        %s3298 = sld [smem:[#allocation8 + $0x38d]]
        %v3299 = vstv %s3298
        %v3300 = vsel %vm672, %v3299, 0.0
        %v3301 = vsel %vm673, %v3299, 0.0
        %v3302 = vadd.f32 %v3296, %v3300
        %v3303 = vadd.f32 %v3297, %v3301
        %s3304 = sld [smem:[#allocation8 + $0x38e]]
        %v3305 = vstv %s3304
        %v3306 = vsel %vm680, %v3305, 0.0
        %v3307 = vsel %vm681, %v3305, 0.0
        %v3308 = vadd.f32 %v3302, %v3306
        %v3309 = vadd.f32 %v3303, %v3307
        %s3310 = sld [smem:[#allocation9 + $0x7]]
        %v3311 = vstv %s3310
        %v3313 = vsel %vm690, %v3308, 0
        %v3316 = vsel %vm690, %v3309, 0
        %3318 = vmatprep.subr.mxu0 0.0
        %3319 = vmatpush1.msra.mxu0 %v3212
        %3320 = vmatprep.subr.mxu0 0.0
        %3321 = vmatpush1.msra.mxu0 %v3217
        %3322 = vmatprep.subr.mxu0 0.0
        %3323 = vmatpush1.msra.mxu0 0.0
        %3324 = vmatprep.subr.mxu0 0.0
        %3325 = vmatpush1.msra.mxu0 0.0
        %3326 = vmatprep.subr.mxu0 0.0
        %3327 = vmatpush1.msra.mxu0 0.0
        %3328 = vmatprep.subr.mxu0 0.0
        %3329 = vmatpush1.msra.mxu0 0.0
        %3330 = vmatprep.subr.mxu0 0.0
        %3331 = vmatpush1.msra.mxu0 0.0
        %3332 = vmatprep.subr.mxu0 0.0
        %3333 = vmatpush1.msra.mxu0 0.0
        %3334 = vmatprep.subr.mxu0 0.0
        %3335 = vmatpush1.msra.mxu0 0.0
        %3336 = vmatprep.subr.mxu0 0.0
        %3337 = vmatpush1.msra.mxu0 0.0
        %3338 = vmatprep.subr.mxu0 0.0
        %3339 = vmatpush1.msra.mxu0 0.0
        %3340 = vmatprep.subr.mxu0 0.0
        %3341 = vmatpush1.msra.mxu0 0.0
        %3342 = vmatprep.subr.mxu0 0.0
        %3343 = vmatpush1.msra.mxu0 0.0
        %3344 = vmatprep.subr.mxu0 0.0
        %3345 = vmatpush1.msra.mxu0 0.0
        %3346 = vmatprep.subr.mxu0 0.0
        %3347 = vmatpush1.msra.mxu0 0.0
        %3348 = vmatprep.subr.mxu0 0.0
        %3349 = vmatpush1.msra.mxu0 0.0
        %3350 = vmatprep.subr.mxu0 0.0
        %3351 = vmatpush1.msra.mxu0 0.0
        %3352 = vmatprep.subr.mxu0 0.0
        %3353 = vmatpush1.msra.mxu0 0.0
        %3354 = vmatprep.subr.mxu0 0.0
        %3355 = vmatpush1.msra.mxu0 0.0
        %3356 = vmatprep.subr.mxu0 0.0
        %3357 = vmatpush1.msra.mxu0 0.0
        %3358 = vmatprep.subr.mxu0 0.0
        %3359 = vmatpush1.msra.mxu0 0.0
        %3360 = vmatprep.subr.mxu0 0.0
        %3361 = vmatpush1.msra.mxu0 0.0
        %3362 = vmatprep.subr.mxu0 0.0
        %3363 = vmatpush1.msra.mxu0 0.0
        %3364 = vmatprep.subr.mxu0 0.0
        %3365 = vmatpush1.msra.mxu0 0.0
        %3366 = vmatprep.subr.mxu0 0.0
        %3367 = vmatpush1.msra.mxu0 0.0
        %3368 = vmatprep.subr.mxu0 0.0
        %3369 = vmatpush1.msra.mxu0 0.0
        %3370 = vmatprep.subr.mxu0 0.0
        %3371 = vmatpush1.msra.mxu0 0.0
        %3372 = vmatprep.subr.mxu0 0.0
        %3373 = vmatpush1.msra.mxu0 0.0
        %3374 = vmatprep.subr.mxu0 0.0
        %3375 = vmatpush1.msra.mxu0 0.0
        %3376 = vmatprep.subr.mxu0 0.0
        %3377 = vmatpush1.msra.mxu0 0.0
        %3378 = vmatprep.subr.mxu0 0.0
        %3379 = vmatpush1.msra.mxu0 0.0
        %3380 = vmatprep.subr.mxu0 0.0
        %3381 = vmatpush1.msra.mxu0 0.0
        %3382 = vmatprep.mubr.f32.mxu0 0.0
        %3383 = vmatmul.mubr.f32.gmra.mrb[0].mxu0 %v3313
        %v3384 = vpop.f32.mrb[0].mxu0
        %v3385 = vadd.f32 %v3311, %v3384
        %v3386 = vpop.f32.mrb[0].mxu0
        %3387 = vmatprep.mubr.f32.mxu0 0.0
        %3388 = vmatmul.mubr.f32.gmra.mrb[0].mxu0 %v3316
        %v3389 = vpop.f32.mrb[0].mxu0
        %v3390 = vadd.f32 %v3311, %v3389
        %v3391 = vpop.f32.mrb[0].mxu0
        %3392 = vdwg.mxu0
        %v3393 = vadd.f32 %v3212, %v3385
        %v3394 = vadd.f32 %v3217, %v3390
        %v3395 = vsel %vm690, %v3393, -inf
        %3396 = vmax.xlane.f32.xlu0 %v3395
        %v3397 = vpop.xlane.xlu0 %3396
        %v3398 = vsel %vm690, %v3394, -inf
        %3399 = vmax.xlane.f32.xlu0 %v3398
        %v3400 = vpop.xlane.xlu0 %3399
        %v3401 = vsub.f32 %v3393, %v3397
        %v3402 = vsub.f32 %v3394, %v3400
        %v3403 = vmul.f32 %v3401, 1.442695
        %v3404 = vpow.pop %v3403
        %v3405 = vmul.f32 %v3402, 1.442695
        %v3406 = vpow.pop %v3405
        %v3407 = vsel %vm690, %v3404, 0.0
        %3408 = vadd.xlane.f32.xlu0 %v3407
        %v3409 = vpop.xlane.xlu0 %3408
        %v3410 = vsel %vm690, %v3406, 0.0
        %3411 = vadd.xlane.f32.xlu0 %v3410
        %v3412 = vpop.xlane.xlu0 %3411
        %v3413 = vrcp.pop %v3409
        %v3414 = vmul.f32 %v3404, %v3413
        %v3415 = vrcp.pop %v3412
        %v3416 = vmul.f32 %v3406, %v3415
        %3417 = vrot.lane.b32.xlu0 %v459, 72
        %v3418 = vpop.permute.xlu0 %3417
        %3419 = vrot.lane.b32.xlu0 %v465, 72
        %v3420 = vpop.permute.xlu0 %3419
        %v3424 = vsel %vm690, %v3414, 0
        %v3427 = vsel %vm690, %v3416, 0
        %3429 = vmatprep.subr.mxu0 0.0
        %3430 = vmatpush1.msra.mxu0 %v3418
        %3431 = vmatprep.subr.mxu0 0.0
        %3432 = vmatpush1.msra.mxu0 %v3420
        %3433 = vmatprep.subr.mxu0 0.0
        %3434 = vmatpush1.msra.mxu0 0.0
        %3435 = vmatprep.subr.mxu0 0.0
        %3436 = vmatpush1.msra.mxu0 0.0
        %3437 = vmatprep.subr.mxu0 0.0
        %3438 = vmatpush1.msra.mxu0 0.0
        %3439 = vmatprep.subr.mxu0 0.0
        %3440 = vmatpush1.msra.mxu0 0.0
        %3441 = vmatprep.subr.mxu0 0.0
        %3442 = vmatpush1.msra.mxu0 0.0
        %3443 = vmatprep.subr.mxu0 0.0
        %3444 = vmatpush1.msra.mxu0 0.0
        %3445 = vmatprep.subr.mxu0 0.0
        %3446 = vmatpush1.msra.mxu0 0.0
        %3447 = vmatprep.subr.mxu0 0.0
        %3448 = vmatpush1.msra.mxu0 0.0
        %3449 = vmatprep.subr.mxu0 0.0
        %3450 = vmatpush1.msra.mxu0 0.0
        %3451 = vmatprep.subr.mxu0 0.0
        %3452 = vmatpush1.msra.mxu0 0.0
        %3453 = vmatprep.subr.mxu0 0.0
        %3454 = vmatpush1.msra.mxu0 0.0
        %3455 = vmatprep.subr.mxu0 0.0
        %3456 = vmatpush1.msra.mxu0 0.0
        %3457 = vmatprep.subr.mxu0 0.0
        %3458 = vmatpush1.msra.mxu0 0.0
        %3459 = vmatprep.subr.mxu0 0.0
        %3460 = vmatpush1.msra.mxu0 0.0
        %3461 = vmatprep.subr.mxu0 0.0
        %3462 = vmatpush1.msra.mxu0 0.0
        %3463 = vmatprep.subr.mxu0 0.0
        %3464 = vmatpush1.msra.mxu0 0.0
        %3465 = vmatprep.subr.mxu0 0.0
        %3466 = vmatpush1.msra.mxu0 0.0
        %3467 = vmatprep.subr.mxu0 0.0
        %3468 = vmatpush1.msra.mxu0 0.0
        %3469 = vmatprep.subr.mxu0 0.0
        %3470 = vmatpush1.msra.mxu0 0.0
        %3471 = vmatprep.subr.mxu0 0.0
        %3472 = vmatpush1.msra.mxu0 0.0
        %3473 = vmatprep.subr.mxu0 0.0
        %3474 = vmatpush1.msra.mxu0 0.0
        %3475 = vmatprep.subr.mxu0 0.0
        %3476 = vmatpush1.msra.mxu0 0.0
        %3477 = vmatprep.subr.mxu0 0.0
        %3478 = vmatpush1.msra.mxu0 0.0
        %3479 = vmatprep.subr.mxu0 0.0
        %3480 = vmatpush1.msra.mxu0 0.0
        %3481 = vmatprep.subr.mxu0 0.0
        %3482 = vmatpush1.msra.mxu0 0.0
        %3483 = vmatprep.subr.mxu0 0.0
        %3484 = vmatpush1.msra.mxu0 0.0
        %3485 = vmatprep.subr.mxu0 0.0
        %3486 = vmatpush1.msra.mxu0 0.0
        %3487 = vmatprep.subr.mxu0 0.0
        %3488 = vmatpush1.msra.mxu0 0.0
        %3489 = vmatprep.subr.mxu0 0.0
        %3490 = vmatpush1.msra.mxu0 0.0
        %3491 = vmatprep.subr.mxu0 0.0
        %3492 = vmatpush1.msra.mxu0 0.0
        %3493 = vmatprep.mubr.f32.mxu0 0.0
        %3494 = vmatmul.mubr.f32.gmra.mrb[0].mxu0 %v3424
        %v3495 = vpop.f32.mrb[0].mxu0
        %v3496 = vadd.f32 0.0, %v3495
        %v3497 = vpop.f32.mrb[0].mxu0
        %3498 = vmatprep.mubr.f32.mxu0 0.0
        %3499 = vmatmul.mubr.f32.gmra.mrb[0].mxu0 %v3427
        %v3500 = vpop.f32.mrb[0].mxu0
        %v3501 = vadd.f32 0.0, %v3500
        %v3502 = vpop.f32.mrb[0].mxu0
        %3503 = vdwg.mxu0
        %3506 = vrot.lane.b32.xlu0 %v1246, 8
        %v3507 = vpop.permute.xlu0 %3506
        %3508 = vrot.lane.b32.xlu0 %v1251, 8
        %v3509 = vpop.permute.xlu0 %3508
        %3514 = vrot.lane.b32.xlu0 %v1621, 16
        %v3515 = vpop.permute.xlu0 %3514
        %3516 = vrot.lane.b32.xlu0 %v1626, 16
        %v3517 = vpop.permute.xlu0 %3516
        %3522 = vrot.lane.b32.xlu0 %v1996, 24
        %v3523 = vpop.permute.xlu0 %3522
        %3524 = vrot.lane.b32.xlu0 %v2001, 24
        %v3525 = vpop.permute.xlu0 %3524
        %3530 = vrot.lane.b32.xlu0 %v2371, 32
        %v3531 = vpop.permute.xlu0 %3530
        %3532 = vrot.lane.b32.xlu0 %v2376, 32
        %v3533 = vpop.permute.xlu0 %3532
        %3538 = vrot.lane.b32.xlu0 %v2746, 40
        %v3539 = vpop.permute.xlu0 %3538
        %3540 = vrot.lane.b32.xlu0 %v2751, 40
        %v3541 = vpop.permute.xlu0 %3540
        %3546 = vrot.lane.b32.xlu0 %v3121, 48
        %v3547 = vpop.permute.xlu0 %3546
        %3548 = vrot.lane.b32.xlu0 %v3126, 48
        %v3549 = vpop.permute.xlu0 %3548
        %3554 = vrot.lane.b32.xlu0 %v3496, 56
        %v3555 = vpop.permute.xlu0 %3554
        %3556 = vrot.lane.b32.xlu0 %v3501, 56
        %v3557 = vpop.permute.xlu0 %3556
        %v3560 = vsel %vm482, %v869, %v3507
        %v3561 = vsel %vm482, %v874, %v3509
        %v3562 = vsel %vm690, %v3560, %v3515
        %v3563 = vsel %vm690, %v3561, %v3517
        %vm3564 = vcmask 195584
        %v3565 = vsel %vm3564, %v3562, %v3523
        %v3566 = vsel %vm3564, %v3563, %v3525
        %vm3567 = vcmask 261120
        %v3568 = vsel %vm3567, %v3565, %v3531
        %v3569 = vsel %vm3567, %v3566, %v3533
        %vm3570 = vcmask 326656
        %v3571 = vsel %vm3570, %v3568, %v3539
        %v3572 = vsel %vm3570, %v3569, %v3541
        %vm3573 = vcmask 392192
        %v3574 = vsel %vm3573, %v3571, %v3547
        %v3575 = vsel %vm3573, %v3572, %v3549
        %vm3576 = vcmask 457728
        %v3577 = vsel %vm3576, %v3574, %v3555
        %v3578 = vsel %vm3576, %v3575, %v3557
        %v3579 = vld [vmem:[#allocation11] sm:$0xff]
        %v3580 = vld [vmem:[#allocation11 + $0x8] sm:$0xff]
        %v3581 = vld [vmem:[#allocation11 + $0x10] sm:$0xff]
        %v3582 = vld [vmem:[#allocation11 + $0x18] sm:$0xff]
        %v3583 = vld [vmem:[#allocation11 + $0x20] sm:$0xff]
        %v3584 = vld [vmem:[#allocation11 + $0x28] sm:$0xff]
        %v3585 = vld [vmem:[#allocation11 + $0x30] sm:$0xff]
        %v3586 = vld [vmem:[#allocation11 + $0x38] sm:$0xff]
        %v3587 = vld [vmem:[%s6] sm:$0x1]
        %v3589 = vlaneseq
        %v3590 = vshrl.u32 %v3589, 7
        %v3591 = vsub.s32 0, %v3590
        %v3592 = vrot.slane %v3587, %v3591
        %v3595 = vsel %vm383, %v3577, 0
        %v3598 = vsel %vm383, %v3578, 0
        %3600 = vmatprep.subr.mxu0 0.0
        %3601 = vmatpush1.msra.mxu0 %v3579
        %3602 = vmatprep.subr.mxu0 0.0
        %3603 = vmatpush1.msra.mxu0 %v3580
        %3604 = vmatprep.subr.mxu0 0.0
        %3605 = vmatpush1.msra.mxu0 %v3581
        %3606 = vmatprep.subr.mxu0 0.0
        %3607 = vmatpush1.msra.mxu0 %v3582
        %3608 = vmatprep.subr.mxu0 0.0
        %3609 = vmatpush1.msra.mxu0 %v3583
        %3610 = vmatprep.subr.mxu0 0.0
        %3611 = vmatpush1.msra.mxu0 %v3584
        %3612 = vmatprep.subr.mxu0 0.0
        %3613 = vmatpush1.msra.mxu0 %v3585
        %3614 = vmatprep.subr.mxu0 0.0
        %3615 = vmatpush1.msra.mxu0 %v3586
        %3616 = vmatprep.subr.mxu0 0.0
        %3617 = vmatpush1.msra.mxu0 0.0
        %3618 = vmatprep.subr.mxu0 0.0
        %3619 = vmatpush1.msra.mxu0 0.0
        %3620 = vmatprep.subr.mxu0 0.0
        %3621 = vmatpush1.msra.mxu0 0.0
        %3622 = vmatprep.subr.mxu0 0.0
        %3623 = vmatpush1.msra.mxu0 0.0
        %3624 = vmatprep.subr.mxu0 0.0
        %3625 = vmatpush1.msra.mxu0 0.0
        %3626 = vmatprep.subr.mxu0 0.0
        %3627 = vmatpush1.msra.mxu0 0.0
        %3628 = vmatprep.subr.mxu0 0.0
        %3629 = vmatpush1.msra.mxu0 0.0
        %3630 = vmatprep.subr.mxu0 0.0
        %3631 = vmatpush1.msra.mxu0 0.0
        %3632 = vmatprep.subr.mxu0 0.0
        %3633 = vmatpush1.msra.mxu0 0.0
        %3634 = vmatprep.subr.mxu0 0.0
        %3635 = vmatpush1.msra.mxu0 0.0
        %3636 = vmatprep.subr.mxu0 0.0
        %3637 = vmatpush1.msra.mxu0 0.0
        %3638 = vmatprep.subr.mxu0 0.0
        %3639 = vmatpush1.msra.mxu0 0.0
        %3640 = vmatprep.subr.mxu0 0.0
        %3641 = vmatpush1.msra.mxu0 0.0
        %3642 = vmatprep.subr.mxu0 0.0
        %3643 = vmatpush1.msra.mxu0 0.0
        %3644 = vmatprep.subr.mxu0 0.0
        %3645 = vmatpush1.msra.mxu0 0.0
        %3646 = vmatprep.subr.mxu0 0.0
        %3647 = vmatpush1.msra.mxu0 0.0
        %3648 = vmatprep.subr.mxu0 0.0
        %3649 = vmatpush1.msra.mxu0 0.0
        %3650 = vmatprep.subr.mxu0 0.0
        %3651 = vmatpush1.msra.mxu0 0.0
        %3652 = vmatprep.subr.mxu0 0.0
        %3653 = vmatpush1.msra.mxu0 0.0
        %3654 = vmatprep.subr.mxu0 0.0
        %3655 = vmatpush1.msra.mxu0 0.0
        %3656 = vmatprep.subr.mxu0 0.0
        %3657 = vmatpush1.msra.mxu0 0.0
        %3658 = vmatprep.subr.mxu0 0.0
        %3659 = vmatpush1.msra.mxu0 0.0
        %3660 = vmatprep.subr.mxu0 0.0
        %3661 = vmatpush1.msra.mxu0 0.0
        %3662 = vmatprep.subr.mxu0 0.0
        %3663 = vmatpush1.msra.mxu0 0.0
        %3664 = vmatprep.mubr.f32.mxu0 0.0
        %3665 = vmatmul.mubr.f32.gmra.mrb[0].mxu0 %v3595
        %v3666 = vpop.f32.mrb[0].mxu0
        %v3667 = vadd.f32 %v3592, %v3666
        %v3668 = vpop.f32.mrb[0].mxu0
        %3669 = vmatprep.mubr.f32.mxu0 0.0
        %3670 = vmatmul.mubr.f32.gmra.mrb[0].mxu0 %v3598
        %v3671 = vpop.f32.mrb[0].mxu0
        %v3672 = vadd.f32 %v3592, %v3671
        %v3673 = vpop.f32.mrb[0].mxu0
        %3674 = vdwg.mxu0
        %3675 = vst.msk [vmem:[%s352] sm:$0xff] %vm383, %v3667
        %3676 = vst.msk [vmem:[%s352 + $0x8] sm:$0xff] %vm383, %v3672
        %s3677 = sand.u32 %s187, 1
        %s3678 = scalar_lea.sflag [#allocation4], %s3677
        %s3679 = sand.u32 %s187, 1
        %s3680 = smul.addr %s3679, 16
        %s3681 = scalar_lea.vmem [#allocation12], %s3680
        // Predicated region
        $region69: #{inner_attention_pallas.1} parent=47 // pred_check
          %p3682 = pneg %p197
        $region70: #{inner_attention_pallas.1} parent=47 // pred_check_branch
          %3684 = sbr.rel (%p3682) target = $region72
        $region71: #{inner_attention_pallas.1} parent=47 // pred_region
          %s3686 = ssub.s32 256, 256
          %3687 = vsyncadd %s3678, %s3686
          %s3688 = smul.addr %s27, 2
          %s3689 = smul.addr %s3688, 128
          %s3690 = scalar_lea.hbm %s7, %s3689
          %s3691 = sshll.u32 %s3681, 4
          %s3692 = int_to_ptr.vmem [resolvable:$true] %s3691
          %3697 = dma.vmem_to_hbm [thread:$0]  %s3692, 256, %s3690, %s3678, 128, 128, 8
        $region72: #{inner_attention_pallas.1} parent=47 // pred_fallthru
          _
      $region48: #{inner_attention_pallas.1} parent=5 // pred_fallthru
        _
      %p3698 = scmp.le.s32.totalorder 2, %s22
      // Predicated region
      $region73: #{inner_attention_pallas.1} parent=5 // pred_check
        %p3699 = pneg %p3698
      $region74: #{inner_attention_pallas.1} parent=5 // pred_check_branch
        %3701 = sbr.rel (%p3699) target = $region76
      $region75: #{inner_attention_pallas.1} parent=5 // pred_region
        %s3702 = ssub.s32 %s22, 2
        // Predicated region
        $region77: #{inner_attention_pallas.1} parent=75 // pred_check
          %p3703 = pneg %p203
        $region78: #{inner_attention_pallas.1} parent=75 // pred_check_branch
          %3705 = sbr.rel (%p3703) target = $region80
        $region79: #{inner_attention_pallas.1} parent=75 // pred_region
          %s3706 = sand.u32 %s188, 1
          %s3707 = scalar_lea.sflag [#allocation4], %s3706
          %s3708 = sand.u32 %s188, 1
          %s3709 = smul.addr %s3708, 16
          %s3710 = scalar_lea.vmem [#allocation12], %s3709
          %3711 = dma.done %s3707, 256
        $region80: #{inner_attention_pallas.1} parent=75 // pred_fallthru
          _
      $region76: #{inner_attention_pallas.1} parent=5 // pred_fallthru
        _
    $region6: #{inner_attention_pallas.1} parent=1 // loop_footer
      %s26 = sadd.s32 1, %s22
    $region7: #{inner_attention_pallas.1} parent=1 // loop_footer_branch
      %21 = sbr.rel target = $region3
    $region8: #{inner_attention_pallas.1} parent=1 // loop_exit
      _
    %3712 = vsyncpa [#allocation3], 1
    %s3713 = scalar_lea.sflag [#allocation3], 1
    %3714 = vsyncpa %s3713, 1
    %3715 = vsyncpa [#allocation7], 1
    %3716 = vsyncpa [#allocation4], 1
    %s3717 = scalar_lea.sflag [#allocation4], 1
    %3718 = vsyncpa %s3717, 1
    %3719 = vsyncpa [#allocation5], 1
    %s3720 = scalar_lea.sflag [#allocation5], 1
    %3721 = vsyncpa %s3720, 1
    %3722 = vsyncpa [#allocation10], 1

</llo_original>
